<compile_context>
chip_gen: v6e
topology: v6e:2x2x1
jax: 0.10.0
libtpu: 0.0.40
codegen_flags: <defaults>
</compile_context>

<pallas_src>
import math
import functools

import jax
import jax.numpy as jnp
from jax.experimental import pallas as pl
from jax.experimental.pallas import tpu as pltpu


def _attn_kernel(x_ref, bias_ref, wqkv_ref, bqkv_ref, wp_ref, bp_ref, o_ref,
                 *, n_head, block_b, seq_len):
    """One grid step == `block_b` batch elements; all tensors fit in VMEM."""
    C = x_ref.shape[-1]
    D = C // n_head
    scale = 1.0 / math.sqrt(D)
    cdt = x_ref.dtype                       # compute dtype (f32 or bf16)

    # Fused QKV projection: (block_b*T, C) @ (C, 3C) -> (block_b*T, 3C)
    x = x_ref[...]
    qkv = (jnp.dot(x, wqkv_ref[...], preferred_element_type=jnp.float32)
           + bqkv_ref[0]).astype(cdt)

    bias = bias_ref[...]                    # (block_b, T, T) additive mask bias

    head_outs = []
    for h in range(n_head):                 # static unroll over heads
        qh = qkv[:, h * D:(h + 1) * D].reshape(block_b, seq_len, D)
        kh = qkv[:, C + h * D:C + (h + 1) * D].reshape(block_b, seq_len, D)
        vh = qkv[:, 2 * C + h * D:2 * C + (h + 1) * D].reshape(block_b, seq_len, D)

        # batched scores; contraction on trailing dims -> no explicit kh.T
        s = jnp.einsum('bqd,bkd->bqk', qh, kh,
                       preferred_element_type=jnp.float32)
        s = s * scale + bias

        # numerically-stable softmax over keys (f32)
        s = s - jnp.max(s, axis=-1, keepdims=True)
        p = jnp.exp(s)
        inv = pl.reciprocal(jnp.sum(p, axis=-1, keepdims=True), approx=True)
        p = (p * inv).astype(cdt)

        yh = jnp.einsum('bqk,bkd->bqd', p, vh,
                        preferred_element_type=jnp.float32)
        head_outs.append(yh.reshape(block_b * seq_len, D))

    y = jnp.concatenate(head_outs, axis=-1).astype(cdt)   # (block_b*T, C)

    # output projection
    o_ref[...] = (jnp.dot(y, wp_ref[...], preferred_element_type=jnp.float32)
                  + bp_ref[0]).astype(o_ref.dtype)


def causal_self_attention(x, pad_mask, cmask, params, n_head, *,
                          block_b=8, compute_dtype=None):
    """x: (B,T,C) f32, pad_mask: (B,T) f32, cmask: (T,T) f32."""
    B, T, C = x.shape
    wq, bq, wk, bk, wv, bv, wp, bp = params

    # Host-side fusion of the three projections into one matmul.
    wqkv = jnp.concatenate([wq, wk, wv], axis=1)    # (C, 3C)
    bqkv = jnp.concatenate([bq, bk, bv], axis=1)    # (1, 3C)

    if compute_dtype is not None:                   # e.g. bf16 on v6e / v7x
        x = x.astype(compute_dtype)
        wqkv, bqkv = wqkv.astype(compute_dtype), bqkv.astype(compute_dtype)
        wp, bp = wp.astype(compute_dtype), bp.astype(compute_dtype)

    if B % block_b != 0:
        block_b = math.gcd(B, block_b)
    grid = (B // block_b,)

    # Single additive mask bias (causal-over-frames x padding), built once.
    combined = cmask[None, :, :] * pad_mask[:, None, :]          # (B, T, T)
    bias = jnp.where(combined == 0.0, jnp.float32(-1e30), jnp.float32(0.0))

    # Flatten (B, T) so each grid step reads/writes one (block_b*T, C) slab.
    x2 = x.reshape(B * T, C)

    kern = functools.partial(_attn_kernel, n_head=n_head,
                             block_b=block_b, seq_len=T)

    def full2d(shape):
        return pl.BlockSpec(shape, lambda b: (0, 0))

    flops = int(2 * B * T * C * 3 * C          # fused QKV
                + 4 * B * T * T * C            # scores + PV
                + 2 * B * T * C * C)           # output projection
    transcendentals = int(B * n_head * T * (T + 1))      # exp + reciprocal
    itemsize = jnp.dtype(x.dtype).itemsize
    bytes_accessed = int(itemsize * (2 * B * T * C + 4 * C * C + 4 * C)
                         + 4 * B * T * T)

    out = pl.pallas_call(
        kern,
        out_shape=jax.ShapeDtypeStruct((B * T, C), jnp.float32),
        grid=grid,
        in_specs=[
            pl.BlockSpec((block_b * T, C), lambda b: (b, 0)),     # x slab
            pl.BlockSpec((block_b, T, T), lambda b: (b, 0, 0)),   # mask bias
            full2d((C, 3 * C)), full2d((1, 3 * C)),               # Wqkv, bqkv
            full2d((C, C)), full2d((1, C)),                       # Wproj, bproj
        ],
        out_specs=pl.BlockSpec((block_b * T, C), lambda b: (b, 0)),
        compiler_params=pltpu.CompilerParams(
            dimension_semantics=("parallel",)),   # shards batch across v7x TCs
        cost_estimate=pl.CostEstimate(flops=flops,
                                      transcendentals=transcendentals,
                                      bytes_accessed=bytes_accessed),
    )(x2, bias, wqkv, bqkv, wp, bp)
    # TODO(synk): at large C on v7x, single-buffer the grid-invariant weight
    # specs (pipeline_mode=pl.Buffered(1)) and set vmem_limit_bytes explicitly.
    return out.reshape(B, T, C)


def make_buffer_mask(num_frames, num_animals):
    """Reproduces the registered `mask` buffer from __init__ (as (T,T))."""
    a = jnp.tril(jnp.ones((num_frames, num_frames), jnp.float32))[:, :, None, None]
    b = jnp.ones((1, 1, num_animals, num_animals), jnp.float32)
    m = jnp.transpose(a * b, (0, 2, 1, 3)).reshape(
        num_frames * num_animals, num_frames * num_animals)
    return m


def ref_forward(x, pad_mask, cmask, params, n_head):
    """Pure-JAX reference mirroring the PyTorch forward (eval mode)."""
    wq, bq, wk, bk, wv, bv, wp, bp = params
    B, T, C = x.shape
    D = C // n_head
    def heads(z):
        return z.reshape(B, T, n_head, D).transpose(0, 2, 1, 3)
    q = heads(x @ wq + bq[0])
    k = heads(x @ wk + bk[0])
    v = heads(x @ wv + bv[0])
    att = (q @ k.transpose(0, 1, 3, 2)) * (1.0 / math.sqrt(D))
    m = cmask[None, None, :, :] * pad_mask[:, None, None, :]
    att = jnp.where(m == 0.0, -jnp.inf, att)
    att = jax.nn.softmax(att, axis=-1)
    y = (att @ v).transpose(0, 2, 1, 3).reshape(B, T, C)
    return y @ wp + bp[0]


if __name__ == "__main__":
    # hparams implied by the module
    n_embd, n_head = 32, 4
    num_frames, num_animals = 4, 2
    B = 16                                    # 2 grid steps of block_b=8
    T = num_frames * num_animals              # seq length = 8
    C = n_embd

    key = jax.random.PRNGKey(0)
    ks = jax.random.split(key, 9)
    scale = 1.0 / math.sqrt(C)
    x = jax.random.normal(ks[0], (B, T, C), jnp.float32)

    def lin(kw, kb):
        w = jax.random.uniform(kw, (C, C), jnp.float32, -scale, scale)
        b = jax.random.uniform(kb, (1, C), jnp.float32, -scale, scale)
        return w, b

    wq, bq = lin(ks[1], ks[2])
    wk, bk = lin(ks[3], ks[4])
    wv, bv = lin(ks[5], ks[6])
    wp, bp = lin(ks[7], ks[8])
    params = (wq, bq, wk, bk, wv, bv, wp, bp)

    cmask = make_buffer_mask(num_frames, num_animals)     # (T, T)
    pad_mask = jnp.ones((B, T), jnp.float32)
    pad_mask = pad_mask.at[1, T - 1].set(0.0).at[5, T - 2:].set(0.0)

    out = causal_self_attention(x, pad_mask, cmask, params, n_head, block_b=8)
    out = jax.block_until_ready(out)

    ref = ref_forward(x, pad_mask, cmask, params, n_head)
    assert out.shape == (B, T, C)
    # 5e-3 tolerance: softmax denominator uses the EUP approximate reciprocal.
    assert jnp.allclose(out, ref, rtol=5e-3, atol=5e-3), "mismatch vs reference"
    print("KERNEL_OK")
</pallas_src>

<mosaic_0001>
module attributes {stable_mosaic.version = 11 : i64} {
  func.func @_attn_kernel(%arg0: i32, %arg1: memref<64x32xf32, #tpu.memory_space<vmem>>, %arg2: memref<8x8x8xf32, #tpu.memory_space<vmem>>, %arg3: memref<32x96xf32, #tpu.memory_space<vmem>>, %arg4: memref<1x96xf32, #tpu.memory_space<vmem>>, %arg5: memref<32x32xf32, #tpu.memory_space<vmem>>, %arg6: memref<1x32xf32, #tpu.memory_space<vmem>>, %arg7: memref<64x32xf32, #tpu.memory_space<vmem>>) attributes {dimension_semantics = [#tpu.dimension_semantics<parallel>], iteration_bounds = array<i64: 2>, scalar_prefetch = 0 : i64, scratch_operands = 0 : i64, tpu.core_type = #tpu.core_type<tc>, window_params = [{transform_indices = @transform_0, window_bounds = array<i64: 64, 32>}, {transform_indices = @transform_1, window_bounds = array<i64: 8, 8, 8>}, {pipeline_mode = #tpu.pipeline_mode<synchronous>, transform_indices = @transform_2, window_bounds = array<i64: 32, 96>}, {pipeline_mode = #tpu.pipeline_mode<synchronous>, transform_indices = @transform_3, window_bounds = array<i64: 1, 96>}, {pipeline_mode = #tpu.pipeline_mode<synchronous>, transform_indices = @transform_4, window_bounds = array<i64: 32, 32>}, {pipeline_mode = #tpu.pipeline_mode<synchronous>, transform_indices = @transform_5, window_bounds = array<i64: 1, 32>}, {transform_indices = @transform_6, window_bounds = array<i64: 64, 32>}]} {
    %c0 = arith.constant 0 : index
    %c0_0 = arith.constant 0 : index
    %0 = vector.load %arg1[%c0, %c0_0] : memref<64x32xf32, #tpu.memory_space<vmem>>, vector<64x32xf32>
    %c0_1 = arith.constant 0 : index
    %c0_2 = arith.constant 0 : index
    %1 = vector.load %arg3[%c0_1, %c0_2] : memref<32x96xf32, #tpu.memory_space<vmem>>, vector<32x96xf32>
    %cst = arith.constant dense<0.000000e+00> : vector<64x96xf32>
    %2 = tpu.matmul %0, %1, %cst {dimension_numbers = #tpu.dot_dimension_numbers<[1], [0], [0], [1], [0, 0, 1, 1], [], []>} : vector<64x32xf32>, vector<32x96xf32>, vector<64x96xf32> -> vector<64x96xf32>
    %c0_3 = arith.constant 0 : index
    %c0_4 = arith.constant 0 : index
    %3 = vector.load %arg4[%c0_3, %c0_4] : memref<1x96xf32, #tpu.memory_space<vmem>>, vector<1x96xf32>
    %4 = vector.shape_cast %3 : vector<1x96xf32> to vector<96xf32>
    %5 = vector.shape_cast %4 : vector<96xf32> to vector<1x96xf32>
    %6 = vector.broadcast %5 : vector<1x96xf32> to vector<64x96xf32>
    %7 = arith.addf %2, %6 : vector<64x96xf32>
    %c0_5 = arith.constant 0 : index
    %c0_6 = arith.constant 0 : index
    %c0_7 = arith.constant 0 : index
    %8 = vector.load %arg2[%c0_5, %c0_6, %c0_7] : memref<8x8x8xf32, #tpu.memory_space<vmem>>, vector<8x8x8xf32>
    %9 = vector.extract_strided_slice %7 {offsets = [0, 0], sizes = [64, 8], strides = [1, 1]} : vector<64x96xf32> to vector<64x8xf32>
    %10 = vector.shape_cast %9 : vector<64x8xf32> to vector<8x8x8xf32>
    %11 = vector.extract_strided_slice %7 {offsets = [0, 32], sizes = [64, 8], strides = [1, 1]} : vector<64x96xf32> to vector<64x8xf32>
    %12 = vector.shape_cast %11 : vector<64x8xf32> to vector<8x8x8xf32>
    %13 = vector.extract_strided_slice %7 {offsets = [0, 64], sizes = [64, 8], strides = [1, 1]} : vector<64x96xf32> to vector<64x8xf32>
    %14 = vector.shape_cast %13 : vector<64x8xf32> to vector<8x8x8xf32>
    "tpu.trace_start"() <{level = 10 : i32, message = "bqd,bkd->bqk"}> : () -> ()
    %cst_8 = arith.constant dense<0.000000e+00> : vector<8x8x8xf32>
    %15 = tpu.matmul %10, %12, %cst_8 {dimension_numbers = #tpu.dot_dimension_numbers<[2], [2], [1], [1], [0, 0, 0, 1, 1, 1], [0], [0]>} : vector<8x8x8xf32>, vector<8x8x8xf32>, vector<8x8x8xf32> -> vector<8x8x8xf32>
    "tpu.trace_stop"() : () -> ()
    %cst_9 = arith.constant 0.353553385 : f32
    %16 = vector.broadcast %cst_9 : f32 to vector<8x8x8xf32>
    %17 = arith.mulf %15, %16 : vector<8x8x8xf32>
    %18 = arith.addf %17, %8 : vector<8x8x8xf32>
    %cst_10 = arith.constant dense<0xFF800000> : vector<8x8xf32>
    %19 = vector.multi_reduction <maximumf>, %18, %cst_10 [2] : vector<8x8x8xf32> to vector<8x8xf32>
    %20 = vector.shape_cast %19 : vector<8x8xf32> to vector<8x8x1xf32>
    %21 = vector.broadcast %20 : vector<8x8x1xf32> to vector<8x8x8xf32>
    %22 = arith.subf %18, %21 : vector<8x8x8xf32>
    %23 = math.exp %22 : vector<8x8x8xf32>
    %cst_11 = arith.constant dense<0.000000e+00> : vector<8x8xf32>
    %24 = vector.multi_reduction <add>, %23, %cst_11 [2] : vector<8x8x8xf32> to vector<8x8xf32>
    %25 = vector.shape_cast %24 : vector<8x8xf32> to vector<8x8x1xf32>
    %26 = tpu.reciprocal %25 {approx = true} : vector<8x8x1xf32> -> vector<8x8x1xf32>
    %27 = vector.broadcast %26 : vector<8x8x1xf32> to vector<8x8x8xf32>
    %28 = arith.mulf %23, %27 : vector<8x8x8xf32>
    "tpu.trace_start"() <{level = 10 : i32, message = "bqk,bkd->bqd"}> : () -> ()
    %cst_12 = arith.constant dense<0.000000e+00> : vector<8x8x8xf32>
    %29 = tpu.matmul %28, %14, %cst_12 {dimension_numbers = #tpu.dot_dimension_numbers<[2], [1], [1], [2], [0, 0, 0, 1, 1, 2], [0], [0]>} : vector<8x8x8xf32>, vector<8x8x8xf32>, vector<8x8x8xf32> -> vector<8x8x8xf32>
    "tpu.trace_stop"() : () -> ()
    %30 = vector.shape_cast %29 : vector<8x8x8xf32> to vector<64x8xf32>
    %31 = vector.extract_strided_slice %7 {offsets = [0, 8], sizes = [64, 8], strides = [1, 1]} : vector<64x96xf32> to vector<64x8xf32>
    %32 = vector.shape_cast %31 : vector<64x8xf32> to vector<8x8x8xf32>
    %33 = vector.extract_strided_slice %7 {offsets = [0, 40], sizes = [64, 8], strides = [1, 1]} : vector<64x96xf32> to vector<64x8xf32>
    %34 = vector.shape_cast %33 : vector<64x8xf32> to vector<8x8x8xf32>
    %35 = vector.extract_strided_slice %7 {offsets = [0, 72], sizes = [64, 8], strides = [1, 1]} : vector<64x96xf32> to vector<64x8xf32>
    %36 = vector.shape_cast %35 : vector<64x8xf32> to vector<8x8x8xf32>
    "tpu.trace_start"() <{level = 10 : i32, message = "bqd,bkd->bqk"}> : () -> ()
    %cst_13 = arith.constant dense<0.000000e+00> : vector<8x8x8xf32>
    %37 = tpu.matmul %32, %34, %cst_13 {dimension_numbers = #tpu.dot_dimension_numbers<[2], [2], [1], [1], [0, 0, 0, 1, 1, 1], [0], [0]>} : vector<8x8x8xf32>, vector<8x8x8xf32>, vector<8x8x8xf32> -> vector<8x8x8xf32>
    "tpu.trace_stop"() : () -> ()
    %cst_14 = arith.constant 0.353553385 : f32
    %38 = vector.broadcast %cst_14 : f32 to vector<8x8x8xf32>
    %39 = arith.mulf %37, %38 : vector<8x8x8xf32>
    %40 = arith.addf %39, %8 : vector<8x8x8xf32>
    %cst_15 = arith.constant dense<0xFF800000> : vector<8x8xf32>
    %41 = vector.multi_reduction <maximumf>, %40, %cst_15 [2] : vector<8x8x8xf32> to vector<8x8xf32>
    %42 = vector.shape_cast %41 : vector<8x8xf32> to vector<8x8x1xf32>
    %43 = vector.broadcast %42 : vector<8x8x1xf32> to vector<8x8x8xf32>
    %44 = arith.subf %40, %43 : vector<8x8x8xf32>
    %45 = math.exp %44 : vector<8x8x8xf32>
    %cst_16 = arith.constant dense<0.000000e+00> : vector<8x8xf32>
    %46 = vector.multi_reduction <add>, %45, %cst_16 [2] : vector<8x8x8xf32> to vector<8x8xf32>
    %47 = vector.shape_cast %46 : vector<8x8xf32> to vector<8x8x1xf32>
    %48 = tpu.reciprocal %47 {approx = true} : vector<8x8x1xf32> -> vector<8x8x1xf32>
    %49 = vector.broadcast %48 : vector<8x8x1xf32> to vector<8x8x8xf32>
    %50 = arith.mulf %45, %49 : vector<8x8x8xf32>
    "tpu.trace_start"() <{level = 10 : i32, message = "bqk,bkd->bqd"}> : () -> ()
    %cst_17 = arith.constant dense<0.000000e+00> : vector<8x8x8xf32>
    %51 = tpu.matmul %50, %36, %cst_17 {dimension_numbers = #tpu.dot_dimension_numbers<[2], [1], [1], [2], [0, 0, 0, 1, 1, 2], [0], [0]>} : vector<8x8x8xf32>, vector<8x8x8xf32>, vector<8x8x8xf32> -> vector<8x8x8xf32>
    "tpu.trace_stop"() : () -> ()
    %52 = vector.shape_cast %51 : vector<8x8x8xf32> to vector<64x8xf32>
    %53 = vector.extract_strided_slice %7 {offsets = [0, 16], sizes = [64, 8], strides = [1, 1]} : vector<64x96xf32> to vector<64x8xf32>
    %54 = vector.shape_cast %53 : vector<64x8xf32> to vector<8x8x8xf32>
    %55 = vector.extract_strided_slice %7 {offsets = [0, 48], sizes = [64, 8], strides = [1, 1]} : vector<64x96xf32> to vector<64x8xf32>
    %56 = vector.shape_cast %55 : vector<64x8xf32> to vector<8x8x8xf32>
    %57 = vector.extract_strided_slice %7 {offsets = [0, 80], sizes = [64, 8], strides = [1, 1]} : vector<64x96xf32> to vector<64x8xf32>
    %58 = vector.shape_cast %57 : vector<64x8xf32> to vector<8x8x8xf32>
    "tpu.trace_start"() <{level = 10 : i32, message = "bqd,bkd->bqk"}> : () -> ()
    %cst_18 = arith.constant dense<0.000000e+00> : vector<8x8x8xf32>
    %59 = tpu.matmul %54, %56, %cst_18 {dimension_numbers = #tpu.dot_dimension_numbers<[2], [2], [1], [1], [0, 0, 0, 1, 1, 1], [0], [0]>} : vector<8x8x8xf32>, vector<8x8x8xf32>, vector<8x8x8xf32> -> vector<8x8x8xf32>
    "tpu.trace_stop"() : () -> ()
    %cst_19 = arith.constant 0.353553385 : f32
    %60 = vector.broadcast %cst_19 : f32 to vector<8x8x8xf32>
    %61 = arith.mulf %59, %60 : vector<8x8x8xf32>
    %62 = arith.addf %61, %8 : vector<8x8x8xf32>
    %cst_20 = arith.constant dense<0xFF800000> : vector<8x8xf32>
    %63 = vector.multi_reduction <maximumf>, %62, %cst_20 [2] : vector<8x8x8xf32> to vector<8x8xf32>
    %64 = vector.shape_cast %63 : vector<8x8xf32> to vector<8x8x1xf32>
    %65 = vector.broadcast %64 : vector<8x8x1xf32> to vector<8x8x8xf32>
    %66 = arith.subf %62, %65 : vector<8x8x8xf32>
    %67 = math.exp %66 : vector<8x8x8xf32>
    %cst_21 = arith.constant dense<0.000000e+00> : vector<8x8xf32>
    %68 = vector.multi_reduction <add>, %67, %cst_21 [2] : vector<8x8x8xf32> to vector<8x8xf32>
    %69 = vector.shape_cast %68 : vector<8x8xf32> to vector<8x8x1xf32>
    %70 = tpu.reciprocal %69 {approx = true} : vector<8x8x1xf32> -> vector<8x8x1xf32>
    %71 = vector.broadcast %70 : vector<8x8x1xf32> to vector<8x8x8xf32>
    %72 = arith.mulf %67, %71 : vector<8x8x8xf32>
    "tpu.trace_start"() <{level = 10 : i32, message = "bqk,bkd->bqd"}> : () -> ()
    %cst_22 = arith.constant dense<0.000000e+00> : vector<8x8x8xf32>
    %73 = tpu.matmul %72, %58, %cst_22 {dimension_numbers = #tpu.dot_dimension_numbers<[2], [1], [1], [2], [0, 0, 0, 1, 1, 2], [0], [0]>} : vector<8x8x8xf32>, vector<8x8x8xf32>, vector<8x8x8xf32> -> vector<8x8x8xf32>
    "tpu.trace_stop"() : () -> ()
    %74 = vector.shape_cast %73 : vector<8x8x8xf32> to vector<64x8xf32>
    %75 = vector.extract_strided_slice %7 {offsets = [0, 24], sizes = [64, 8], strides = [1, 1]} : vector<64x96xf32> to vector<64x8xf32>
    %76 = vector.shape_cast %75 : vector<64x8xf32> to vector<8x8x8xf32>
    %77 = vector.extract_strided_slice %7 {offsets = [0, 56], sizes = [64, 8], strides = [1, 1]} : vector<64x96xf32> to vector<64x8xf32>
    %78 = vector.shape_cast %77 : vector<64x8xf32> to vector<8x8x8xf32>
    %79 = vector.extract_strided_slice %7 {offsets = [0, 88], sizes = [64, 8], strides = [1, 1]} : vector<64x96xf32> to vector<64x8xf32>
    %80 = vector.shape_cast %79 : vector<64x8xf32> to vector<8x8x8xf32>
    "tpu.trace_start"() <{level = 10 : i32, message = "bqd,bkd->bqk"}> : () -> ()
    %cst_23 = arith.constant dense<0.000000e+00> : vector<8x8x8xf32>
    %81 = tpu.matmul %76, %78, %cst_23 {dimension_numbers = #tpu.dot_dimension_numbers<[2], [2], [1], [1], [0, 0, 0, 1, 1, 1], [0], [0]>} : vector<8x8x8xf32>, vector<8x8x8xf32>, vector<8x8x8xf32> -> vector<8x8x8xf32>
    "tpu.trace_stop"() : () -> ()
    %cst_24 = arith.constant 0.353553385 : f32
    %82 = vector.broadcast %cst_24 : f32 to vector<8x8x8xf32>
    %83 = arith.mulf %81, %82 : vector<8x8x8xf32>
    %84 = arith.addf %83, %8 : vector<8x8x8xf32>
    %cst_25 = arith.constant dense<0xFF800000> : vector<8x8xf32>
    %85 = vector.multi_reduction <maximumf>, %84, %cst_25 [2] : vector<8x8x8xf32> to vector<8x8xf32>
    %86 = vector.shape_cast %85 : vector<8x8xf32> to vector<8x8x1xf32>
    %87 = vector.broadcast %86 : vector<8x8x1xf32> to vector<8x8x8xf32>
    %88 = arith.subf %84, %87 : vector<8x8x8xf32>
    %89 = math.exp %88 : vector<8x8x8xf32>
    %cst_26 = arith.constant dense<0.000000e+00> : vector<8x8xf32>
    %90 = vector.multi_reduction <add>, %89, %cst_26 [2] : vector<8x8x8xf32> to vector<8x8xf32>
    %91 = vector.shape_cast %90 : vector<8x8xf32> to vector<8x8x1xf32>
    %92 = tpu.reciprocal %91 {approx = true} : vector<8x8x1xf32> -> vector<8x8x1xf32>
    %93 = vector.broadcast %92 : vector<8x8x1xf32> to vector<8x8x8xf32>
    %94 = arith.mulf %89, %93 : vector<8x8x8xf32>
    "tpu.trace_start"() <{level = 10 : i32, message = "bqk,bkd->bqd"}> : () -> ()
    %cst_27 = arith.constant dense<0.000000e+00> : vector<8x8x8xf32>
    %95 = tpu.matmul %94, %80, %cst_27 {dimension_numbers = #tpu.dot_dimension_numbers<[2], [1], [1], [2], [0, 0, 0, 1, 1, 2], [0], [0]>} : vector<8x8x8xf32>, vector<8x8x8xf32>, vector<8x8x8xf32> -> vector<8x8x8xf32>
    "tpu.trace_stop"() : () -> ()
    %96 = vector.shape_cast %95 : vector<8x8x8xf32> to vector<64x8xf32>
    %97 = tpu.concatenate %30, %52, %74, %96 in 1 : vector<64x8xf32>, vector<64x8xf32>, vector<64x8xf32>, vector<64x8xf32> -> vector<64x32xf32>
    %c0_28 = arith.constant 0 : index
    %c0_29 = arith.constant 0 : index
    %98 = vector.load %arg5[%c0_28, %c0_29] : memref<32x32xf32, #tpu.memory_space<vmem>>, vector<32x32xf32>
    %cst_30 = arith.constant dense<0.000000e+00> : vector<64x32xf32>
    %99 = tpu.matmul %97, %98, %cst_30 {dimension_numbers = #tpu.dot_dimension_numbers<[1], [0], [0], [1], [0, 0, 1, 1], [], []>} : vector<64x32xf32>, vector<32x32xf32>, vector<64x32xf32> -> vector<64x32xf32>
    %c0_31 = arith.constant 0 : index
    %c0_32 = arith.constant 0 : index
    %100 = vector.load %arg6[%c0_31, %c0_32] : memref<1x32xf32, #tpu.memory_space<vmem>>, vector<1x32xf32>
    %101 = vector.shape_cast %100 : vector<1x32xf32> to vector<32xf32>
    %102 = vector.shape_cast %101 : vector<32xf32> to vector<1x32xf32>
    %103 = vector.broadcast %102 : vector<1x32xf32> to vector<64x32xf32>
    %104 = arith.addf %99, %103 : vector<64x32xf32>
    %c0_33 = arith.constant 0 : index
    %c0_34 = arith.constant 0 : index
    %105 = vector.load %arg7[%c0_33, %c0_34] : memref<64x32xf32, #tpu.memory_space<vmem>>, vector<64x32xf32>
    tpu.vector_store %arg7[%c0_33, %c0_34], %104 {strides = array<i32>} : memref<64x32xf32, #tpu.memory_space<vmem>>, vector<64x32xf32>,
    return
  }
  func.func @transform_0(%arg0: i32) -> (i32, i32) {
    %c0_i32 = arith.constant 0 : i32
    %c0_i32_0 = arith.constant 0 : i32
    return %arg0, %c0_i32 : i32, i32
  }
  func.func @transform_1(%arg0: i32) -> (i32, i32, i32) {
    %c0_i32 = arith.constant 0 : i32
    %c0_i32_0 = arith.constant 0 : i32
    %c0_i32_1 = arith.constant 0 : i32
    return %arg0, %c0_i32, %c0_i32_0 : i32, i32, i32
  }
  func.func @transform_2(%arg0: i32) -> (i32, i32) {
    %c0_i32 = arith.constant 0 : i32
    %c0_i32_0 = arith.constant 0 : i32
    %c0_i32_1 = arith.constant 0 : i32
    return %c0_i32, %c0_i32_0 : i32, i32
  }
  func.func @transform_3(%arg0: i32) -> (i32, i32) {
    %c0_i32 = arith.constant 0 : i32
    %c0_i32_0 = arith.constant 0 : i32
    %c0_i32_1 = arith.constant 0 : i32
    return %c0_i32, %c0_i32_0 : i32, i32
  }
  func.func @transform_4(%arg0: i32) -> (i32, i32) {
    %c0_i32 = arith.constant 0 : i32
    %c0_i32_0 = arith.constant 0 : i32
    %c0_i32_1 = arith.constant 0 : i32
    return %c0_i32, %c0_i32_0 : i32, i32
  }
  func.func @transform_5(%arg0: i32) -> (i32, i32) {
    %c0_i32 = arith.constant 0 : i32
    %c0_i32_0 = arith.constant 0 : i32
    %c0_i32_1 = arith.constant 0 : i32
    return %c0_i32, %c0_i32_0 : i32, i32
  }
  func.func @transform_6(%arg0: i32) -> (i32, i32) {
    %c0_i32 = arith.constant 0 : i32
    %c0_i32_0 = arith.constant 0 : i32
    return %arg0, %c0_i32 : i32, i32
  }
}

</mosaic_0001>

<llo_original>
// kernel: tpu_custom_call.1
$region0: #{tpu_custom_call.1}
  #allocation0 [shape = 'u32[]', space=smem, size = 0x4, offset = 0x4, fixed_abs, tag = 'smem constant byte address 0x4 - core index']
  #allocation1 [shape = 'u32[144,128]{1,0:T(1,128)}', space=vmem, size = 0x12000, scoped, tag = 'internal scratch']
  %s0 = inlined_call_operand.vmem [shape: f32[128,32], index: 0, kind: input, shape index: {}]
  %s1 = inlined_call_operand.vmem [shape: f32[16,8,8], index: 1, kind: input, shape index: {}]
  %s2 = inlined_call_operand.vmem [shape: f32[32,96], index: 2, kind: input, shape index: {}]
  %s3 = inlined_call_operand.vmem [shape: f32[1,96], index: 3, kind: input, shape index: {}]
  %s4 = inlined_call_operand.vmem [shape: f32[32,32], index: 4, kind: input, shape index: {}]
  %s5 = inlined_call_operand.vmem [shape: f32[1,32], index: 5, kind: input, shape index: {}]
  %s6 = inlined_call_operand.vmem [shape: f32[128,32], index: 6, kind: output, shape index: {}]
  %s7 = sld [smem:[#allocation0]]
  $region57: #{tpu_custom_call.1} parent=0
    _
  %s9 = ssub.s32 1, %s7
  %s10 = scalar_select 0, %s9, %s7
  loop: start=0, step=1, limit=4
  $region2: #{tpu_custom_call.1} parent=0 // loop_pre_header
    _
  $region3: #{tpu_custom_call.1} parent=0 // loop_header
    %s12 = sphi 0, %s16
    %p13 = scmp.ge.s32.totalorder %s12, 4
    %s22 = sphi 0, %s24
    %s25 = sphi 0, %s22
    %s26 = sphi 0, %s25
    %s42 = sphi 0, %s26
    %s48 = sphi 0, %s50
    %s51 = sphi 0, %s48
    %s52 = sphi 0, %s51
    %s68 = sphi 0, %s52
    %s72 = sphi 0, %s72
    %s74 = sphi 0, %s72
    %s75 = sphi 0, %s74
    %s89 = sphi 0, %s75
    %s93 = sphi 0, %s93
    %s95 = sphi 0, %s93
    %s96 = sphi 0, %s95
    %s110 = sphi 0, %s96
    %s114 = sphi 0, %s114
    %s116 = sphi 0, %s114
    %s117 = sphi 0, %s116
    %s131 = sphi 0, %s117
    %s135 = sphi 0, %s135
    %s137 = sphi 0, %s135
    %s138 = sphi 0, %s137
    %s152 = sphi 0, %s138
    %s158 = sphi 0, %s160
    %s161 = sphi 0, %s158
    %s162 = sphi 0, %s161
    %s178 = sphi 0, %s162
  $region4: #{tpu_custom_call.1} parent=0 // loop_header_branch
    %15 = sbr.rel (%p13) target = $region8
  $region5: #{tpu_custom_call.1} parent=0 // loop_body
    %s17 = ssub.s32 %s12, 1
    %s18 = ssub.s32 %s12, 2
    %s19 = sadd.s32 %s12, 1
    %s20 = ssub.s32 %s12, %s19
    %p21 = scmp.eq.s32.totalorder %s20, 0
    %s23 = sadd.s32 %s22, 1
    %s24 = scalar_select %p21, %s22, %s23
    %p27 = pneg %p21
    %p28 = scmp.eq.s32.totalorder %s12, 1
    %p29 = por %p27, %p28
    %p30 = scmp.ne.s32.totalorder %s22, %s25
    %p31 = scmp.eq.s32.totalorder %s12, 0
    %p32 = por %p30, %p31
    %p33 = scmp.ne.s32.totalorder %s22, %s25
    %p34 = scmp.eq.s32.totalorder %s17, 1
    %p35 = por %p33, %p34
    %p36 = scmp.ne.s32.totalorder %s25, %s26
    %p37 = scmp.eq.s32.totalorder %s17, 0
    %p38 = por %p36, %p37
    %p39 = scmp.ne.s32.totalorder %s25, %s26
    %p40 = scmp.eq.s32.totalorder %s18, 1
    %p41 = por %p39, %p40
    %p43 = scmp.ne.s32.totalorder %s26, %s42
    %p44 = scmp.eq.s32.totalorder %s18, 0
    %p45 = por %p43, %p44
    %s46 = ssub.s32 %s12, %s19
    %p47 = scmp.eq.s32.totalorder %s46, 0
    %s49 = sadd.s32 %s48, 1
    %s50 = scalar_select %p47, %s48, %s49
    %p53 = pneg %p47
    %p54 = scmp.eq.s32.totalorder %s12, 1
    %p55 = por %p53, %p54
    %p56 = scmp.ne.s32.totalorder %s48, %s51
    %p57 = scmp.eq.s32.totalorder %s12, 0
    %p58 = por %p56, %p57
    %p59 = scmp.ne.s32.totalorder %s48, %s51
    %p60 = scmp.eq.s32.totalorder %s17, 1
    %p61 = por %p59, %p60
    %p62 = scmp.ne.s32.totalorder %s51, %s52
    %p63 = scmp.eq.s32.totalorder %s17, 0
    %p64 = por %p62, %p63
    %p65 = scmp.ne.s32.totalorder %s51, %s52
    %p66 = scmp.eq.s32.totalorder %s18, 1
    %p67 = por %p65, %p66
    %p69 = scmp.ne.s32.totalorder %s52, %s68
    %p70 = scmp.eq.s32.totalorder %s18, 0
    %p71 = por %p69, %p70
    %s73 = sadd.s32 %s72, 1
    %p76 = scmp.eq.s32.totalorder %s12, 1
    %p77 = scmp.ne.s32.totalorder %s72, %s74
    %p78 = scmp.eq.s32.totalorder %s12, 0
    %p79 = por %p77, %p78
    %p80 = scmp.ne.s32.totalorder %s72, %s74
    %p81 = scmp.eq.s32.totalorder %s17, 1
    %p82 = por %p80, %p81
    %p83 = scmp.ne.s32.totalorder %s74, %s75
    %p84 = scmp.eq.s32.totalorder %s17, 0
    %p85 = por %p83, %p84
    %p86 = scmp.ne.s32.totalorder %s74, %s75
    %p87 = scmp.eq.s32.totalorder %s18, 1
    %p88 = por %p86, %p87
    %p90 = scmp.ne.s32.totalorder %s75, %s89
    %p91 = scmp.eq.s32.totalorder %s18, 0
    %p92 = por %p90, %p91
    %s94 = sadd.s32 %s93, 1
    %p97 = scmp.eq.s32.totalorder %s12, 1
    %p98 = scmp.ne.s32.totalorder %s93, %s95
    %p99 = scmp.eq.s32.totalorder %s12, 0
    %p100 = por %p98, %p99
    %p101 = scmp.ne.s32.totalorder %s93, %s95
    %p102 = scmp.eq.s32.totalorder %s17, 1
    %p103 = por %p101, %p102
    %p104 = scmp.ne.s32.totalorder %s95, %s96
    %p105 = scmp.eq.s32.totalorder %s17, 0
    %p106 = por %p104, %p105
    %p107 = scmp.ne.s32.totalorder %s95, %s96
    %p108 = scmp.eq.s32.totalorder %s18, 1
    %p109 = por %p107, %p108
    %p111 = scmp.ne.s32.totalorder %s96, %s110
    %p112 = scmp.eq.s32.totalorder %s18, 0
    %p113 = por %p111, %p112
    %s115 = sadd.s32 %s114, 1
    %p118 = scmp.eq.s32.totalorder %s12, 1
    %p119 = scmp.ne.s32.totalorder %s114, %s116
    %p120 = scmp.eq.s32.totalorder %s12, 0
    %p121 = por %p119, %p120
    %p122 = scmp.ne.s32.totalorder %s114, %s116
    %p123 = scmp.eq.s32.totalorder %s17, 1
    %p124 = por %p122, %p123
    %p125 = scmp.ne.s32.totalorder %s116, %s117
    %p126 = scmp.eq.s32.totalorder %s17, 0
    %p127 = por %p125, %p126
    %p128 = scmp.ne.s32.totalorder %s116, %s117
    %p129 = scmp.eq.s32.totalorder %s18, 1
    %p130 = por %p128, %p129
    %p132 = scmp.ne.s32.totalorder %s117, %s131
    %p133 = scmp.eq.s32.totalorder %s18, 0
    %p134 = por %p132, %p133
    %s136 = sadd.s32 %s135, 1
    %p139 = scmp.eq.s32.totalorder %s12, 1
    %p140 = scmp.ne.s32.totalorder %s135, %s137
    %p141 = scmp.eq.s32.totalorder %s12, 0
    %p142 = por %p140, %p141
    %p143 = scmp.ne.s32.totalorder %s135, %s137
    %p144 = scmp.eq.s32.totalorder %s17, 1
    %p145 = por %p143, %p144
    %p146 = scmp.ne.s32.totalorder %s137, %s138
    %p147 = scmp.eq.s32.totalorder %s17, 0
    %p148 = por %p146, %p147
    %p149 = scmp.ne.s32.totalorder %s137, %s138
    %p150 = scmp.eq.s32.totalorder %s18, 1
    %p151 = por %p149, %p150
    %p153 = scmp.ne.s32.totalorder %s138, %s152
    %p154 = scmp.eq.s32.totalorder %s18, 0
    %p155 = por %p153, %p154
    %s156 = ssub.s32 %s12, %s19
    %p157 = scmp.eq.s32.totalorder %s156, 0
    %s159 = sadd.s32 %s158, 1
    %s160 = scalar_select %p157, %s158, %s159
    %p163 = pneg %p157
    %p164 = scmp.eq.s32.totalorder %s12, 1
    %p165 = por %p163, %p164
    %p166 = scmp.ne.s32.totalorder %s158, %s161
    %p167 = scmp.eq.s32.totalorder %s12, 0
    %p168 = por %p166, %p167
    %p169 = scmp.ne.s32.totalorder %s158, %s161
    %p170 = scmp.eq.s32.totalorder %s17, 1
    %p171 = por %p169, %p170
    %p172 = scmp.ne.s32.totalorder %s161, %s162
    %p173 = scmp.eq.s32.totalorder %s17, 0
    %p174 = por %p172, %p173
    %p175 = scmp.ne.s32.totalorder %s161, %s162
    %p176 = scmp.eq.s32.totalorder %s18, 1
    %p177 = por %p175, %p176
    %p179 = scmp.ne.s32.totalorder %s162, %s178
    %p180 = scmp.eq.s32.totalorder %s18, 0
    %p181 = por %p179, %p180
    %p182 = scmp.le.s32.totalorder 1, %s12
    %p183 = scmp.lt.s32.totalorder %s12, 3
    %p184 = pnand %p182, %p183
    %p185 = pneg %p184
    // Predicated region
    $region9: #{tpu_custom_call.1} parent=5 // pred_check
      _
    $region10: #{tpu_custom_call.1} parent=5 // pred_check_branch
      %187 = sbr.rel (%p184) target = $region12
    $region11: #{tpu_custom_call.1} parent=5 // pred_region
      %s188 = ssub.s32 %s12, 1
      // Predicated region
      $region13: #{tpu_custom_call.1} parent=11 // pred_check
        %p189 = pneg %p85
      $region14: #{tpu_custom_call.1} parent=11 // pred_check_branch
        %191 = sbr.rel (%p189) target = $region16
      $region15: #{tpu_custom_call.1} parent=11 // pred_region
        _
      $region16: #{tpu_custom_call.1} parent=11 // pred_fallthru
        _
      // Predicated region
      $region17: #{tpu_custom_call.1} parent=11 // pred_check
        %p192 = pneg %p106
      $region18: #{tpu_custom_call.1} parent=11 // pred_check_branch
        %194 = sbr.rel (%p192) target = $region20
      $region19: #{tpu_custom_call.1} parent=11 // pred_region
        _
      $region20: #{tpu_custom_call.1} parent=11 // pred_fallthru
        _
      // Predicated region
      $region21: #{tpu_custom_call.1} parent=11 // pred_check
        %p195 = pneg %p127
      $region22: #{tpu_custom_call.1} parent=11 // pred_check_branch
        %197 = sbr.rel (%p195) target = $region24
      $region23: #{tpu_custom_call.1} parent=11 // pred_region
        _
      $region24: #{tpu_custom_call.1} parent=11 // pred_fallthru
        _
      // Predicated region
      $region25: #{tpu_custom_call.1} parent=11 // pred_check
        %p198 = pneg %p148
      $region26: #{tpu_custom_call.1} parent=11 // pred_check_branch
        %200 = sbr.rel (%p198) target = $region28
      $region27: #{tpu_custom_call.1} parent=11 // pred_region
        _
      $region28: #{tpu_custom_call.1} parent=11 // pred_fallthru
        _
    $region12: #{tpu_custom_call.1} parent=5 // pred_fallthru
      _
    %p201 = scmp.lt.s32.totalorder %s12, 2
    // Predicated region
    $region29: #{tpu_custom_call.1} parent=5 // pred_check
      %p202 = pneg %p201
    $region30: #{tpu_custom_call.1} parent=5 // pred_check_branch
      %204 = sbr.rel (%p202) target = $region32
    $region31: #{tpu_custom_call.1} parent=5 // pred_region
      // Predicated region
      $region33: #{tpu_custom_call.1} parent=31 // pred_check
        %p205 = pneg %p32
      $region34: #{tpu_custom_call.1} parent=31 // pred_check_branch
        %207 = sbr.rel (%p205) target = $region36
      $region35: #{tpu_custom_call.1} parent=31 // pred_region
        %s208 = smul.u32 8, %s12
        %p209 = scmp.lt.s32.totalorder %s208, 15
        %s210 = scalar_select %p209, %s208, 15
        %s211 = smul.addr %s210, 8
        %s212 = scalar_lea.vmem %s0, %s211
        %s213 = smul.u32 8, %s12
      $region36: #{tpu_custom_call.1} parent=31 // pred_fallthru
        _
      // Predicated region
      $region37: #{tpu_custom_call.1} parent=31 // pred_check
        %p214 = pneg %p58
      $region38: #{tpu_custom_call.1} parent=31 // pred_check_branch
        %216 = sbr.rel (%p214) target = $region40
      $region39: #{tpu_custom_call.1} parent=31 // pred_region
        %s217 = smul.u32 8, %s12
        %p218 = scmp.lt.s32.totalorder %s217, 15
        %s219 = scalar_select %p218, %s217, 15
        %s220 = smul.addr %s219, 8
        %s221 = scalar_lea.vmem %s1, %s220
        %s222 = smul.u32 8, %s12
      $region40: #{tpu_custom_call.1} parent=31 // pred_fallthru
        _
    $region32: #{tpu_custom_call.1} parent=5 // pred_fallthru
      _
    %p223 = scmp.le.s32.totalorder 1, %s12
    %p224 = scmp.lt.s32.totalorder %s12, 3
    %p225 = pnand %p223, %p224
    %p226 = pneg %p225
    // Predicated region
    $region41: #{tpu_custom_call.1} parent=5 // pred_check
      _
    $region42: #{tpu_custom_call.1} parent=5 // pred_check_branch
      %228 = sbr.rel (%p225) target = $region44
    $region43: #{tpu_custom_call.1} parent=5 // pred_region
      %s229 = ssub.s32 %s12, 1
      %s230 = smul.u32 8, %s17
      %p231 = scmp.lt.s32.totalorder %s230, 15
      %s232 = scalar_select %p231, %s230, 15
      %s233 = smul.addr %s232, 8
      %s234 = scalar_lea.vmem %s0, %s233
      %p235 = pneg %p38
      %p236 = pneg %p35
      %s237 = smul.u32 8, %s17
      %p238 = scmp.lt.s32.totalorder %s237, 15
      %s239 = scalar_select %p238, %s237, 15
      %s240 = smul.addr %s239, 8
      %s241 = scalar_lea.vmem %s1, %s240
      %p242 = pneg %p64
      %p243 = pneg %p61
      %p244 = pneg %p85
      %p245 = pneg %p82
      %p246 = pneg %p106
      %p247 = pneg %p103
      %p248 = pneg %p127
      %p249 = pneg %p124
      %p250 = pneg %p148
      %p251 = pneg %p145
      %p252 = pneg %p174
      %p253 = pneg %p171
      %s254 = smul.u32 8, %s17
      %p255 = scmp.lt.s32.totalorder %s254, 15
      %s256 = scalar_select %p255, %s254, 15
      %s257 = smul.addr %s256, 8
      %s258 = scalar_lea.vmem %s6, %s257
      %s259 = smul.u32 8, %s17
      %p260 = scmp.lt.s32.totalorder %s259, 15
      %s261 = scalar_select %p260, %s259, 15
      %s262 = smul.addr %s261, 8
      %s263 = scalar_lea.vmem %s0, %s262
      %s264 = smul.u32 8, %s17
      %s265 = smul.u32 8, %s17
      %p266 = scmp.lt.s32.totalorder %s265, 15
      %s267 = scalar_select %p266, %s265, 15
      %s268 = smul.addr %s267, 8
      %s269 = scalar_lea.vmem %s1, %s268
      %s270 = smul.u32 8, %s17
      %s271 = smul.u32 8, %s17
      %p272 = scmp.lt.s32.totalorder %s271, 15
      %s273 = scalar_select %p272, %s271, 15
      %s274 = smul.addr %s273, 8
      %s275 = scalar_lea.vmem %s6, %s274
      %s276 = smul.u32 8, %s17
      %v277 = vld [vmem:[%s263] sm:$0xff]
      %v278 = vld [vmem:[%s263 + $0x8] sm:$0xff]
      %v279 = vld [vmem:[%s263 + $0x10] sm:$0xff]
      %v280 = vld [vmem:[%s263 + $0x18] sm:$0xff]
      %v281 = vld [vmem:[%s263 + $0x20] sm:$0xff]
      %v282 = vld [vmem:[%s263 + $0x28] sm:$0xff]
      %v283 = vld [vmem:[%s263 + $0x30] sm:$0xff]
      %v284 = vld [vmem:[%s263 + $0x38] sm:$0xff]
      %v285 = vld [vmem:[%s2] sm:$0xff]
      %v286 = vld [vmem:[%s2 + $0x8] sm:$0xff]
      %v287 = vld [vmem:[%s2 + $0x10] sm:$0xff]
      %v288 = vld [vmem:[%s2 + $0x18] sm:$0xff]
      %v289 = vld [vmem:[%s3] sm:$0x1]
      %v291 = vlaneseq
      %v292 = vshrl.u32 %v291, 7
      %v293 = vsub.s32 0, %v292
      %v294 = vrot.slane %v289, %v293
      %vm296 = vcmask 261120
      %v298 = vsel %vm296, %v277, 0
      %v301 = vsel %vm296, %v278, 0
      %v304 = vsel %vm296, %v279, 0
      %v307 = vsel %vm296, %v280, 0
      %v310 = vsel %vm296, %v281, 0
      %v313 = vsel %vm296, %v282, 0
      %v316 = vsel %vm296, %v283, 0
      %v319 = vsel %vm296, %v284, 0
      %321 = vmatprep.subr.mxu0 0.0
      %322 = vmatpush1.msra.mxu0 0.0
      %323 = vmatprep.subr.mxu0 0.0
      %324 = vmatpush1.msra.mxu0 0.0
      %325 = vmatprep.subr.mxu0 0.0
      %326 = vmatpush1.msra.mxu0 0.0
      %327 = vmatprep.subr.mxu0 0.0
      %328 = vmatpush1.msra.mxu0 0.0
      %329 = vmatprep.subr.mxu0 0.0
      %330 = vmatpush1.msra.mxu0 0.0
      %331 = vmatprep.subr.mxu0 0.0
      %332 = vmatpush1.msra.mxu0 0.0
      %333 = vmatprep.subr.mxu0 0.0
      %334 = vmatpush1.msra.mxu0 0.0
      %335 = vmatprep.subr.mxu0 0.0
      %336 = vmatpush1.msra.mxu0 0.0
      %337 = vmatprep.subr.mxu0 0.0
      %338 = vmatpush1.msra.mxu0 0.0
      %339 = vmatprep.subr.mxu0 0.0
      %340 = vmatpush1.msra.mxu0 0.0
      %341 = vmatprep.subr.mxu0 0.0
      %342 = vmatpush1.msra.mxu0 0.0
      %343 = vmatprep.subr.mxu0 0.0
      %344 = vmatpush1.msra.mxu0 0.0
      %345 = vmatprep.subr.mxu0 0.0
      %346 = vmatpush1.msra.mxu0 %v288
      %347 = vmatprep.subr.mxu0 0.0
      %348 = vmatpush1.msra.mxu0 %v287
      %349 = vmatprep.subr.mxu0 0.0
      %350 = vmatpush1.msra.mxu0 %v286
      %351 = vmatprep.subr.mxu0 0.0
      %352 = vmatpush1.msra.mxu0 %v285
      %353 = vmatprep.subr.mxu0 0.0
      %354 = vmatpush2.msra.mxu0 0.0
      %355 = vmatprep.subr.mxu0 0.0
      %356 = vmatpush2.msra.mxu0 0.0
      %357 = vmatprep.subr.mxu0 0.0
      %358 = vmatpush2.msra.mxu0 0.0
      %359 = vmatprep.subr.mxu0 0.0
      %360 = vmatpush2.msra.mxu0 0.0
      %361 = vmatprep.subr.mxu0 0.0
      %362 = vmatpush2.msra.mxu0 0.0
      %363 = vmatprep.subr.mxu0 0.0
      %364 = vmatpush2.msra.mxu0 0.0
      %365 = vmatprep.subr.mxu0 0.0
      %366 = vmatpush2.msra.mxu0 0.0
      %367 = vmatprep.subr.mxu0 0.0
      %368 = vmatpush2.msra.mxu0 0.0
      %369 = vmatprep.subr.mxu0 0.0
      %370 = vmatpush2.msra.mxu0 0.0
      %371 = vmatprep.subr.mxu0 0.0
      %372 = vmatpush2.msra.mxu0 0.0
      %373 = vmatprep.subr.mxu0 0.0
      %374 = vmatpush2.msra.mxu0 0.0
      %375 = vmatprep.subr.mxu0 0.0
      %376 = vmatpush2.msra.mxu0 0.0
      %377 = vmatprep.subr.mxu0 0.0
      %378 = vmatpush2.msra.mxu0 0.0
      %379 = vmatprep.subr.mxu0 0.0
      %380 = vmatpush2.msra.mxu0 0.0
      %381 = vmatprep.subr.mxu0 0.0
      %382 = vmatpush2.msra.mxu0 0.0
      %383 = vmatprep.subr.mxu0 0.0
      %384 = vmatpush2.msra.mxu0 0.0
      %385 = vmatprep.mubr.f32.mxu0 0.0
      %386 = vmatmul.mubr.f32.gmra.mxu0 %v298
      %v387 = vpop.f32.mrf.mxu0
      %v388 = vadd.f32 %v294, %v387
      %v389 = vpop.f32.mrf.mxu0
      %390 = vmatprep.mubr.f32.mxu0 0.0
      %391 = vmatmul.mubr.f32.gmra.mxu0 %v301
      %v392 = vpop.f32.mrf.mxu0
      %v393 = vadd.f32 %v294, %v392
      %v394 = vpop.f32.mrf.mxu0
      %395 = vmatprep.mubr.f32.mxu0 0.0
      %396 = vmatmul.mubr.f32.gmra.mxu0 %v304
      %v397 = vpop.f32.mrf.mxu0
      %v398 = vadd.f32 %v294, %v397
      %v399 = vpop.f32.mrf.mxu0
      %400 = vmatprep.mubr.f32.mxu0 0.0
      %401 = vmatmul.mubr.f32.gmra.mxu0 %v307
      %v402 = vpop.f32.mrf.mxu0
      %v403 = vadd.f32 %v294, %v402
      %v404 = vpop.f32.mrf.mxu0
      %405 = vmatprep.mubr.f32.mxu0 0.0
      %406 = vmatmul.mubr.f32.gmra.mxu0 %v310
      %v407 = vpop.f32.mrf.mxu0
      %v408 = vadd.f32 %v294, %v407
      %v409 = vpop.f32.mrf.mxu0
      %410 = vmatprep.mubr.f32.mxu0 0.0
      %411 = vmatmul.mubr.f32.gmra.mxu0 %v313
      %v412 = vpop.f32.mrf.mxu0
      %v413 = vadd.f32 %v294, %v412
      %v414 = vpop.f32.mrf.mxu0
      %415 = vmatprep.mubr.f32.mxu0 0.0
      %416 = vmatmul.mubr.f32.gmra.mxu0 %v316
      %v417 = vpop.f32.mrf.mxu0
      %v418 = vadd.f32 %v294, %v417
      %v419 = vpop.f32.mrf.mxu0
      %420 = vmatprep.mubr.f32.mxu0 0.0
      %421 = vmatmul.mubr.f32.gmra.mxu0 %v319
      %v422 = vpop.f32.mrf.mxu0
      %v423 = vadd.f32 %v294, %v422
      %v424 = vpop.f32.mrf.mxu0
      %425 = vdwg.mxu0
      %v426 = vld [vmem:[%s269] sm:$0xff]
      %v427 = vld [vmem:[%s269 + $0x8] sm:$0xff]
      %v428 = vld [vmem:[%s269 + $0x10] sm:$0xff]
      %v429 = vld [vmem:[%s269 + $0x18] sm:$0xff]
      %v430 = vld [vmem:[%s269 + $0x20] sm:$0xff]
      %v431 = vld [vmem:[%s269 + $0x28] sm:$0xff]
      %v432 = vld [vmem:[%s269 + $0x30] sm:$0xff]
      %v433 = vld [vmem:[%s269 + $0x38] sm:$0xff]
      %435 = vrot.lane.b32.xlu0 %v388, 96
      %v436 = vpop.permute.xlu0 %435
      %vm437 = vcmask 64512
      %v438 = vsel %vm437, %v388, 0
      %v440 = vsel %vm437, %v436, 0
      %442 = vmatprep.subr.mxu0 0.0
      %443 = vmatpush1.xpose.msra.mxu0 0.0
      %444 = vmatprep.subr.mxu0 0.0
      %445 = vmatpush1.xpose.msra.mxu0 0.0
      %446 = vmatprep.subr.mxu0 0.0
      %447 = vmatpush1.xpose.msra.mxu0 0.0
      %448 = vmatprep.subr.mxu0 0.0
      %449 = vmatpush1.xpose.msra.mxu0 0.0
      %450 = vmatprep.subr.mxu0 0.0
      %451 = vmatpush1.xpose.msra.mxu0 0.0
      %452 = vmatprep.subr.mxu0 0.0
      %453 = vmatpush1.xpose.msra.mxu0 0.0
      %454 = vmatprep.subr.mxu0 0.0
      %455 = vmatpush1.xpose.msra.mxu0 0.0
      %456 = vmatprep.subr.mxu0 0.0
      %457 = vmatpush1.xpose.msra.mxu0 0.0
      %458 = vmatprep.subr.mxu0 0.0
      %459 = vmatpush1.xpose.msra.mxu0 0.0
      %460 = vmatprep.subr.mxu0 0.0
      %461 = vmatpush1.xpose.msra.mxu0 0.0
      %462 = vmatprep.subr.mxu0 0.0
      %463 = vmatpush1.xpose.msra.mxu0 0.0
      %464 = vmatprep.subr.mxu0 0.0
      %465 = vmatpush1.xpose.msra.mxu0 0.0
      %466 = vmatprep.subr.mxu0 0.0
      %467 = vmatpush1.xpose.msra.mxu0 0.0
      %468 = vmatprep.subr.mxu0 0.0
      %469 = vmatpush1.xpose.msra.mxu0 0.0
      %470 = vmatprep.subr.mxu0 0.0
      %471 = vmatpush1.xpose.msra.mxu0 0.0
      %472 = vmatprep.subr.mxu0 0.0
      %473 = vmatpush1.xpose.msra.mxu0 %v440
      %474 = vmatprep.subr.mxu0 0.0
      %475 = vmatpush2.xpose.msra.mxu0 0.0
      %476 = vmatprep.subr.mxu0 0.0
      %477 = vmatpush2.xpose.msra.mxu0 0.0
      %478 = vmatprep.subr.mxu0 0.0
      %479 = vmatpush2.xpose.msra.mxu0 0.0
      %480 = vmatprep.subr.mxu0 0.0
      %481 = vmatpush2.xpose.msra.mxu0 0.0
      %482 = vmatprep.subr.mxu0 0.0
      %483 = vmatpush2.xpose.msra.mxu0 0.0
      %484 = vmatprep.subr.mxu0 0.0
      %485 = vmatpush2.xpose.msra.mxu0 0.0
      %486 = vmatprep.subr.mxu0 0.0
      %487 = vmatpush2.xpose.msra.mxu0 0.0
      %488 = vmatprep.subr.mxu0 0.0
      %489 = vmatpush2.xpose.msra.mxu0 0.0
      %490 = vmatprep.subr.mxu0 0.0
      %491 = vmatpush2.xpose.msra.mxu0 0.0
      %492 = vmatprep.subr.mxu0 0.0
      %493 = vmatpush2.xpose.msra.mxu0 0.0
      %494 = vmatprep.subr.mxu0 0.0
      %495 = vmatpush2.xpose.msra.mxu0 0.0
      %496 = vmatprep.subr.mxu0 0.0
      %497 = vmatpush2.xpose.msra.mxu0 0.0
      %498 = vmatprep.subr.mxu0 0.0
      %499 = vmatpush2.xpose.msra.mxu0 0.0
      %500 = vmatprep.subr.mxu0 0.0
      %501 = vmatpush2.xpose.msra.mxu0 0.0
      %502 = vmatprep.subr.mxu0 0.0
      %503 = vmatpush2.xpose.msra.mxu0 0.0
      %504 = vmatprep.subr.mxu0 0.0
      %505 = vmatpush2.xpose.msra.mxu0 0.0
      %506 = vmatprep.mubr.f32.mxu0 0.0
      %507 = vmatmul.mubr.f32.gmra.mxu0 %v438
      %v508 = vpop.f32.mrf.mxu0
      %v509 = vadd.f32 0.0, %v508
      %v510 = vpop.f32.mrf.mxu0
      %511 = vdwg.mxu0
      %513 = vrot.lane.b32.xlu0 %v393, 96
      %v514 = vpop.permute.xlu0 %513
      %v515 = vsel %vm437, %v393, 0
      %v517 = vsel %vm437, %v514, 0
      %519 = vmatprep.subr.mxu0 0.0
      %520 = vmatpush1.xpose.msra.mxu0 0.0
      %521 = vmatprep.subr.mxu0 0.0
      %522 = vmatpush1.xpose.msra.mxu0 0.0
      %523 = vmatprep.subr.mxu0 0.0
      %524 = vmatpush1.xpose.msra.mxu0 0.0
      %525 = vmatprep.subr.mxu0 0.0
      %526 = vmatpush1.xpose.msra.mxu0 0.0
      %527 = vmatprep.subr.mxu0 0.0
      %528 = vmatpush1.xpose.msra.mxu0 0.0
      %529 = vmatprep.subr.mxu0 0.0
      %530 = vmatpush1.xpose.msra.mxu0 0.0
      %531 = vmatprep.subr.mxu0 0.0
      %532 = vmatpush1.xpose.msra.mxu0 0.0
      %533 = vmatprep.subr.mxu0 0.0
      %534 = vmatpush1.xpose.msra.mxu0 0.0
      %535 = vmatprep.subr.mxu0 0.0
      %536 = vmatpush1.xpose.msra.mxu0 0.0
      %537 = vmatprep.subr.mxu0 0.0
      %538 = vmatpush1.xpose.msra.mxu0 0.0
      %539 = vmatprep.subr.mxu0 0.0
      %540 = vmatpush1.xpose.msra.mxu0 0.0
      %541 = vmatprep.subr.mxu0 0.0
      %542 = vmatpush1.xpose.msra.mxu0 0.0
      %543 = vmatprep.subr.mxu0 0.0
      %544 = vmatpush1.xpose.msra.mxu0 0.0
      %545 = vmatprep.subr.mxu0 0.0
      %546 = vmatpush1.xpose.msra.mxu0 0.0
      %547 = vmatprep.subr.mxu0 0.0
      %548 = vmatpush1.xpose.msra.mxu0 0.0
      %549 = vmatprep.subr.mxu0 0.0
      %550 = vmatpush1.xpose.msra.mxu0 %v517
      %551 = vmatprep.subr.mxu0 0.0
      %552 = vmatpush2.xpose.msra.mxu0 0.0
      %553 = vmatprep.subr.mxu0 0.0
      %554 = vmatpush2.xpose.msra.mxu0 0.0
      %555 = vmatprep.subr.mxu0 0.0
      %556 = vmatpush2.xpose.msra.mxu0 0.0
      %557 = vmatprep.subr.mxu0 0.0
      %558 = vmatpush2.xpose.msra.mxu0 0.0
      %559 = vmatprep.subr.mxu0 0.0
      %560 = vmatpush2.xpose.msra.mxu0 0.0
      %561 = vmatprep.subr.mxu0 0.0
      %562 = vmatpush2.xpose.msra.mxu0 0.0
      %563 = vmatprep.subr.mxu0 0.0
      %564 = vmatpush2.xpose.msra.mxu0 0.0
      %565 = vmatprep.subr.mxu0 0.0
      %566 = vmatpush2.xpose.msra.mxu0 0.0
      %567 = vmatprep.subr.mxu0 0.0
      %568 = vmatpush2.xpose.msra.mxu0 0.0
      %569 = vmatprep.subr.mxu0 0.0
      %570 = vmatpush2.xpose.msra.mxu0 0.0
      %571 = vmatprep.subr.mxu0 0.0
      %572 = vmatpush2.xpose.msra.mxu0 0.0
      %573 = vmatprep.subr.mxu0 0.0
      %574 = vmatpush2.xpose.msra.mxu0 0.0
      %575 = vmatprep.subr.mxu0 0.0
      %576 = vmatpush2.xpose.msra.mxu0 0.0
      %577 = vmatprep.subr.mxu0 0.0
      %578 = vmatpush2.xpose.msra.mxu0 0.0
      %579 = vmatprep.subr.mxu0 0.0
      %580 = vmatpush2.xpose.msra.mxu0 0.0
      %581 = vmatprep.subr.mxu0 0.0
      %582 = vmatpush2.xpose.msra.mxu0 0.0
      %583 = vmatprep.mubr.f32.mxu0 0.0
      %584 = vmatmul.mubr.f32.gmra.mxu0 %v515
      %v585 = vpop.f32.mrf.mxu0
      %v586 = vadd.f32 0.0, %v585
      %v587 = vpop.f32.mrf.mxu0
      %588 = vdwg.mxu0
      %590 = vrot.lane.b32.xlu0 %v398, 96
      %v591 = vpop.permute.xlu0 %590
      %v592 = vsel %vm437, %v398, 0
      %v594 = vsel %vm437, %v591, 0
      %596 = vmatprep.subr.mxu0 0.0
      %597 = vmatpush1.xpose.msra.mxu0 0.0
      %598 = vmatprep.subr.mxu0 0.0
      %599 = vmatpush1.xpose.msra.mxu0 0.0
      %600 = vmatprep.subr.mxu0 0.0
      %601 = vmatpush1.xpose.msra.mxu0 0.0
      %602 = vmatprep.subr.mxu0 0.0
      %603 = vmatpush1.xpose.msra.mxu0 0.0
      %604 = vmatprep.subr.mxu0 0.0
      %605 = vmatpush1.xpose.msra.mxu0 0.0
      %606 = vmatprep.subr.mxu0 0.0
      %607 = vmatpush1.xpose.msra.mxu0 0.0
      %608 = vmatprep.subr.mxu0 0.0
      %609 = vmatpush1.xpose.msra.mxu0 0.0
      %610 = vmatprep.subr.mxu0 0.0
      %611 = vmatpush1.xpose.msra.mxu0 0.0
      %612 = vmatprep.subr.mxu0 0.0
      %613 = vmatpush1.xpose.msra.mxu0 0.0
      %614 = vmatprep.subr.mxu0 0.0
      %615 = vmatpush1.xpose.msra.mxu0 0.0
      %616 = vmatprep.subr.mxu0 0.0
      %617 = vmatpush1.xpose.msra.mxu0 0.0
      %618 = vmatprep.subr.mxu0 0.0
      %619 = vmatpush1.xpose.msra.mxu0 0.0
      %620 = vmatprep.subr.mxu0 0.0
      %621 = vmatpush1.xpose.msra.mxu0 0.0
      %622 = vmatprep.subr.mxu0 0.0
      %623 = vmatpush1.xpose.msra.mxu0 0.0
      %624 = vmatprep.subr.mxu0 0.0
      %625 = vmatpush1.xpose.msra.mxu0 0.0
      %626 = vmatprep.subr.mxu0 0.0
      %627 = vmatpush1.xpose.msra.mxu0 %v594
      %628 = vmatprep.subr.mxu0 0.0
      %629 = vmatpush2.xpose.msra.mxu0 0.0
      %630 = vmatprep.subr.mxu0 0.0
      %631 = vmatpush2.xpose.msra.mxu0 0.0
      %632 = vmatprep.subr.mxu0 0.0
      %633 = vmatpush2.xpose.msra.mxu0 0.0
      %634 = vmatprep.subr.mxu0 0.0
      %635 = vmatpush2.xpose.msra.mxu0 0.0
      %636 = vmatprep.subr.mxu0 0.0
      %637 = vmatpush2.xpose.msra.mxu0 0.0
      %638 = vmatprep.subr.mxu0 0.0
      %639 = vmatpush2.xpose.msra.mxu0 0.0
      %640 = vmatprep.subr.mxu0 0.0
      %641 = vmatpush2.xpose.msra.mxu0 0.0
      %642 = vmatprep.subr.mxu0 0.0
      %643 = vmatpush2.xpose.msra.mxu0 0.0
      %644 = vmatprep.subr.mxu0 0.0
      %645 = vmatpush2.xpose.msra.mxu0 0.0
      %646 = vmatprep.subr.mxu0 0.0
      %647 = vmatpush2.xpose.msra.mxu0 0.0
      %648 = vmatprep.subr.mxu0 0.0
      %649 = vmatpush2.xpose.msra.mxu0 0.0
      %650 = vmatprep.subr.mxu0 0.0
      %651 = vmatpush2.xpose.msra.mxu0 0.0
      %652 = vmatprep.subr.mxu0 0.0
      %653 = vmatpush2.xpose.msra.mxu0 0.0
      %654 = vmatprep.subr.mxu0 0.0
      %655 = vmatpush2.xpose.msra.mxu0 0.0
      %656 = vmatprep.subr.mxu0 0.0
      %657 = vmatpush2.xpose.msra.mxu0 0.0
      %658 = vmatprep.subr.mxu0 0.0
      %659 = vmatpush2.xpose.msra.mxu0 0.0
      %660 = vmatprep.mubr.f32.mxu0 0.0
      %661 = vmatmul.mubr.f32.gmra.mxu0 %v592
      %v662 = vpop.f32.mrf.mxu0
      %v663 = vadd.f32 0.0, %v662
      %v664 = vpop.f32.mrf.mxu0
      %665 = vdwg.mxu0
      %667 = vrot.lane.b32.xlu0 %v403, 96
      %v668 = vpop.permute.xlu0 %667
      %v669 = vsel %vm437, %v403, 0
      %v671 = vsel %vm437, %v668, 0
      %673 = vmatprep.subr.mxu0 0.0
      %674 = vmatpush1.xpose.msra.mxu0 0.0
      %675 = vmatprep.subr.mxu0 0.0
      %676 = vmatpush1.xpose.msra.mxu0 0.0
      %677 = vmatprep.subr.mxu0 0.0
      %678 = vmatpush1.xpose.msra.mxu0 0.0
      %679 = vmatprep.subr.mxu0 0.0
      %680 = vmatpush1.xpose.msra.mxu0 0.0
      %681 = vmatprep.subr.mxu0 0.0
      %682 = vmatpush1.xpose.msra.mxu0 0.0
      %683 = vmatprep.subr.mxu0 0.0
      %684 = vmatpush1.xpose.msra.mxu0 0.0
      %685 = vmatprep.subr.mxu0 0.0
      %686 = vmatpush1.xpose.msra.mxu0 0.0
      %687 = vmatprep.subr.mxu0 0.0
      %688 = vmatpush1.xpose.msra.mxu0 0.0
      %689 = vmatprep.subr.mxu0 0.0
      %690 = vmatpush1.xpose.msra.mxu0 0.0
      %691 = vmatprep.subr.mxu0 0.0
      %692 = vmatpush1.xpose.msra.mxu0 0.0
      %693 = vmatprep.subr.mxu0 0.0
      %694 = vmatpush1.xpose.msra.mxu0 0.0
      %695 = vmatprep.subr.mxu0 0.0
      %696 = vmatpush1.xpose.msra.mxu0 0.0
      %697 = vmatprep.subr.mxu0 0.0
      %698 = vmatpush1.xpose.msra.mxu0 0.0
      %699 = vmatprep.subr.mxu0 0.0
      %700 = vmatpush1.xpose.msra.mxu0 0.0
      %701 = vmatprep.subr.mxu0 0.0
      %702 = vmatpush1.xpose.msra.mxu0 0.0
      %703 = vmatprep.subr.mxu0 0.0
      %704 = vmatpush1.xpose.msra.mxu0 %v671
      %705 = vmatprep.subr.mxu0 0.0
      %706 = vmatpush2.xpose.msra.mxu0 0.0
      %707 = vmatprep.subr.mxu0 0.0
      %708 = vmatpush2.xpose.msra.mxu0 0.0
      %709 = vmatprep.subr.mxu0 0.0
      %710 = vmatpush2.xpose.msra.mxu0 0.0
      %711 = vmatprep.subr.mxu0 0.0
      %712 = vmatpush2.xpose.msra.mxu0 0.0
      %713 = vmatprep.subr.mxu0 0.0
      %714 = vmatpush2.xpose.msra.mxu0 0.0
      %715 = vmatprep.subr.mxu0 0.0
      %716 = vmatpush2.xpose.msra.mxu0 0.0
      %717 = vmatprep.subr.mxu0 0.0
      %718 = vmatpush2.xpose.msra.mxu0 0.0
      %719 = vmatprep.subr.mxu0 0.0
      %720 = vmatpush2.xpose.msra.mxu0 0.0
      %721 = vmatprep.subr.mxu0 0.0
      %722 = vmatpush2.xpose.msra.mxu0 0.0
      %723 = vmatprep.subr.mxu0 0.0
      %724 = vmatpush2.xpose.msra.mxu0 0.0
      %725 = vmatprep.subr.mxu0 0.0
      %726 = vmatpush2.xpose.msra.mxu0 0.0
      %727 = vmatprep.subr.mxu0 0.0
      %728 = vmatpush2.xpose.msra.mxu0 0.0
      %729 = vmatprep.subr.mxu0 0.0
      %730 = vmatpush2.xpose.msra.mxu0 0.0
      %731 = vmatprep.subr.mxu0 0.0
      %732 = vmatpush2.xpose.msra.mxu0 0.0
      %733 = vmatprep.subr.mxu0 0.0
      %734 = vmatpush2.xpose.msra.mxu0 0.0
      %735 = vmatprep.subr.mxu0 0.0
      %736 = vmatpush2.xpose.msra.mxu0 0.0
      %737 = vmatprep.mubr.f32.mxu0 0.0
      %738 = vmatmul.mubr.f32.gmra.mxu0 %v669
      %v739 = vpop.f32.mrf.mxu0
      %v740 = vadd.f32 0.0, %v739
      %v741 = vpop.f32.mrf.mxu0
      %742 = vdwg.mxu0
      %744 = vrot.lane.b32.xlu0 %v408, 96
      %v745 = vpop.permute.xlu0 %744
      %v746 = vsel %vm437, %v408, 0
      %v748 = vsel %vm437, %v745, 0
      %750 = vmatprep.subr.mxu0 0.0
      %751 = vmatpush1.xpose.msra.mxu0 0.0
      %752 = vmatprep.subr.mxu0 0.0
      %753 = vmatpush1.xpose.msra.mxu0 0.0
      %754 = vmatprep.subr.mxu0 0.0
      %755 = vmatpush1.xpose.msra.mxu0 0.0
      %756 = vmatprep.subr.mxu0 0.0
      %757 = vmatpush1.xpose.msra.mxu0 0.0
      %758 = vmatprep.subr.mxu0 0.0
      %759 = vmatpush1.xpose.msra.mxu0 0.0
      %760 = vmatprep.subr.mxu0 0.0
      %761 = vmatpush1.xpose.msra.mxu0 0.0
      %762 = vmatprep.subr.mxu0 0.0
      %763 = vmatpush1.xpose.msra.mxu0 0.0
      %764 = vmatprep.subr.mxu0 0.0
      %765 = vmatpush1.xpose.msra.mxu0 0.0
      %766 = vmatprep.subr.mxu0 0.0
      %767 = vmatpush1.xpose.msra.mxu0 0.0
      %768 = vmatprep.subr.mxu0 0.0
      %769 = vmatpush1.xpose.msra.mxu0 0.0
      %770 = vmatprep.subr.mxu0 0.0
      %771 = vmatpush1.xpose.msra.mxu0 0.0
      %772 = vmatprep.subr.mxu0 0.0
      %773 = vmatpush1.xpose.msra.mxu0 0.0
      %774 = vmatprep.subr.mxu0 0.0
      %775 = vmatpush1.xpose.msra.mxu0 0.0
      %776 = vmatprep.subr.mxu0 0.0
      %777 = vmatpush1.xpose.msra.mxu0 0.0
      %778 = vmatprep.subr.mxu0 0.0
      %779 = vmatpush1.xpose.msra.mxu0 0.0
      %780 = vmatprep.subr.mxu0 0.0
      %781 = vmatpush1.xpose.msra.mxu0 %v748
      %782 = vmatprep.subr.mxu0 0.0
      %783 = vmatpush2.xpose.msra.mxu0 0.0
      %784 = vmatprep.subr.mxu0 0.0
      %785 = vmatpush2.xpose.msra.mxu0 0.0
      %786 = vmatprep.subr.mxu0 0.0
      %787 = vmatpush2.xpose.msra.mxu0 0.0
      %788 = vmatprep.subr.mxu0 0.0
      %789 = vmatpush2.xpose.msra.mxu0 0.0
      %790 = vmatprep.subr.mxu0 0.0
      %791 = vmatpush2.xpose.msra.mxu0 0.0
      %792 = vmatprep.subr.mxu0 0.0
      %793 = vmatpush2.xpose.msra.mxu0 0.0
      %794 = vmatprep.subr.mxu0 0.0
      %795 = vmatpush2.xpose.msra.mxu0 0.0
      %796 = vmatprep.subr.mxu0 0.0
      %797 = vmatpush2.xpose.msra.mxu0 0.0
      %798 = vmatprep.subr.mxu0 0.0
      %799 = vmatpush2.xpose.msra.mxu0 0.0
      %800 = vmatprep.subr.mxu0 0.0
      %801 = vmatpush2.xpose.msra.mxu0 0.0
      %802 = vmatprep.subr.mxu0 0.0
      %803 = vmatpush2.xpose.msra.mxu0 0.0
      %804 = vmatprep.subr.mxu0 0.0
      %805 = vmatpush2.xpose.msra.mxu0 0.0
      %806 = vmatprep.subr.mxu0 0.0
      %807 = vmatpush2.xpose.msra.mxu0 0.0
      %808 = vmatprep.subr.mxu0 0.0
      %809 = vmatpush2.xpose.msra.mxu0 0.0
      %810 = vmatprep.subr.mxu0 0.0
      %811 = vmatpush2.xpose.msra.mxu0 0.0
      %812 = vmatprep.subr.mxu0 0.0
      %813 = vmatpush2.xpose.msra.mxu0 0.0
      %814 = vmatprep.mubr.f32.mxu0 0.0
      %815 = vmatmul.mubr.f32.gmra.mxu0 %v746
      %v816 = vpop.f32.mrf.mxu0
      %v817 = vadd.f32 0.0, %v816
      %v818 = vpop.f32.mrf.mxu0
      %819 = vdwg.mxu0
      %821 = vrot.lane.b32.xlu0 %v413, 96
      %v822 = vpop.permute.xlu0 %821
      %v823 = vsel %vm437, %v413, 0
      %v825 = vsel %vm437, %v822, 0
      %827 = vmatprep.subr.mxu0 0.0
      %828 = vmatpush1.xpose.msra.mxu0 0.0
      %829 = vmatprep.subr.mxu0 0.0
      %830 = vmatpush1.xpose.msra.mxu0 0.0
      %831 = vmatprep.subr.mxu0 0.0
      %832 = vmatpush1.xpose.msra.mxu0 0.0
      %833 = vmatprep.subr.mxu0 0.0
      %834 = vmatpush1.xpose.msra.mxu0 0.0
      %835 = vmatprep.subr.mxu0 0.0
      %836 = vmatpush1.xpose.msra.mxu0 0.0
      %837 = vmatprep.subr.mxu0 0.0
      %838 = vmatpush1.xpose.msra.mxu0 0.0
      %839 = vmatprep.subr.mxu0 0.0
      %840 = vmatpush1.xpose.msra.mxu0 0.0
      %841 = vmatprep.subr.mxu0 0.0
      %842 = vmatpush1.xpose.msra.mxu0 0.0
      %843 = vmatprep.subr.mxu0 0.0
      %844 = vmatpush1.xpose.msra.mxu0 0.0
      %845 = vmatprep.subr.mxu0 0.0
      %846 = vmatpush1.xpose.msra.mxu0 0.0
      %847 = vmatprep.subr.mxu0 0.0
      %848 = vmatpush1.xpose.msra.mxu0 0.0
      %849 = vmatprep.subr.mxu0 0.0
      %850 = vmatpush1.xpose.msra.mxu0 0.0
      %851 = vmatprep.subr.mxu0 0.0
      %852 = vmatpush1.xpose.msra.mxu0 0.0
      %853 = vmatprep.subr.mxu0 0.0
      %854 = vmatpush1.xpose.msra.mxu0 0.0
      %855 = vmatprep.subr.mxu0 0.0
      %856 = vmatpush1.xpose.msra.mxu0 0.0
      %857 = vmatprep.subr.mxu0 0.0
      %858 = vmatpush1.xpose.msra.mxu0 %v825
      %859 = vmatprep.subr.mxu0 0.0
      %860 = vmatpush2.xpose.msra.mxu0 0.0
      %861 = vmatprep.subr.mxu0 0.0
      %862 = vmatpush2.xpose.msra.mxu0 0.0
      %863 = vmatprep.subr.mxu0 0.0
      %864 = vmatpush2.xpose.msra.mxu0 0.0
      %865 = vmatprep.subr.mxu0 0.0
      %866 = vmatpush2.xpose.msra.mxu0 0.0
      %867 = vmatprep.subr.mxu0 0.0
      %868 = vmatpush2.xpose.msra.mxu0 0.0
      %869 = vmatprep.subr.mxu0 0.0
      %870 = vmatpush2.xpose.msra.mxu0 0.0
      %871 = vmatprep.subr.mxu0 0.0
      %872 = vmatpush2.xpose.msra.mxu0 0.0
      %873 = vmatprep.subr.mxu0 0.0
      %874 = vmatpush2.xpose.msra.mxu0 0.0
      %875 = vmatprep.subr.mxu0 0.0
      %876 = vmatpush2.xpose.msra.mxu0 0.0
      %877 = vmatprep.subr.mxu0 0.0
      %878 = vmatpush2.xpose.msra.mxu0 0.0
      %879 = vmatprep.subr.mxu0 0.0
      %880 = vmatpush2.xpose.msra.mxu0 0.0
      %881 = vmatprep.subr.mxu0 0.0
      %882 = vmatpush2.xpose.msra.mxu0 0.0
      %883 = vmatprep.subr.mxu0 0.0
      %884 = vmatpush2.xpose.msra.mxu0 0.0
      %885 = vmatprep.subr.mxu0 0.0
      %886 = vmatpush2.xpose.msra.mxu0 0.0
      %887 = vmatprep.subr.mxu0 0.0
      %888 = vmatpush2.xpose.msra.mxu0 0.0
      %889 = vmatprep.subr.mxu0 0.0
      %890 = vmatpush2.xpose.msra.mxu0 0.0
      %891 = vmatprep.mubr.f32.mxu0 0.0
      %892 = vmatmul.mubr.f32.gmra.mxu0 %v823
      %v893 = vpop.f32.mrf.mxu0
      %v894 = vadd.f32 0.0, %v893
      %v895 = vpop.f32.mrf.mxu0
      %896 = vdwg.mxu0
      %898 = vrot.lane.b32.xlu0 %v418, 96
      %v899 = vpop.permute.xlu0 %898
      %v900 = vsel %vm437, %v418, 0
      %v902 = vsel %vm437, %v899, 0
      %904 = vmatprep.subr.mxu0 0.0
      %905 = vmatpush1.xpose.msra.mxu0 0.0
      %906 = vmatprep.subr.mxu0 0.0
      %907 = vmatpush1.xpose.msra.mxu0 0.0
      %908 = vmatprep.subr.mxu0 0.0
      %909 = vmatpush1.xpose.msra.mxu0 0.0
      %910 = vmatprep.subr.mxu0 0.0
      %911 = vmatpush1.xpose.msra.mxu0 0.0
      %912 = vmatprep.subr.mxu0 0.0
      %913 = vmatpush1.xpose.msra.mxu0 0.0
      %914 = vmatprep.subr.mxu0 0.0
      %915 = vmatpush1.xpose.msra.mxu0 0.0
      %916 = vmatprep.subr.mxu0 0.0
      %917 = vmatpush1.xpose.msra.mxu0 0.0
      %918 = vmatprep.subr.mxu0 0.0
      %919 = vmatpush1.xpose.msra.mxu0 0.0
      %920 = vmatprep.subr.mxu0 0.0
      %921 = vmatpush1.xpose.msra.mxu0 0.0
      %922 = vmatprep.subr.mxu0 0.0
      %923 = vmatpush1.xpose.msra.mxu0 0.0
      %924 = vmatprep.subr.mxu0 0.0
      %925 = vmatpush1.xpose.msra.mxu0 0.0
      %926 = vmatprep.subr.mxu0 0.0
      %927 = vmatpush1.xpose.msra.mxu0 0.0
      %928 = vmatprep.subr.mxu0 0.0
      %929 = vmatpush1.xpose.msra.mxu0 0.0
      %930 = vmatprep.subr.mxu0 0.0
      %931 = vmatpush1.xpose.msra.mxu0 0.0
      %932 = vmatprep.subr.mxu0 0.0
      %933 = vmatpush1.xpose.msra.mxu0 0.0
      %934 = vmatprep.subr.mxu0 0.0
      %935 = vmatpush1.xpose.msra.mxu0 %v902
      %936 = vmatprep.subr.mxu0 0.0
      %937 = vmatpush2.xpose.msra.mxu0 0.0
      %938 = vmatprep.subr.mxu0 0.0
      %939 = vmatpush2.xpose.msra.mxu0 0.0
      %940 = vmatprep.subr.mxu0 0.0
      %941 = vmatpush2.xpose.msra.mxu0 0.0
      %942 = vmatprep.subr.mxu0 0.0
      %943 = vmatpush2.xpose.msra.mxu0 0.0
      %944 = vmatprep.subr.mxu0 0.0
      %945 = vmatpush2.xpose.msra.mxu0 0.0
      %946 = vmatprep.subr.mxu0 0.0
      %947 = vmatpush2.xpose.msra.mxu0 0.0
      %948 = vmatprep.subr.mxu0 0.0
      %949 = vmatpush2.xpose.msra.mxu0 0.0
      %950 = vmatprep.subr.mxu0 0.0
      %951 = vmatpush2.xpose.msra.mxu0 0.0
      %952 = vmatprep.subr.mxu0 0.0
      %953 = vmatpush2.xpose.msra.mxu0 0.0
      %954 = vmatprep.subr.mxu0 0.0
      %955 = vmatpush2.xpose.msra.mxu0 0.0
      %956 = vmatprep.subr.mxu0 0.0
      %957 = vmatpush2.xpose.msra.mxu0 0.0
      %958 = vmatprep.subr.mxu0 0.0
      %959 = vmatpush2.xpose.msra.mxu0 0.0
      %960 = vmatprep.subr.mxu0 0.0
      %961 = vmatpush2.xpose.msra.mxu0 0.0
      %962 = vmatprep.subr.mxu0 0.0
      %963 = vmatpush2.xpose.msra.mxu0 0.0
      %964 = vmatprep.subr.mxu0 0.0
      %965 = vmatpush2.xpose.msra.mxu0 0.0
      %966 = vmatprep.subr.mxu0 0.0
      %967 = vmatpush2.xpose.msra.mxu0 0.0
      %968 = vmatprep.mubr.f32.mxu0 0.0
      %969 = vmatmul.mubr.f32.gmra.mxu0 %v900
      %v970 = vpop.f32.mrf.mxu0
      %v971 = vadd.f32 0.0, %v970
      %v972 = vpop.f32.mrf.mxu0
      %973 = vdwg.mxu0
      %975 = vrot.lane.b32.xlu0 %v423, 96
      %v976 = vpop.permute.xlu0 %975
      %v977 = vsel %vm437, %v423, 0
      %v979 = vsel %vm437, %v976, 0
      %981 = vmatprep.subr.mxu0 0.0
      %982 = vmatpush1.xpose.msra.mxu0 0.0
      %983 = vmatprep.subr.mxu0 0.0
      %984 = vmatpush1.xpose.msra.mxu0 0.0
      %985 = vmatprep.subr.mxu0 0.0
      %986 = vmatpush1.xpose.msra.mxu0 0.0
      %987 = vmatprep.subr.mxu0 0.0
      %988 = vmatpush1.xpose.msra.mxu0 0.0
      %989 = vmatprep.subr.mxu0 0.0
      %990 = vmatpush1.xpose.msra.mxu0 0.0
      %991 = vmatprep.subr.mxu0 0.0
      %992 = vmatpush1.xpose.msra.mxu0 0.0
      %993 = vmatprep.subr.mxu0 0.0
      %994 = vmatpush1.xpose.msra.mxu0 0.0
      %995 = vmatprep.subr.mxu0 0.0
      %996 = vmatpush1.xpose.msra.mxu0 0.0
      %997 = vmatprep.subr.mxu0 0.0
      %998 = vmatpush1.xpose.msra.mxu0 0.0
      %999 = vmatprep.subr.mxu0 0.0
      %1000 = vmatpush1.xpose.msra.mxu0 0.0
      %1001 = vmatprep.subr.mxu0 0.0
      %1002 = vmatpush1.xpose.msra.mxu0 0.0
      %1003 = vmatprep.subr.mxu0 0.0
      %1004 = vmatpush1.xpose.msra.mxu0 0.0
      %1005 = vmatprep.subr.mxu0 0.0
      %1006 = vmatpush1.xpose.msra.mxu0 0.0
      %1007 = vmatprep.subr.mxu0 0.0
      %1008 = vmatpush1.xpose.msra.mxu0 0.0
      %1009 = vmatprep.subr.mxu0 0.0
      %1010 = vmatpush1.xpose.msra.mxu0 0.0
      %1011 = vmatprep.subr.mxu0 0.0
      %1012 = vmatpush1.xpose.msra.mxu0 %v979
      %1013 = vmatprep.subr.mxu0 0.0
      %1014 = vmatpush2.xpose.msra.mxu0 0.0
      %1015 = vmatprep.subr.mxu0 0.0
      %1016 = vmatpush2.xpose.msra.mxu0 0.0
      %1017 = vmatprep.subr.mxu0 0.0
      %1018 = vmatpush2.xpose.msra.mxu0 0.0
      %1019 = vmatprep.subr.mxu0 0.0
      %1020 = vmatpush2.xpose.msra.mxu0 0.0
      %1021 = vmatprep.subr.mxu0 0.0
      %1022 = vmatpush2.xpose.msra.mxu0 0.0
      %1023 = vmatprep.subr.mxu0 0.0
      %1024 = vmatpush2.xpose.msra.mxu0 0.0
      %1025 = vmatprep.subr.mxu0 0.0
      %1026 = vmatpush2.xpose.msra.mxu0 0.0
      %1027 = vmatprep.subr.mxu0 0.0
      %1028 = vmatpush2.xpose.msra.mxu0 0.0
      %1029 = vmatprep.subr.mxu0 0.0
      %1030 = vmatpush2.xpose.msra.mxu0 0.0
      %1031 = vmatprep.subr.mxu0 0.0
      %1032 = vmatpush2.xpose.msra.mxu0 0.0
      %1033 = vmatprep.subr.mxu0 0.0
      %1034 = vmatpush2.xpose.msra.mxu0 0.0
      %1035 = vmatprep.subr.mxu0 0.0
      %1036 = vmatpush2.xpose.msra.mxu0 0.0
      %1037 = vmatprep.subr.mxu0 0.0
      %1038 = vmatpush2.xpose.msra.mxu0 0.0
      %1039 = vmatprep.subr.mxu0 0.0
      %1040 = vmatpush2.xpose.msra.mxu0 0.0
      %1041 = vmatprep.subr.mxu0 0.0
      %1042 = vmatpush2.xpose.msra.mxu0 0.0
      %1043 = vmatprep.subr.mxu0 0.0
      %1044 = vmatpush2.xpose.msra.mxu0 0.0
      %1045 = vmatprep.mubr.f32.mxu0 0.0
      %1046 = vmatmul.mubr.f32.gmra.mxu0 %v977
      %v1047 = vpop.f32.mrf.mxu0
      %v1048 = vadd.f32 0.0, %v1047
      %v1049 = vpop.f32.mrf.mxu0
      %1050 = vdwg.mxu0
      %v1051 = vmul.f32 %v509, 0.35355338
      %v1052 = vmul.f32 %v586, 0.35355338
      %v1053 = vmul.f32 %v663, 0.35355338
      %v1054 = vmul.f32 %v740, 0.35355338
      %v1055 = vmul.f32 %v817, 0.35355338
      %v1056 = vmul.f32 %v894, 0.35355338
      %v1057 = vmul.f32 %v971, 0.35355338
      %v1058 = vmul.f32 %v1048, 0.35355338
      %v1059 = vadd.f32 %v1051, %v426
      %v1060 = vadd.f32 %v1052, %v427
      %v1061 = vadd.f32 %v1053, %v428
      %v1062 = vadd.f32 %v1054, %v429
      %v1063 = vadd.f32 %v1055, %v430
      %v1064 = vadd.f32 %v1056, %v431
      %v1065 = vadd.f32 %v1057, %v432
      %v1066 = vadd.f32 %v1058, %v433
      %v1067 = vsel %vm437, %v1059, -inf
      %1068 = vmax.xlane.f32.xlu0 %v1067
      %v1069 = vpop.xlane.xlu0 %1068
      %v1070 = vsel %vm437, %v1060, -inf
      %1071 = vmax.xlane.f32.xlu0 %v1070
      %v1072 = vpop.xlane.xlu0 %1071
      %v1073 = vsel %vm437, %v1061, -inf
      %1074 = vmax.xlane.f32.xlu0 %v1073
      %v1075 = vpop.xlane.xlu0 %1074
      %v1076 = vsel %vm437, %v1062, -inf
      %1077 = vmax.xlane.f32.xlu0 %v1076
      %v1078 = vpop.xlane.xlu0 %1077
      %v1079 = vsel %vm437, %v1063, -inf
      %1080 = vmax.xlane.f32.xlu0 %v1079
      %v1081 = vpop.xlane.xlu0 %1080
      %v1082 = vsel %vm437, %v1064, -inf
      %1083 = vmax.xlane.f32.xlu0 %v1082
      %v1084 = vpop.xlane.xlu0 %1083
      %v1085 = vsel %vm437, %v1065, -inf
      %1086 = vmax.xlane.f32.xlu0 %v1085
      %v1087 = vpop.xlane.xlu0 %1086
      %v1088 = vsel %vm437, %v1066, -inf
      %1089 = vmax.xlane.f32.xlu0 %v1088
      %v1090 = vpop.xlane.xlu0 %1089
      %v1091 = vsub.f32 %v1059, %v1069
      %v1092 = vsub.f32 %v1060, %v1072
      %v1093 = vsub.f32 %v1061, %v1075
      %v1094 = vsub.f32 %v1062, %v1078
      %v1095 = vsub.f32 %v1063, %v1081
      %v1096 = vsub.f32 %v1064, %v1084
      %v1097 = vsub.f32 %v1065, %v1087
      %v1098 = vsub.f32 %v1066, %v1090
      %v1099 = vmul.f32 %v1091, 1.442695
      %v1100 = vpow.pop %v1099
      %v1101 = vmul.f32 %v1092, 1.442695
      %v1102 = vpow.pop %v1101
      %v1103 = vmul.f32 %v1093, 1.442695
      %v1104 = vpow.pop %v1103
      %v1105 = vmul.f32 %v1094, 1.442695
      %v1106 = vpow.pop %v1105
      %v1107 = vmul.f32 %v1095, 1.442695
      %v1108 = vpow.pop %v1107
      %v1109 = vmul.f32 %v1096, 1.442695
      %v1110 = vpow.pop %v1109
      %v1111 = vmul.f32 %v1097, 1.442695
      %v1112 = vpow.pop %v1111
      %v1113 = vmul.f32 %v1098, 1.442695
      %v1114 = vpow.pop %v1113
      %v1115 = vsel %vm437, %v1100, 0.0
      %1116 = vadd.xlane.f32.xlu0 %v1115
      %v1117 = vpop.xlane.xlu0 %1116
      %v1118 = vsel %vm437, %v1102, 0.0
      %1119 = vadd.xlane.f32.xlu0 %v1118
      %v1120 = vpop.xlane.xlu0 %1119
      %v1121 = vsel %vm437, %v1104, 0.0
      %1122 = vadd.xlane.f32.xlu0 %v1121
      %v1123 = vpop.xlane.xlu0 %1122
      %v1124 = vsel %vm437, %v1106, 0.0
      %1125 = vadd.xlane.f32.xlu0 %v1124
      %v1126 = vpop.xlane.xlu0 %1125
      %v1127 = vsel %vm437, %v1108, 0.0
      %1128 = vadd.xlane.f32.xlu0 %v1127
      %v1129 = vpop.xlane.xlu0 %1128
      %v1130 = vsel %vm437, %v1110, 0.0
      %1131 = vadd.xlane.f32.xlu0 %v1130
      %v1132 = vpop.xlane.xlu0 %1131
      %v1133 = vsel %vm437, %v1112, 0.0
      %1134 = vadd.xlane.f32.xlu0 %v1133
      %v1135 = vpop.xlane.xlu0 %1134
      %v1136 = vsel %vm437, %v1114, 0.0
      %1137 = vadd.xlane.f32.xlu0 %v1136
      %v1138 = vpop.xlane.xlu0 %1137
      %v1139 = vrcp.pop %v1117
      %v1140 = vrcp.pop %v1120
      %v1141 = vrcp.pop %v1123
      %v1142 = vrcp.pop %v1126
      %v1143 = vrcp.pop %v1129
      %v1144 = vrcp.pop %v1132
      %v1145 = vrcp.pop %v1135
      %v1146 = vrcp.pop %v1138
      %v1147 = vmul.f32 %v1100, %v1139
      %v1148 = vmul.f32 %v1102, %v1140
      %v1149 = vmul.f32 %v1104, %v1141
      %v1150 = vmul.f32 %v1106, %v1142
      %v1151 = vmul.f32 %v1108, %v1143
      %v1152 = vmul.f32 %v1110, %v1144
      %v1153 = vmul.f32 %v1112, %v1145
      %v1154 = vmul.f32 %v1114, %v1146
      %1155 = vrot.lane.b32.xlu0 %v388, 64
      %v1156 = vpop.permute.xlu0 %1155
      %v1159 = vsel %vm437, %v1147, 0
      %1161 = vmatprep.subr.mxu0 0.0
      %1162 = vmatpush1.msra.mxu0 0.0
      %1163 = vmatprep.subr.mxu0 0.0
      %1164 = vmatpush1.msra.mxu0 0.0
      %1165 = vmatprep.subr.mxu0 0.0
      %1166 = vmatpush1.msra.mxu0 0.0
      %1167 = vmatprep.subr.mxu0 0.0
      %1168 = vmatpush1.msra.mxu0 0.0
      %1169 = vmatprep.subr.mxu0 0.0
      %1170 = vmatpush1.msra.mxu0 0.0
      %1171 = vmatprep.subr.mxu0 0.0
      %1172 = vmatpush1.msra.mxu0 0.0
      %1173 = vmatprep.subr.mxu0 0.0
      %1174 = vmatpush1.msra.mxu0 0.0
      %1175 = vmatprep.subr.mxu0 0.0
      %1176 = vmatpush1.msra.mxu0 0.0
      %1177 = vmatprep.subr.mxu0 0.0
      %1178 = vmatpush1.msra.mxu0 0.0
      %1179 = vmatprep.subr.mxu0 0.0
      %1180 = vmatpush1.msra.mxu0 0.0
      %1181 = vmatprep.subr.mxu0 0.0
      %1182 = vmatpush1.msra.mxu0 0.0
      %1183 = vmatprep.subr.mxu0 0.0
      %1184 = vmatpush1.msra.mxu0 0.0
      %1185 = vmatprep.subr.mxu0 0.0
      %1186 = vmatpush1.msra.mxu0 0.0
      %1187 = vmatprep.subr.mxu0 0.0
      %1188 = vmatpush1.msra.mxu0 0.0
      %1189 = vmatprep.subr.mxu0 0.0
      %1190 = vmatpush1.msra.mxu0 0.0
      %1191 = vmatprep.subr.mxu0 0.0
      %1192 = vmatpush1.msra.mxu0 %v1156
      %1193 = vmatprep.subr.mxu0 0.0
      %1194 = vmatpush2.msra.mxu0 0.0
      %1195 = vmatprep.subr.mxu0 0.0
      %1196 = vmatpush2.msra.mxu0 0.0
      %1197 = vmatprep.subr.mxu0 0.0
      %1198 = vmatpush2.msra.mxu0 0.0
      %1199 = vmatprep.subr.mxu0 0.0
      %1200 = vmatpush2.msra.mxu0 0.0
      %1201 = vmatprep.subr.mxu0 0.0
      %1202 = vmatpush2.msra.mxu0 0.0
      %1203 = vmatprep.subr.mxu0 0.0
      %1204 = vmatpush2.msra.mxu0 0.0
      %1205 = vmatprep.subr.mxu0 0.0
      %1206 = vmatpush2.msra.mxu0 0.0
      %1207 = vmatprep.subr.mxu0 0.0
      %1208 = vmatpush2.msra.mxu0 0.0
      %1209 = vmatprep.subr.mxu0 0.0
      %1210 = vmatpush2.msra.mxu0 0.0
      %1211 = vmatprep.subr.mxu0 0.0
      %1212 = vmatpush2.msra.mxu0 0.0
      %1213 = vmatprep.subr.mxu0 0.0
      %1214 = vmatpush2.msra.mxu0 0.0
      %1215 = vmatprep.subr.mxu0 0.0
      %1216 = vmatpush2.msra.mxu0 0.0
      %1217 = vmatprep.subr.mxu0 0.0
      %1218 = vmatpush2.msra.mxu0 0.0
      %1219 = vmatprep.subr.mxu0 0.0
      %1220 = vmatpush2.msra.mxu0 0.0
      %1221 = vmatprep.subr.mxu0 0.0
      %1222 = vmatpush2.msra.mxu0 0.0
      %1223 = vmatprep.subr.mxu0 0.0
      %1224 = vmatpush2.msra.mxu0 0.0
      %1225 = vmatprep.mubr.f32.mxu0 0.0
      %1226 = vmatmul.mubr.f32.gmra.mxu0 %v1159
      %v1227 = vpop.f32.mrf.mxu0
      %v1228 = vadd.f32 0.0, %v1227
      %v1229 = vpop.f32.mrf.mxu0
      %1230 = vdwg.mxu0
      %1231 = vrot.lane.b32.xlu0 %v393, 64
      %v1232 = vpop.permute.xlu0 %1231
      %v1235 = vsel %vm437, %v1148, 0
      %1237 = vmatprep.subr.mxu0 0.0
      %1238 = vmatpush1.msra.mxu0 0.0
      %1239 = vmatprep.subr.mxu0 0.0
      %1240 = vmatpush1.msra.mxu0 0.0
      %1241 = vmatprep.subr.mxu0 0.0
      %1242 = vmatpush1.msra.mxu0 0.0
      %1243 = vmatprep.subr.mxu0 0.0
      %1244 = vmatpush1.msra.mxu0 0.0
      %1245 = vmatprep.subr.mxu0 0.0
      %1246 = vmatpush1.msra.mxu0 0.0
      %1247 = vmatprep.subr.mxu0 0.0
      %1248 = vmatpush1.msra.mxu0 0.0
      %1249 = vmatprep.subr.mxu0 0.0
      %1250 = vmatpush1.msra.mxu0 0.0
      %1251 = vmatprep.subr.mxu0 0.0
      %1252 = vmatpush1.msra.mxu0 0.0
      %1253 = vmatprep.subr.mxu0 0.0
      %1254 = vmatpush1.msra.mxu0 0.0
      %1255 = vmatprep.subr.mxu0 0.0
      %1256 = vmatpush1.msra.mxu0 0.0
      %1257 = vmatprep.subr.mxu0 0.0
      %1258 = vmatpush1.msra.mxu0 0.0
      %1259 = vmatprep.subr.mxu0 0.0
      %1260 = vmatpush1.msra.mxu0 0.0
      %1261 = vmatprep.subr.mxu0 0.0
      %1262 = vmatpush1.msra.mxu0 0.0
      %1263 = vmatprep.subr.mxu0 0.0
      %1264 = vmatpush1.msra.mxu0 0.0
      %1265 = vmatprep.subr.mxu0 0.0
      %1266 = vmatpush1.msra.mxu0 0.0
      %1267 = vmatprep.subr.mxu0 0.0
      %1268 = vmatpush1.msra.mxu0 %v1232
      %1269 = vmatprep.subr.mxu0 0.0
      %1270 = vmatpush2.msra.mxu0 0.0
      %1271 = vmatprep.subr.mxu0 0.0
      %1272 = vmatpush2.msra.mxu0 0.0
      %1273 = vmatprep.subr.mxu0 0.0
      %1274 = vmatpush2.msra.mxu0 0.0
      %1275 = vmatprep.subr.mxu0 0.0
      %1276 = vmatpush2.msra.mxu0 0.0
      %1277 = vmatprep.subr.mxu0 0.0
      %1278 = vmatpush2.msra.mxu0 0.0
      %1279 = vmatprep.subr.mxu0 0.0
      %1280 = vmatpush2.msra.mxu0 0.0
      %1281 = vmatprep.subr.mxu0 0.0
      %1282 = vmatpush2.msra.mxu0 0.0
      %1283 = vmatprep.subr.mxu0 0.0
      %1284 = vmatpush2.msra.mxu0 0.0
      %1285 = vmatprep.subr.mxu0 0.0
      %1286 = vmatpush2.msra.mxu0 0.0
      %1287 = vmatprep.subr.mxu0 0.0
      %1288 = vmatpush2.msra.mxu0 0.0
      %1289 = vmatprep.subr.mxu0 0.0
      %1290 = vmatpush2.msra.mxu0 0.0
      %1291 = vmatprep.subr.mxu0 0.0
      %1292 = vmatpush2.msra.mxu0 0.0
      %1293 = vmatprep.subr.mxu0 0.0
      %1294 = vmatpush2.msra.mxu0 0.0
      %1295 = vmatprep.subr.mxu0 0.0
      %1296 = vmatpush2.msra.mxu0 0.0
      %1297 = vmatprep.subr.mxu0 0.0
      %1298 = vmatpush2.msra.mxu0 0.0
      %1299 = vmatprep.subr.mxu0 0.0
      %1300 = vmatpush2.msra.mxu0 0.0
      %1301 = vmatprep.mubr.f32.mxu0 0.0
      %1302 = vmatmul.mubr.f32.gmra.mxu0 %v1235
      %v1303 = vpop.f32.mrf.mxu0
      %v1304 = vadd.f32 0.0, %v1303
      %v1305 = vpop.f32.mrf.mxu0
      %1306 = vdwg.mxu0
      %1307 = vrot.lane.b32.xlu0 %v398, 64
      %v1308 = vpop.permute.xlu0 %1307
      %v1311 = vsel %vm437, %v1149, 0
      %1313 = vmatprep.subr.mxu0 0.0
      %1314 = vmatpush1.msra.mxu0 0.0
      %1315 = vmatprep.subr.mxu0 0.0
      %1316 = vmatpush1.msra.mxu0 0.0
      %1317 = vmatprep.subr.mxu0 0.0
      %1318 = vmatpush1.msra.mxu0 0.0
      %1319 = vmatprep.subr.mxu0 0.0
      %1320 = vmatpush1.msra.mxu0 0.0
      %1321 = vmatprep.subr.mxu0 0.0
      %1322 = vmatpush1.msra.mxu0 0.0
      %1323 = vmatprep.subr.mxu0 0.0
      %1324 = vmatpush1.msra.mxu0 0.0
      %1325 = vmatprep.subr.mxu0 0.0
      %1326 = vmatpush1.msra.mxu0 0.0
      %1327 = vmatprep.subr.mxu0 0.0
      %1328 = vmatpush1.msra.mxu0 0.0
      %1329 = vmatprep.subr.mxu0 0.0
      %1330 = vmatpush1.msra.mxu0 0.0
      %1331 = vmatprep.subr.mxu0 0.0
      %1332 = vmatpush1.msra.mxu0 0.0
      %1333 = vmatprep.subr.mxu0 0.0
      %1334 = vmatpush1.msra.mxu0 0.0
      %1335 = vmatprep.subr.mxu0 0.0
      %1336 = vmatpush1.msra.mxu0 0.0
      %1337 = vmatprep.subr.mxu0 0.0
      %1338 = vmatpush1.msra.mxu0 0.0
      %1339 = vmatprep.subr.mxu0 0.0
      %1340 = vmatpush1.msra.mxu0 0.0
      %1341 = vmatprep.subr.mxu0 0.0
      %1342 = vmatpush1.msra.mxu0 0.0
      %1343 = vmatprep.subr.mxu0 0.0
      %1344 = vmatpush1.msra.mxu0 %v1308
      %1345 = vmatprep.subr.mxu0 0.0
      %1346 = vmatpush2.msra.mxu0 0.0
      %1347 = vmatprep.subr.mxu0 0.0
      %1348 = vmatpush2.msra.mxu0 0.0
      %1349 = vmatprep.subr.mxu0 0.0
      %1350 = vmatpush2.msra.mxu0 0.0
      %1351 = vmatprep.subr.mxu0 0.0
      %1352 = vmatpush2.msra.mxu0 0.0
      %1353 = vmatprep.subr.mxu0 0.0
      %1354 = vmatpush2.msra.mxu0 0.0
      %1355 = vmatprep.subr.mxu0 0.0
      %1356 = vmatpush2.msra.mxu0 0.0
      %1357 = vmatprep.subr.mxu0 0.0
      %1358 = vmatpush2.msra.mxu0 0.0
      %1359 = vmatprep.subr.mxu0 0.0
      %1360 = vmatpush2.msra.mxu0 0.0
      %1361 = vmatprep.subr.mxu0 0.0
      %1362 = vmatpush2.msra.mxu0 0.0
      %1363 = vmatprep.subr.mxu0 0.0
      %1364 = vmatpush2.msra.mxu0 0.0
      %1365 = vmatprep.subr.mxu0 0.0
      %1366 = vmatpush2.msra.mxu0 0.0
      %1367 = vmatprep.subr.mxu0 0.0
      %1368 = vmatpush2.msra.mxu0 0.0
      %1369 = vmatprep.subr.mxu0 0.0
      %1370 = vmatpush2.msra.mxu0 0.0
      %1371 = vmatprep.subr.mxu0 0.0
      %1372 = vmatpush2.msra.mxu0 0.0
      %1373 = vmatprep.subr.mxu0 0.0
      %1374 = vmatpush2.msra.mxu0 0.0
      %1375 = vmatprep.subr.mxu0 0.0
      %1376 = vmatpush2.msra.mxu0 0.0
      %1377 = vmatprep.mubr.f32.mxu0 0.0
      %1378 = vmatmul.mubr.f32.gmra.mxu0 %v1311
      %v1379 = vpop.f32.mrf.mxu0
      %v1380 = vadd.f32 0.0, %v1379
      %v1381 = vpop.f32.mrf.mxu0
      %1382 = vdwg.mxu0
      %1383 = vrot.lane.b32.xlu0 %v403, 64
      %v1384 = vpop.permute.xlu0 %1383
      %v1387 = vsel %vm437, %v1150, 0
      %1389 = vmatprep.subr.mxu0 0.0
      %1390 = vmatpush1.msra.mxu0 0.0
      %1391 = vmatprep.subr.mxu0 0.0
      %1392 = vmatpush1.msra.mxu0 0.0
      %1393 = vmatprep.subr.mxu0 0.0
      %1394 = vmatpush1.msra.mxu0 0.0
      %1395 = vmatprep.subr.mxu0 0.0
      %1396 = vmatpush1.msra.mxu0 0.0
      %1397 = vmatprep.subr.mxu0 0.0
      %1398 = vmatpush1.msra.mxu0 0.0
      %1399 = vmatprep.subr.mxu0 0.0
      %1400 = vmatpush1.msra.mxu0 0.0
      %1401 = vmatprep.subr.mxu0 0.0
      %1402 = vmatpush1.msra.mxu0 0.0
      %1403 = vmatprep.subr.mxu0 0.0
      %1404 = vmatpush1.msra.mxu0 0.0
      %1405 = vmatprep.subr.mxu0 0.0
      %1406 = vmatpush1.msra.mxu0 0.0
      %1407 = vmatprep.subr.mxu0 0.0
      %1408 = vmatpush1.msra.mxu0 0.0
      %1409 = vmatprep.subr.mxu0 0.0
      %1410 = vmatpush1.msra.mxu0 0.0
      %1411 = vmatprep.subr.mxu0 0.0
      %1412 = vmatpush1.msra.mxu0 0.0
      %1413 = vmatprep.subr.mxu0 0.0
      %1414 = vmatpush1.msra.mxu0 0.0
      %1415 = vmatprep.subr.mxu0 0.0
      %1416 = vmatpush1.msra.mxu0 0.0
      %1417 = vmatprep.subr.mxu0 0.0
      %1418 = vmatpush1.msra.mxu0 0.0
      %1419 = vmatprep.subr.mxu0 0.0
      %1420 = vmatpush1.msra.mxu0 %v1384
      %1421 = vmatprep.subr.mxu0 0.0
      %1422 = vmatpush2.msra.mxu0 0.0
      %1423 = vmatprep.subr.mxu0 0.0
      %1424 = vmatpush2.msra.mxu0 0.0
      %1425 = vmatprep.subr.mxu0 0.0
      %1426 = vmatpush2.msra.mxu0 0.0
      %1427 = vmatprep.subr.mxu0 0.0
      %1428 = vmatpush2.msra.mxu0 0.0
      %1429 = vmatprep.subr.mxu0 0.0
      %1430 = vmatpush2.msra.mxu0 0.0
      %1431 = vmatprep.subr.mxu0 0.0
      %1432 = vmatpush2.msra.mxu0 0.0
      %1433 = vmatprep.subr.mxu0 0.0
      %1434 = vmatpush2.msra.mxu0 0.0
      %1435 = vmatprep.subr.mxu0 0.0
      %1436 = vmatpush2.msra.mxu0 0.0
      %1437 = vmatprep.subr.mxu0 0.0
      %1438 = vmatpush2.msra.mxu0 0.0
      %1439 = vmatprep.subr.mxu0 0.0
      %1440 = vmatpush2.msra.mxu0 0.0
      %1441 = vmatprep.subr.mxu0 0.0
      %1442 = vmatpush2.msra.mxu0 0.0
      %1443 = vmatprep.subr.mxu0 0.0
      %1444 = vmatpush2.msra.mxu0 0.0
      %1445 = vmatprep.subr.mxu0 0.0
      %1446 = vmatpush2.msra.mxu0 0.0
      %1447 = vmatprep.subr.mxu0 0.0
      %1448 = vmatpush2.msra.mxu0 0.0
      %1449 = vmatprep.subr.mxu0 0.0
      %1450 = vmatpush2.msra.mxu0 0.0
      %1451 = vmatprep.subr.mxu0 0.0
      %1452 = vmatpush2.msra.mxu0 0.0
      %1453 = vmatprep.mubr.f32.mxu0 0.0
      %1454 = vmatmul.mubr.f32.gmra.mxu0 %v1387
      %v1455 = vpop.f32.mrf.mxu0
      %v1456 = vadd.f32 0.0, %v1455
      %v1457 = vpop.f32.mrf.mxu0
      %1458 = vdwg.mxu0
      %1459 = vrot.lane.b32.xlu0 %v408, 64
      %v1460 = vpop.permute.xlu0 %1459
      %v1463 = vsel %vm437, %v1151, 0
      %1465 = vmatprep.subr.mxu0 0.0
      %1466 = vmatpush1.msra.mxu0 0.0
      %1467 = vmatprep.subr.mxu0 0.0
      %1468 = vmatpush1.msra.mxu0 0.0
      %1469 = vmatprep.subr.mxu0 0.0
      %1470 = vmatpush1.msra.mxu0 0.0
      %1471 = vmatprep.subr.mxu0 0.0
      %1472 = vmatpush1.msra.mxu0 0.0
      %1473 = vmatprep.subr.mxu0 0.0
      %1474 = vmatpush1.msra.mxu0 0.0
      %1475 = vmatprep.subr.mxu0 0.0
      %1476 = vmatpush1.msra.mxu0 0.0
      %1477 = vmatprep.subr.mxu0 0.0
      %1478 = vmatpush1.msra.mxu0 0.0
      %1479 = vmatprep.subr.mxu0 0.0
      %1480 = vmatpush1.msra.mxu0 0.0
      %1481 = vmatprep.subr.mxu0 0.0
      %1482 = vmatpush1.msra.mxu0 0.0
      %1483 = vmatprep.subr.mxu0 0.0
      %1484 = vmatpush1.msra.mxu0 0.0
      %1485 = vmatprep.subr.mxu0 0.0
      %1486 = vmatpush1.msra.mxu0 0.0
      %1487 = vmatprep.subr.mxu0 0.0
      %1488 = vmatpush1.msra.mxu0 0.0
      %1489 = vmatprep.subr.mxu0 0.0
      %1490 = vmatpush1.msra.mxu0 0.0
      %1491 = vmatprep.subr.mxu0 0.0
      %1492 = vmatpush1.msra.mxu0 0.0
      %1493 = vmatprep.subr.mxu0 0.0
      %1494 = vmatpush1.msra.mxu0 0.0
      %1495 = vmatprep.subr.mxu0 0.0
      %1496 = vmatpush1.msra.mxu0 %v1460
      %1497 = vmatprep.subr.mxu0 0.0
      %1498 = vmatpush2.msra.mxu0 0.0
      %1499 = vmatprep.subr.mxu0 0.0
      %1500 = vmatpush2.msra.mxu0 0.0
      %1501 = vmatprep.subr.mxu0 0.0
      %1502 = vmatpush2.msra.mxu0 0.0
      %1503 = vmatprep.subr.mxu0 0.0
      %1504 = vmatpush2.msra.mxu0 0.0
      %1505 = vmatprep.subr.mxu0 0.0
      %1506 = vmatpush2.msra.mxu0 0.0
      %1507 = vmatprep.subr.mxu0 0.0
      %1508 = vmatpush2.msra.mxu0 0.0
      %1509 = vmatprep.subr.mxu0 0.0
      %1510 = vmatpush2.msra.mxu0 0.0
      %1511 = vmatprep.subr.mxu0 0.0
      %1512 = vmatpush2.msra.mxu0 0.0
      %1513 = vmatprep.subr.mxu0 0.0
      %1514 = vmatpush2.msra.mxu0 0.0
      %1515 = vmatprep.subr.mxu0 0.0
      %1516 = vmatpush2.msra.mxu0 0.0
      %1517 = vmatprep.subr.mxu0 0.0
      %1518 = vmatpush2.msra.mxu0 0.0
      %1519 = vmatprep.subr.mxu0 0.0
      %1520 = vmatpush2.msra.mxu0 0.0
      %1521 = vmatprep.subr.mxu0 0.0
      %1522 = vmatpush2.msra.mxu0 0.0
      %1523 = vmatprep.subr.mxu0 0.0
      %1524 = vmatpush2.msra.mxu0 0.0
      %1525 = vmatprep.subr.mxu0 0.0
      %1526 = vmatpush2.msra.mxu0 0.0
      %1527 = vmatprep.subr.mxu0 0.0
      %1528 = vmatpush2.msra.mxu0 0.0
      %1529 = vmatprep.mubr.f32.mxu0 0.0
      %1530 = vmatmul.mubr.f32.gmra.mxu0 %v1463
      %v1531 = vpop.f32.mrf.mxu0
      %v1532 = vadd.f32 0.0, %v1531
      %v1533 = vpop.f32.mrf.mxu0
      %1534 = vdwg.mxu0
      %1535 = vrot.lane.b32.xlu0 %v413, 64
      %v1536 = vpop.permute.xlu0 %1535
      %v1539 = vsel %vm437, %v1152, 0
      %1541 = vmatprep.subr.mxu0 0.0
      %1542 = vmatpush1.msra.mxu0 0.0
      %1543 = vmatprep.subr.mxu0 0.0
      %1544 = vmatpush1.msra.mxu0 0.0
      %1545 = vmatprep.subr.mxu0 0.0
      %1546 = vmatpush1.msra.mxu0 0.0
      %1547 = vmatprep.subr.mxu0 0.0
      %1548 = vmatpush1.msra.mxu0 0.0
      %1549 = vmatprep.subr.mxu0 0.0
      %1550 = vmatpush1.msra.mxu0 0.0
      %1551 = vmatprep.subr.mxu0 0.0
      %1552 = vmatpush1.msra.mxu0 0.0
      %1553 = vmatprep.subr.mxu0 0.0
      %1554 = vmatpush1.msra.mxu0 0.0
      %1555 = vmatprep.subr.mxu0 0.0
      %1556 = vmatpush1.msra.mxu0 0.0
      %1557 = vmatprep.subr.mxu0 0.0
      %1558 = vmatpush1.msra.mxu0 0.0
      %1559 = vmatprep.subr.mxu0 0.0
      %1560 = vmatpush1.msra.mxu0 0.0
      %1561 = vmatprep.subr.mxu0 0.0
      %1562 = vmatpush1.msra.mxu0 0.0
      %1563 = vmatprep.subr.mxu0 0.0
      %1564 = vmatpush1.msra.mxu0 0.0
      %1565 = vmatprep.subr.mxu0 0.0
      %1566 = vmatpush1.msra.mxu0 0.0
      %1567 = vmatprep.subr.mxu0 0.0
      %1568 = vmatpush1.msra.mxu0 0.0
      %1569 = vmatprep.subr.mxu0 0.0
      %1570 = vmatpush1.msra.mxu0 0.0
      %1571 = vmatprep.subr.mxu0 0.0
      %1572 = vmatpush1.msra.mxu0 %v1536
      %1573 = vmatprep.subr.mxu0 0.0
      %1574 = vmatpush2.msra.mxu0 0.0
      %1575 = vmatprep.subr.mxu0 0.0
      %1576 = vmatpush2.msra.mxu0 0.0
      %1577 = vmatprep.subr.mxu0 0.0
      %1578 = vmatpush2.msra.mxu0 0.0
      %1579 = vmatprep.subr.mxu0 0.0
      %1580 = vmatpush2.msra.mxu0 0.0
      %1581 = vmatprep.subr.mxu0 0.0
      %1582 = vmatpush2.msra.mxu0 0.0
      %1583 = vmatprep.subr.mxu0 0.0
      %1584 = vmatpush2.msra.mxu0 0.0
      %1585 = vmatprep.subr.mxu0 0.0
      %1586 = vmatpush2.msra.mxu0 0.0
      %1587 = vmatprep.subr.mxu0 0.0
      %1588 = vmatpush2.msra.mxu0 0.0
      %1589 = vmatprep.subr.mxu0 0.0
      %1590 = vmatpush2.msra.mxu0 0.0
      %1591 = vmatprep.subr.mxu0 0.0
      %1592 = vmatpush2.msra.mxu0 0.0
      %1593 = vmatprep.subr.mxu0 0.0
      %1594 = vmatpush2.msra.mxu0 0.0
      %1595 = vmatprep.subr.mxu0 0.0
      %1596 = vmatpush2.msra.mxu0 0.0
      %1597 = vmatprep.subr.mxu0 0.0
      %1598 = vmatpush2.msra.mxu0 0.0
      %1599 = vmatprep.subr.mxu0 0.0
      %1600 = vmatpush2.msra.mxu0 0.0
      %1601 = vmatprep.subr.mxu0 0.0
      %1602 = vmatpush2.msra.mxu0 0.0
      %1603 = vmatprep.subr.mxu0 0.0
      %1604 = vmatpush2.msra.mxu0 0.0
      %1605 = vmatprep.mubr.f32.mxu0 0.0
      %1606 = vmatmul.mubr.f32.gmra.mxu0 %v1539
      %v1607 = vpop.f32.mrf.mxu0
      %v1608 = vadd.f32 0.0, %v1607
      %v1609 = vpop.f32.mrf.mxu0
      %1610 = vdwg.mxu0
      %1611 = vrot.lane.b32.xlu0 %v418, 64
      %v1612 = vpop.permute.xlu0 %1611
      %v1615 = vsel %vm437, %v1153, 0
      %1617 = vmatprep.subr.mxu0 0.0
      %1618 = vmatpush1.msra.mxu0 0.0
      %1619 = vmatprep.subr.mxu0 0.0
      %1620 = vmatpush1.msra.mxu0 0.0
      %1621 = vmatprep.subr.mxu0 0.0
      %1622 = vmatpush1.msra.mxu0 0.0
      %1623 = vmatprep.subr.mxu0 0.0
      %1624 = vmatpush1.msra.mxu0 0.0
      %1625 = vmatprep.subr.mxu0 0.0
      %1626 = vmatpush1.msra.mxu0 0.0
      %1627 = vmatprep.subr.mxu0 0.0
      %1628 = vmatpush1.msra.mxu0 0.0
      %1629 = vmatprep.subr.mxu0 0.0
      %1630 = vmatpush1.msra.mxu0 0.0
      %1631 = vmatprep.subr.mxu0 0.0
      %1632 = vmatpush1.msra.mxu0 0.0
      %1633 = vmatprep.subr.mxu0 0.0
      %1634 = vmatpush1.msra.mxu0 0.0
      %1635 = vmatprep.subr.mxu0 0.0
      %1636 = vmatpush1.msra.mxu0 0.0
      %1637 = vmatprep.subr.mxu0 0.0
      %1638 = vmatpush1.msra.mxu0 0.0
      %1639 = vmatprep.subr.mxu0 0.0
      %1640 = vmatpush1.msra.mxu0 0.0
      %1641 = vmatprep.subr.mxu0 0.0
      %1642 = vmatpush1.msra.mxu0 0.0
      %1643 = vmatprep.subr.mxu0 0.0
      %1644 = vmatpush1.msra.mxu0 0.0
      %1645 = vmatprep.subr.mxu0 0.0
      %1646 = vmatpush1.msra.mxu0 0.0
      %1647 = vmatprep.subr.mxu0 0.0
      %1648 = vmatpush1.msra.mxu0 %v1612
      %1649 = vmatprep.subr.mxu0 0.0
      %1650 = vmatpush2.msra.mxu0 0.0
      %1651 = vmatprep.subr.mxu0 0.0
      %1652 = vmatpush2.msra.mxu0 0.0
      %1653 = vmatprep.subr.mxu0 0.0
      %1654 = vmatpush2.msra.mxu0 0.0
      %1655 = vmatprep.subr.mxu0 0.0
      %1656 = vmatpush2.msra.mxu0 0.0
      %1657 = vmatprep.subr.mxu0 0.0
      %1658 = vmatpush2.msra.mxu0 0.0
      %1659 = vmatprep.subr.mxu0 0.0
      %1660 = vmatpush2.msra.mxu0 0.0
      %1661 = vmatprep.subr.mxu0 0.0
      %1662 = vmatpush2.msra.mxu0 0.0
      %1663 = vmatprep.subr.mxu0 0.0
      %1664 = vmatpush2.msra.mxu0 0.0
      %1665 = vmatprep.subr.mxu0 0.0
      %1666 = vmatpush2.msra.mxu0 0.0
      %1667 = vmatprep.subr.mxu0 0.0
      %1668 = vmatpush2.msra.mxu0 0.0
      %1669 = vmatprep.subr.mxu0 0.0
      %1670 = vmatpush2.msra.mxu0 0.0
      %1671 = vmatprep.subr.mxu0 0.0
      %1672 = vmatpush2.msra.mxu0 0.0
      %1673 = vmatprep.subr.mxu0 0.0
      %1674 = vmatpush2.msra.mxu0 0.0
      %1675 = vmatprep.subr.mxu0 0.0
      %1676 = vmatpush2.msra.mxu0 0.0
      %1677 = vmatprep.subr.mxu0 0.0
      %1678 = vmatpush2.msra.mxu0 0.0
      %1679 = vmatprep.subr.mxu0 0.0
      %1680 = vmatpush2.msra.mxu0 0.0
      %1681 = vmatprep.mubr.f32.mxu0 0.0
      %1682 = vmatmul.mubr.f32.gmra.mxu0 %v1615
      %v1683 = vpop.f32.mrf.mxu0
      %v1684 = vadd.f32 0.0, %v1683
      %v1685 = vpop.f32.mrf.mxu0
      %1686 = vdwg.mxu0
      %1687 = vrot.lane.b32.xlu0 %v423, 64
      %v1688 = vpop.permute.xlu0 %1687
      %v1691 = vsel %vm437, %v1154, 0
      %1693 = vmatprep.subr.mxu0 0.0
      %1694 = vmatpush1.msra.mxu0 0.0
      %1695 = vmatprep.subr.mxu0 0.0
      %1696 = vmatpush1.msra.mxu0 0.0
      %1697 = vmatprep.subr.mxu0 0.0
      %1698 = vmatpush1.msra.mxu0 0.0
      %1699 = vmatprep.subr.mxu0 0.0
      %1700 = vmatpush1.msra.mxu0 0.0
      %1701 = vmatprep.subr.mxu0 0.0
      %1702 = vmatpush1.msra.mxu0 0.0
      %1703 = vmatprep.subr.mxu0 0.0
      %1704 = vmatpush1.msra.mxu0 0.0
      %1705 = vmatprep.subr.mxu0 0.0
      %1706 = vmatpush1.msra.mxu0 0.0
      %1707 = vmatprep.subr.mxu0 0.0
      %1708 = vmatpush1.msra.mxu0 0.0
      %1709 = vmatprep.subr.mxu0 0.0
      %1710 = vmatpush1.msra.mxu0 0.0
      %1711 = vmatprep.subr.mxu0 0.0
      %1712 = vmatpush1.msra.mxu0 0.0
      %1713 = vmatprep.subr.mxu0 0.0
      %1714 = vmatpush1.msra.mxu0 0.0
      %1715 = vmatprep.subr.mxu0 0.0
      %1716 = vmatpush1.msra.mxu0 0.0
      %1717 = vmatprep.subr.mxu0 0.0
      %1718 = vmatpush1.msra.mxu0 0.0
      %1719 = vmatprep.subr.mxu0 0.0
      %1720 = vmatpush1.msra.mxu0 0.0
      %1721 = vmatprep.subr.mxu0 0.0
      %1722 = vmatpush1.msra.mxu0 0.0
      %1723 = vmatprep.subr.mxu0 0.0
      %1724 = vmatpush1.msra.mxu0 %v1688
      %1725 = vmatprep.subr.mxu0 0.0
      %1726 = vmatpush2.msra.mxu0 0.0
      %1727 = vmatprep.subr.mxu0 0.0
      %1728 = vmatpush2.msra.mxu0 0.0
      %1729 = vmatprep.subr.mxu0 0.0
      %1730 = vmatpush2.msra.mxu0 0.0
      %1731 = vmatprep.subr.mxu0 0.0
      %1732 = vmatpush2.msra.mxu0 0.0
      %1733 = vmatprep.subr.mxu0 0.0
      %1734 = vmatpush2.msra.mxu0 0.0
      %1735 = vmatprep.subr.mxu0 0.0
      %1736 = vmatpush2.msra.mxu0 0.0
      %1737 = vmatprep.subr.mxu0 0.0
      %1738 = vmatpush2.msra.mxu0 0.0
      %1739 = vmatprep.subr.mxu0 0.0
      %1740 = vmatpush2.msra.mxu0 0.0
      %1741 = vmatprep.subr.mxu0 0.0
      %1742 = vmatpush2.msra.mxu0 0.0
      %1743 = vmatprep.subr.mxu0 0.0
      %1744 = vmatpush2.msra.mxu0 0.0
      %1745 = vmatprep.subr.mxu0 0.0
      %1746 = vmatpush2.msra.mxu0 0.0
      %1747 = vmatprep.subr.mxu0 0.0
      %1748 = vmatpush2.msra.mxu0 0.0
      %1749 = vmatprep.subr.mxu0 0.0
      %1750 = vmatpush2.msra.mxu0 0.0
      %1751 = vmatprep.subr.mxu0 0.0
      %1752 = vmatpush2.msra.mxu0 0.0
      %1753 = vmatprep.subr.mxu0 0.0
      %1754 = vmatpush2.msra.mxu0 0.0
      %1755 = vmatprep.subr.mxu0 0.0
      %1756 = vmatpush2.msra.mxu0 0.0
      %1757 = vmatprep.mubr.f32.mxu0 0.0
      %1758 = vmatmul.mubr.f32.gmra.mxu0 %v1691
      %v1759 = vpop.f32.mrf.mxu0
      %v1760 = vadd.f32 0.0, %v1759
      %v1761 = vpop.f32.mrf.mxu0
      %1762 = vdwg.mxu0
      %1763 = vrot.lane.b32.xlu0 %v388, 120
      %v1764 = vpop.permute.xlu0 %1763
      %1765 = vrot.lane.b32.xlu0 %v388, 88
      %v1766 = vpop.permute.xlu0 %1765
      %v1767 = vsel %vm437, %v1764, 0
      %v1769 = vsel %vm437, %v1766, 0
      %1771 = vmatprep.subr.mxu0 0.0
      %1772 = vmatpush1.xpose.msra.mxu0 0.0
      %1773 = vmatprep.subr.mxu0 0.0
      %1774 = vmatpush1.xpose.msra.mxu0 0.0
      %1775 = vmatprep.subr.mxu0 0.0
      %1776 = vmatpush1.xpose.msra.mxu0 0.0
      %1777 = vmatprep.subr.mxu0 0.0
      %1778 = vmatpush1.xpose.msra.mxu0 0.0
      %1779 = vmatprep.subr.mxu0 0.0
      %1780 = vmatpush1.xpose.msra.mxu0 0.0
      %1781 = vmatprep.subr.mxu0 0.0
      %1782 = vmatpush1.xpose.msra.mxu0 0.0
      %1783 = vmatprep.subr.mxu0 0.0
      %1784 = vmatpush1.xpose.msra.mxu0 0.0
      %1785 = vmatprep.subr.mxu0 0.0
      %1786 = vmatpush1.xpose.msra.mxu0 0.0
      %1787 = vmatprep.subr.mxu0 0.0
      %1788 = vmatpush1.xpose.msra.mxu0 0.0
      %1789 = vmatprep.subr.mxu0 0.0
      %1790 = vmatpush1.xpose.msra.mxu0 0.0
      %1791 = vmatprep.subr.mxu0 0.0
      %1792 = vmatpush1.xpose.msra.mxu0 0.0
      %1793 = vmatprep.subr.mxu0 0.0
      %1794 = vmatpush1.xpose.msra.mxu0 0.0
      %1795 = vmatprep.subr.mxu0 0.0
      %1796 = vmatpush1.xpose.msra.mxu0 0.0
      %1797 = vmatprep.subr.mxu0 0.0
      %1798 = vmatpush1.xpose.msra.mxu0 0.0
      %1799 = vmatprep.subr.mxu0 0.0
      %1800 = vmatpush1.xpose.msra.mxu0 0.0
      %1801 = vmatprep.subr.mxu0 0.0
      %1802 = vmatpush1.xpose.msra.mxu0 %v1769
      %1803 = vmatprep.subr.mxu0 0.0
      %1804 = vmatpush2.xpose.msra.mxu0 0.0
      %1805 = vmatprep.subr.mxu0 0.0
      %1806 = vmatpush2.xpose.msra.mxu0 0.0
      %1807 = vmatprep.subr.mxu0 0.0
      %1808 = vmatpush2.xpose.msra.mxu0 0.0
      %1809 = vmatprep.subr.mxu0 0.0
      %1810 = vmatpush2.xpose.msra.mxu0 0.0
      %1811 = vmatprep.subr.mxu0 0.0
      %1812 = vmatpush2.xpose.msra.mxu0 0.0
      %1813 = vmatprep.subr.mxu0 0.0
      %1814 = vmatpush2.xpose.msra.mxu0 0.0
      %1815 = vmatprep.subr.mxu0 0.0
      %1816 = vmatpush2.xpose.msra.mxu0 0.0
      %1817 = vmatprep.subr.mxu0 0.0
      %1818 = vmatpush2.xpose.msra.mxu0 0.0
      %1819 = vmatprep.subr.mxu0 0.0
      %1820 = vmatpush2.xpose.msra.mxu0 0.0
      %1821 = vmatprep.subr.mxu0 0.0
      %1822 = vmatpush2.xpose.msra.mxu0 0.0
      %1823 = vmatprep.subr.mxu0 0.0
      %1824 = vmatpush2.xpose.msra.mxu0 0.0
      %1825 = vmatprep.subr.mxu0 0.0
      %1826 = vmatpush2.xpose.msra.mxu0 0.0
      %1827 = vmatprep.subr.mxu0 0.0
      %1828 = vmatpush2.xpose.msra.mxu0 0.0
      %1829 = vmatprep.subr.mxu0 0.0
      %1830 = vmatpush2.xpose.msra.mxu0 0.0
      %1831 = vmatprep.subr.mxu0 0.0
      %1832 = vmatpush2.xpose.msra.mxu0 0.0
      %1833 = vmatprep.subr.mxu0 0.0
      %1834 = vmatpush2.xpose.msra.mxu0 0.0
      %1835 = vmatprep.mubr.f32.mxu0 0.0
      %1836 = vmatmul.mubr.f32.gmra.mxu0 %v1767
      %v1837 = vpop.f32.mrf.mxu0
      %v1838 = vadd.f32 0.0, %v1837
      %v1839 = vpop.f32.mrf.mxu0
      %1840 = vdwg.mxu0
      %1841 = vrot.lane.b32.xlu0 %v393, 120
      %v1842 = vpop.permute.xlu0 %1841
      %1843 = vrot.lane.b32.xlu0 %v393, 88
      %v1844 = vpop.permute.xlu0 %1843
      %v1845 = vsel %vm437, %v1842, 0
      %v1847 = vsel %vm437, %v1844, 0
      %1849 = vmatprep.subr.mxu0 0.0
      %1850 = vmatpush1.xpose.msra.mxu0 0.0
      %1851 = vmatprep.subr.mxu0 0.0
      %1852 = vmatpush1.xpose.msra.mxu0 0.0
      %1853 = vmatprep.subr.mxu0 0.0
      %1854 = vmatpush1.xpose.msra.mxu0 0.0
      %1855 = vmatprep.subr.mxu0 0.0
      %1856 = vmatpush1.xpose.msra.mxu0 0.0
      %1857 = vmatprep.subr.mxu0 0.0
      %1858 = vmatpush1.xpose.msra.mxu0 0.0
      %1859 = vmatprep.subr.mxu0 0.0
      %1860 = vmatpush1.xpose.msra.mxu0 0.0
      %1861 = vmatprep.subr.mxu0 0.0
      %1862 = vmatpush1.xpose.msra.mxu0 0.0
      %1863 = vmatprep.subr.mxu0 0.0
      %1864 = vmatpush1.xpose.msra.mxu0 0.0
      %1865 = vmatprep.subr.mxu0 0.0
      %1866 = vmatpush1.xpose.msra.mxu0 0.0
      %1867 = vmatprep.subr.mxu0 0.0
      %1868 = vmatpush1.xpose.msra.mxu0 0.0
      %1869 = vmatprep.subr.mxu0 0.0
      %1870 = vmatpush1.xpose.msra.mxu0 0.0
      %1871 = vmatprep.subr.mxu0 0.0
      %1872 = vmatpush1.xpose.msra.mxu0 0.0
      %1873 = vmatprep.subr.mxu0 0.0
      %1874 = vmatpush1.xpose.msra.mxu0 0.0
      %1875 = vmatprep.subr.mxu0 0.0
      %1876 = vmatpush1.xpose.msra.mxu0 0.0
      %1877 = vmatprep.subr.mxu0 0.0
      %1878 = vmatpush1.xpose.msra.mxu0 0.0
      %1879 = vmatprep.subr.mxu0 0.0
      %1880 = vmatpush1.xpose.msra.mxu0 %v1847
      %1881 = vmatprep.subr.mxu0 0.0
      %1882 = vmatpush2.xpose.msra.mxu0 0.0
      %1883 = vmatprep.subr.mxu0 0.0
      %1884 = vmatpush2.xpose.msra.mxu0 0.0
      %1885 = vmatprep.subr.mxu0 0.0
      %1886 = vmatpush2.xpose.msra.mxu0 0.0
      %1887 = vmatprep.subr.mxu0 0.0
      %1888 = vmatpush2.xpose.msra.mxu0 0.0
      %1889 = vmatprep.subr.mxu0 0.0
      %1890 = vmatpush2.xpose.msra.mxu0 0.0
      %1891 = vmatprep.subr.mxu0 0.0
      %1892 = vmatpush2.xpose.msra.mxu0 0.0
      %1893 = vmatprep.subr.mxu0 0.0
      %1894 = vmatpush2.xpose.msra.mxu0 0.0
      %1895 = vmatprep.subr.mxu0 0.0
      %1896 = vmatpush2.xpose.msra.mxu0 0.0
      %1897 = vmatprep.subr.mxu0 0.0
      %1898 = vmatpush2.xpose.msra.mxu0 0.0
      %1899 = vmatprep.subr.mxu0 0.0
      %1900 = vmatpush2.xpose.msra.mxu0 0.0
      %1901 = vmatprep.subr.mxu0 0.0
      %1902 = vmatpush2.xpose.msra.mxu0 0.0
      %1903 = vmatprep.subr.mxu0 0.0
      %1904 = vmatpush2.xpose.msra.mxu0 0.0
      %1905 = vmatprep.subr.mxu0 0.0
      %1906 = vmatpush2.xpose.msra.mxu0 0.0
      %1907 = vmatprep.subr.mxu0 0.0
      %1908 = vmatpush2.xpose.msra.mxu0 0.0
      %1909 = vmatprep.subr.mxu0 0.0
      %1910 = vmatpush2.xpose.msra.mxu0 0.0
      %1911 = vmatprep.subr.mxu0 0.0
      %1912 = vmatpush2.xpose.msra.mxu0 0.0
      %1913 = vmatprep.mubr.f32.mxu0 0.0
      %1914 = vmatmul.mubr.f32.gmra.mxu0 %v1845
      %v1915 = vpop.f32.mrf.mxu0
      %v1916 = vadd.f32 0.0, %v1915
      %v1917 = vpop.f32.mrf.mxu0
      %1918 = vdwg.mxu0
      %1919 = vrot.lane.b32.xlu0 %v398, 120
      %v1920 = vpop.permute.xlu0 %1919
      %1921 = vrot.lane.b32.xlu0 %v398, 88
      %v1922 = vpop.permute.xlu0 %1921
      %v1923 = vsel %vm437, %v1920, 0
      %v1925 = vsel %vm437, %v1922, 0
      %1927 = vmatprep.subr.mxu0 0.0
      %1928 = vmatpush1.xpose.msra.mxu0 0.0
      %1929 = vmatprep.subr.mxu0 0.0
      %1930 = vmatpush1.xpose.msra.mxu0 0.0
      %1931 = vmatprep.subr.mxu0 0.0
      %1932 = vmatpush1.xpose.msra.mxu0 0.0
      %1933 = vmatprep.subr.mxu0 0.0
      %1934 = vmatpush1.xpose.msra.mxu0 0.0
      %1935 = vmatprep.subr.mxu0 0.0
      %1936 = vmatpush1.xpose.msra.mxu0 0.0
      %1937 = vmatprep.subr.mxu0 0.0
      %1938 = vmatpush1.xpose.msra.mxu0 0.0
      %1939 = vmatprep.subr.mxu0 0.0
      %1940 = vmatpush1.xpose.msra.mxu0 0.0
      %1941 = vmatprep.subr.mxu0 0.0
      %1942 = vmatpush1.xpose.msra.mxu0 0.0
      %1943 = vmatprep.subr.mxu0 0.0
      %1944 = vmatpush1.xpose.msra.mxu0 0.0
      %1945 = vmatprep.subr.mxu0 0.0
      %1946 = vmatpush1.xpose.msra.mxu0 0.0
      %1947 = vmatprep.subr.mxu0 0.0
      %1948 = vmatpush1.xpose.msra.mxu0 0.0
      %1949 = vmatprep.subr.mxu0 0.0
      %1950 = vmatpush1.xpose.msra.mxu0 0.0
      %1951 = vmatprep.subr.mxu0 0.0
      %1952 = vmatpush1.xpose.msra.mxu0 0.0
      %1953 = vmatprep.subr.mxu0 0.0
      %1954 = vmatpush1.xpose.msra.mxu0 0.0
      %1955 = vmatprep.subr.mxu0 0.0
      %1956 = vmatpush1.xpose.msra.mxu0 0.0
      %1957 = vmatprep.subr.mxu0 0.0
      %1958 = vmatpush1.xpose.msra.mxu0 %v1925
      %1959 = vmatprep.subr.mxu0 0.0
      %1960 = vmatpush2.xpose.msra.mxu0 0.0
      %1961 = vmatprep.subr.mxu0 0.0
      %1962 = vmatpush2.xpose.msra.mxu0 0.0
      %1963 = vmatprep.subr.mxu0 0.0
      %1964 = vmatpush2.xpose.msra.mxu0 0.0
      %1965 = vmatprep.subr.mxu0 0.0
      %1966 = vmatpush2.xpose.msra.mxu0 0.0
      %1967 = vmatprep.subr.mxu0 0.0
      %1968 = vmatpush2.xpose.msra.mxu0 0.0
      %1969 = vmatprep.subr.mxu0 0.0
      %1970 = vmatpush2.xpose.msra.mxu0 0.0
      %1971 = vmatprep.subr.mxu0 0.0
      %1972 = vmatpush2.xpose.msra.mxu0 0.0
      %1973 = vmatprep.subr.mxu0 0.0
      %1974 = vmatpush2.xpose.msra.mxu0 0.0
      %1975 = vmatprep.subr.mxu0 0.0
      %1976 = vmatpush2.xpose.msra.mxu0 0.0
      %1977 = vmatprep.subr.mxu0 0.0
      %1978 = vmatpush2.xpose.msra.mxu0 0.0
      %1979 = vmatprep.subr.mxu0 0.0
      %1980 = vmatpush2.xpose.msra.mxu0 0.0
      %1981 = vmatprep.subr.mxu0 0.0
      %1982 = vmatpush2.xpose.msra.mxu0 0.0
      %1983 = vmatprep.subr.mxu0 0.0
      %1984 = vmatpush2.xpose.msra.mxu0 0.0
      %1985 = vmatprep.subr.mxu0 0.0
      %1986 = vmatpush2.xpose.msra.mxu0 0.0
      %1987 = vmatprep.subr.mxu0 0.0
      %1988 = vmatpush2.xpose.msra.mxu0 0.0
      %1989 = vmatprep.subr.mxu0 0.0
      %1990 = vmatpush2.xpose.msra.mxu0 0.0
      %1991 = vmatprep.mubr.f32.mxu0 0.0
      %1992 = vmatmul.mubr.f32.gmra.mxu0 %v1923
      %v1993 = vpop.f32.mrf.mxu0
      %v1994 = vadd.f32 0.0, %v1993
      %v1995 = vpop.f32.mrf.mxu0
      %1996 = vdwg.mxu0
      %1997 = vrot.lane.b32.xlu0 %v403, 120
      %v1998 = vpop.permute.xlu0 %1997
      %1999 = vrot.lane.b32.xlu0 %v403, 88
      %v2000 = vpop.permute.xlu0 %1999
      %v2001 = vsel %vm437, %v1998, 0
      %v2003 = vsel %vm437, %v2000, 0
      %2005 = vmatprep.subr.mxu0 0.0
      %2006 = vmatpush1.xpose.msra.mxu0 0.0
      %2007 = vmatprep.subr.mxu0 0.0
      %2008 = vmatpush1.xpose.msra.mxu0 0.0
      %2009 = vmatprep.subr.mxu0 0.0
      %2010 = vmatpush1.xpose.msra.mxu0 0.0
      %2011 = vmatprep.subr.mxu0 0.0
      %2012 = vmatpush1.xpose.msra.mxu0 0.0
      %2013 = vmatprep.subr.mxu0 0.0
      %2014 = vmatpush1.xpose.msra.mxu0 0.0
      %2015 = vmatprep.subr.mxu0 0.0
      %2016 = vmatpush1.xpose.msra.mxu0 0.0
      %2017 = vmatprep.subr.mxu0 0.0
      %2018 = vmatpush1.xpose.msra.mxu0 0.0
      %2019 = vmatprep.subr.mxu0 0.0
      %2020 = vmatpush1.xpose.msra.mxu0 0.0
      %2021 = vmatprep.subr.mxu0 0.0
      %2022 = vmatpush1.xpose.msra.mxu0 0.0
      %2023 = vmatprep.subr.mxu0 0.0
      %2024 = vmatpush1.xpose.msra.mxu0 0.0
      %2025 = vmatprep.subr.mxu0 0.0
      %2026 = vmatpush1.xpose.msra.mxu0 0.0
      %2027 = vmatprep.subr.mxu0 0.0
      %2028 = vmatpush1.xpose.msra.mxu0 0.0
      %2029 = vmatprep.subr.mxu0 0.0
      %2030 = vmatpush1.xpose.msra.mxu0 0.0
      %2031 = vmatprep.subr.mxu0 0.0
      %2032 = vmatpush1.xpose.msra.mxu0 0.0
      %2033 = vmatprep.subr.mxu0 0.0
      %2034 = vmatpush1.xpose.msra.mxu0 0.0
      %2035 = vmatprep.subr.mxu0 0.0
      %2036 = vmatpush1.xpose.msra.mxu0 %v2003
      %2037 = vmatprep.subr.mxu0 0.0
      %2038 = vmatpush2.xpose.msra.mxu0 0.0
      %2039 = vmatprep.subr.mxu0 0.0
      %2040 = vmatpush2.xpose.msra.mxu0 0.0
      %2041 = vmatprep.subr.mxu0 0.0
      %2042 = vmatpush2.xpose.msra.mxu0 0.0
      %2043 = vmatprep.subr.mxu0 0.0
      %2044 = vmatpush2.xpose.msra.mxu0 0.0
      %2045 = vmatprep.subr.mxu0 0.0
      %2046 = vmatpush2.xpose.msra.mxu0 0.0
      %2047 = vmatprep.subr.mxu0 0.0
      %2048 = vmatpush2.xpose.msra.mxu0 0.0
      %2049 = vmatprep.subr.mxu0 0.0
      %2050 = vmatpush2.xpose.msra.mxu0 0.0
      %2051 = vmatprep.subr.mxu0 0.0
      %2052 = vmatpush2.xpose.msra.mxu0 0.0
      %2053 = vmatprep.subr.mxu0 0.0
      %2054 = vmatpush2.xpose.msra.mxu0 0.0
      %2055 = vmatprep.subr.mxu0 0.0
      %2056 = vmatpush2.xpose.msra.mxu0 0.0
      %2057 = vmatprep.subr.mxu0 0.0
      %2058 = vmatpush2.xpose.msra.mxu0 0.0
      %2059 = vmatprep.subr.mxu0 0.0
      %2060 = vmatpush2.xpose.msra.mxu0 0.0
      %2061 = vmatprep.subr.mxu0 0.0
      %2062 = vmatpush2.xpose.msra.mxu0 0.0
      %2063 = vmatprep.subr.mxu0 0.0
      %2064 = vmatpush2.xpose.msra.mxu0 0.0
      %2065 = vmatprep.subr.mxu0 0.0
      %2066 = vmatpush2.xpose.msra.mxu0 0.0
      %2067 = vmatprep.subr.mxu0 0.0
      %2068 = vmatpush2.xpose.msra.mxu0 0.0
      %2069 = vmatprep.mubr.f32.mxu0 0.0
      %2070 = vmatmul.mubr.f32.gmra.mxu0 %v2001
      %v2071 = vpop.f32.mrf.mxu0
      %v2072 = vadd.f32 0.0, %v2071
      %v2073 = vpop.f32.mrf.mxu0
      %2074 = vdwg.mxu0
      %2075 = vrot.lane.b32.xlu0 %v408, 120
      %v2076 = vpop.permute.xlu0 %2075
      %2077 = vrot.lane.b32.xlu0 %v408, 88
      %v2078 = vpop.permute.xlu0 %2077
      %v2079 = vsel %vm437, %v2076, 0
      %v2081 = vsel %vm437, %v2078, 0
      %2083 = vmatprep.subr.mxu0 0.0
      %2084 = vmatpush1.xpose.msra.mxu0 0.0
      %2085 = vmatprep.subr.mxu0 0.0
      %2086 = vmatpush1.xpose.msra.mxu0 0.0
      %2087 = vmatprep.subr.mxu0 0.0
      %2088 = vmatpush1.xpose.msra.mxu0 0.0
      %2089 = vmatprep.subr.mxu0 0.0
      %2090 = vmatpush1.xpose.msra.mxu0 0.0
      %2091 = vmatprep.subr.mxu0 0.0
      %2092 = vmatpush1.xpose.msra.mxu0 0.0
      %2093 = vmatprep.subr.mxu0 0.0
      %2094 = vmatpush1.xpose.msra.mxu0 0.0
      %2095 = vmatprep.subr.mxu0 0.0
      %2096 = vmatpush1.xpose.msra.mxu0 0.0
      %2097 = vmatprep.subr.mxu0 0.0
      %2098 = vmatpush1.xpose.msra.mxu0 0.0
      %2099 = vmatprep.subr.mxu0 0.0
      %2100 = vmatpush1.xpose.msra.mxu0 0.0
      %2101 = vmatprep.subr.mxu0 0.0
      %2102 = vmatpush1.xpose.msra.mxu0 0.0
      %2103 = vmatprep.subr.mxu0 0.0
      %2104 = vmatpush1.xpose.msra.mxu0 0.0
      %2105 = vmatprep.subr.mxu0 0.0
      %2106 = vmatpush1.xpose.msra.mxu0 0.0
      %2107 = vmatprep.subr.mxu0 0.0
      %2108 = vmatpush1.xpose.msra.mxu0 0.0
      %2109 = vmatprep.subr.mxu0 0.0
      %2110 = vmatpush1.xpose.msra.mxu0 0.0
      %2111 = vmatprep.subr.mxu0 0.0
      %2112 = vmatpush1.xpose.msra.mxu0 0.0
      %2113 = vmatprep.subr.mxu0 0.0
      %2114 = vmatpush1.xpose.msra.mxu0 %v2081
      %2115 = vmatprep.subr.mxu0 0.0
      %2116 = vmatpush2.xpose.msra.mxu0 0.0
      %2117 = vmatprep.subr.mxu0 0.0
      %2118 = vmatpush2.xpose.msra.mxu0 0.0
      %2119 = vmatprep.subr.mxu0 0.0
      %2120 = vmatpush2.xpose.msra.mxu0 0.0
      %2121 = vmatprep.subr.mxu0 0.0
      %2122 = vmatpush2.xpose.msra.mxu0 0.0
      %2123 = vmatprep.subr.mxu0 0.0
      %2124 = vmatpush2.xpose.msra.mxu0 0.0
      %2125 = vmatprep.subr.mxu0 0.0
      %2126 = vmatpush2.xpose.msra.mxu0 0.0
      %2127 = vmatprep.subr.mxu0 0.0
      %2128 = vmatpush2.xpose.msra.mxu0 0.0
      %2129 = vmatprep.subr.mxu0 0.0
      %2130 = vmatpush2.xpose.msra.mxu0 0.0
      %2131 = vmatprep.subr.mxu0 0.0
      %2132 = vmatpush2.xpose.msra.mxu0 0.0
      %2133 = vmatprep.subr.mxu0 0.0
      %2134 = vmatpush2.xpose.msra.mxu0 0.0
      %2135 = vmatprep.subr.mxu0 0.0
      %2136 = vmatpush2.xpose.msra.mxu0 0.0
      %2137 = vmatprep.subr.mxu0 0.0
      %2138 = vmatpush2.xpose.msra.mxu0 0.0
      %2139 = vmatprep.subr.mxu0 0.0
      %2140 = vmatpush2.xpose.msra.mxu0 0.0
      %2141 = vmatprep.subr.mxu0 0.0
      %2142 = vmatpush2.xpose.msra.mxu0 0.0
      %2143 = vmatprep.subr.mxu0 0.0
      %2144 = vmatpush2.xpose.msra.mxu0 0.0
      %2145 = vmatprep.subr.mxu0 0.0
      %2146 = vmatpush2.xpose.msra.mxu0 0.0
      %2147 = vmatprep.mubr.f32.mxu0 0.0
      %2148 = vmatmul.mubr.f32.gmra.mxu0 %v2079
      %v2149 = vpop.f32.mrf.mxu0
      %v2150 = vadd.f32 0.0, %v2149
      %v2151 = vpop.f32.mrf.mxu0
      %2152 = vdwg.mxu0
      %2153 = vrot.lane.b32.xlu0 %v413, 120
      %v2154 = vpop.permute.xlu0 %2153
      %2155 = vrot.lane.b32.xlu0 %v413, 88
      %v2156 = vpop.permute.xlu0 %2155
      %v2157 = vsel %vm437, %v2154, 0
      %v2159 = vsel %vm437, %v2156, 0
      %2161 = vmatprep.subr.mxu0 0.0
      %2162 = vmatpush1.xpose.msra.mxu0 0.0
      %2163 = vmatprep.subr.mxu0 0.0
      %2164 = vmatpush1.xpose.msra.mxu0 0.0
      %2165 = vmatprep.subr.mxu0 0.0
      %2166 = vmatpush1.xpose.msra.mxu0 0.0
      %2167 = vmatprep.subr.mxu0 0.0
      %2168 = vmatpush1.xpose.msra.mxu0 0.0
      %2169 = vmatprep.subr.mxu0 0.0
      %2170 = vmatpush1.xpose.msra.mxu0 0.0
      %2171 = vmatprep.subr.mxu0 0.0
      %2172 = vmatpush1.xpose.msra.mxu0 0.0
      %2173 = vmatprep.subr.mxu0 0.0
      %2174 = vmatpush1.xpose.msra.mxu0 0.0
      %2175 = vmatprep.subr.mxu0 0.0
      %2176 = vmatpush1.xpose.msra.mxu0 0.0
      %2177 = vmatprep.subr.mxu0 0.0
      %2178 = vmatpush1.xpose.msra.mxu0 0.0
      %2179 = vmatprep.subr.mxu0 0.0
      %2180 = vmatpush1.xpose.msra.mxu0 0.0
      %2181 = vmatprep.subr.mxu0 0.0
      %2182 = vmatpush1.xpose.msra.mxu0 0.0
      %2183 = vmatprep.subr.mxu0 0.0
      %2184 = vmatpush1.xpose.msra.mxu0 0.0
      %2185 = vmatprep.subr.mxu0 0.0
      %2186 = vmatpush1.xpose.msra.mxu0 0.0
      %2187 = vmatprep.subr.mxu0 0.0
      %2188 = vmatpush1.xpose.msra.mxu0 0.0
      %2189 = vmatprep.subr.mxu0 0.0
      %2190 = vmatpush1.xpose.msra.mxu0 0.0
      %2191 = vmatprep.subr.mxu0 0.0
      %2192 = vmatpush1.xpose.msra.mxu0 %v2159
      %2193 = vmatprep.subr.mxu0 0.0
      %2194 = vmatpush2.xpose.msra.mxu0 0.0
      %2195 = vmatprep.subr.mxu0 0.0
      %2196 = vmatpush2.xpose.msra.mxu0 0.0
      %2197 = vmatprep.subr.mxu0 0.0
      %2198 = vmatpush2.xpose.msra.mxu0 0.0
      %2199 = vmatprep.subr.mxu0 0.0
      %2200 = vmatpush2.xpose.msra.mxu0 0.0
      %2201 = vmatprep.subr.mxu0 0.0
      %2202 = vmatpush2.xpose.msra.mxu0 0.0
      %2203 = vmatprep.subr.mxu0 0.0
      %2204 = vmatpush2.xpose.msra.mxu0 0.0
      %2205 = vmatprep.subr.mxu0 0.0
      %2206 = vmatpush2.xpose.msra.mxu0 0.0
      %2207 = vmatprep.subr.mxu0 0.0
      %2208 = vmatpush2.xpose.msra.mxu0 0.0
      %2209 = vmatprep.subr.mxu0 0.0
      %2210 = vmatpush2.xpose.msra.mxu0 0.0
      %2211 = vmatprep.subr.mxu0 0.0
      %2212 = vmatpush2.xpose.msra.mxu0 0.0
      %2213 = vmatprep.subr.mxu0 0.0
      %2214 = vmatpush2.xpose.msra.mxu0 0.0
      %2215 = vmatprep.subr.mxu0 0.0
      %2216 = vmatpush2.xpose.msra.mxu0 0.0
      %2217 = vmatprep.subr.mxu0 0.0
      %2218 = vmatpush2.xpose.msra.mxu0 0.0
      %2219 = vmatprep.subr.mxu0 0.0
      %2220 = vmatpush2.xpose.msra.mxu0 0.0
      %2221 = vmatprep.subr.mxu0 0.0
      %2222 = vmatpush2.xpose.msra.mxu0 0.0
      %2223 = vmatprep.subr.mxu0 0.0
      %2224 = vmatpush2.xpose.msra.mxu0 0.0
      %2225 = vmatprep.mubr.f32.mxu0 0.0
      %2226 = vmatmul.mubr.f32.gmra.mxu0 %v2157
      %v2227 = vpop.f32.mrf.mxu0
      %v2228 = vadd.f32 0.0, %v2227
      %v2229 = vpop.f32.mrf.mxu0
      %2230 = vdwg.mxu0
      %2231 = vrot.lane.b32.xlu0 %v418, 120
      %v2232 = vpop.permute.xlu0 %2231
      %2233 = vrot.lane.b32.xlu0 %v418, 88
      %v2234 = vpop.permute.xlu0 %2233
      %v2235 = vsel %vm437, %v2232, 0
      %v2237 = vsel %vm437, %v2234, 0
      %2239 = vmatprep.subr.mxu0 0.0
      %2240 = vmatpush1.xpose.msra.mxu0 0.0
      %2241 = vmatprep.subr.mxu0 0.0
      %2242 = vmatpush1.xpose.msra.mxu0 0.0
      %2243 = vmatprep.subr.mxu0 0.0
      %2244 = vmatpush1.xpose.msra.mxu0 0.0
      %2245 = vmatprep.subr.mxu0 0.0
      %2246 = vmatpush1.xpose.msra.mxu0 0.0
      %2247 = vmatprep.subr.mxu0 0.0
      %2248 = vmatpush1.xpose.msra.mxu0 0.0
      %2249 = vmatprep.subr.mxu0 0.0
      %2250 = vmatpush1.xpose.msra.mxu0 0.0
      %2251 = vmatprep.subr.mxu0 0.0
      %2252 = vmatpush1.xpose.msra.mxu0 0.0
      %2253 = vmatprep.subr.mxu0 0.0
      %2254 = vmatpush1.xpose.msra.mxu0 0.0
      %2255 = vmatprep.subr.mxu0 0.0
      %2256 = vmatpush1.xpose.msra.mxu0 0.0
      %2257 = vmatprep.subr.mxu0 0.0
      %2258 = vmatpush1.xpose.msra.mxu0 0.0
      %2259 = vmatprep.subr.mxu0 0.0
      %2260 = vmatpush1.xpose.msra.mxu0 0.0
      %2261 = vmatprep.subr.mxu0 0.0
      %2262 = vmatpush1.xpose.msra.mxu0 0.0
      %2263 = vmatprep.subr.mxu0 0.0
      %2264 = vmatpush1.xpose.msra.mxu0 0.0
      %2265 = vmatprep.subr.mxu0 0.0
      %2266 = vmatpush1.xpose.msra.mxu0 0.0
      %2267 = vmatprep.subr.mxu0 0.0
      %2268 = vmatpush1.xpose.msra.mxu0 0.0
      %2269 = vmatprep.subr.mxu0 0.0
      %2270 = vmatpush1.xpose.msra.mxu0 %v2237
      %2271 = vmatprep.subr.mxu0 0.0
      %2272 = vmatpush2.xpose.msra.mxu0 0.0
      %2273 = vmatprep.subr.mxu0 0.0
      %2274 = vmatpush2.xpose.msra.mxu0 0.0
      %2275 = vmatprep.subr.mxu0 0.0
      %2276 = vmatpush2.xpose.msra.mxu0 0.0
      %2277 = vmatprep.subr.mxu0 0.0
      %2278 = vmatpush2.xpose.msra.mxu0 0.0
      %2279 = vmatprep.subr.mxu0 0.0
      %2280 = vmatpush2.xpose.msra.mxu0 0.0
      %2281 = vmatprep.subr.mxu0 0.0
      %2282 = vmatpush2.xpose.msra.mxu0 0.0
      %2283 = vmatprep.subr.mxu0 0.0
      %2284 = vmatpush2.xpose.msra.mxu0 0.0
      %2285 = vmatprep.subr.mxu0 0.0
      %2286 = vmatpush2.xpose.msra.mxu0 0.0
      %2287 = vmatprep.subr.mxu0 0.0
      %2288 = vmatpush2.xpose.msra.mxu0 0.0
      %2289 = vmatprep.subr.mxu0 0.0
      %2290 = vmatpush2.xpose.msra.mxu0 0.0
      %2291 = vmatprep.subr.mxu0 0.0
      %2292 = vmatpush2.xpose.msra.mxu0 0.0
      %2293 = vmatprep.subr.mxu0 0.0
      %2294 = vmatpush2.xpose.msra.mxu0 0.0
      %2295 = vmatprep.subr.mxu0 0.0
      %2296 = vmatpush2.xpose.msra.mxu0 0.0
      %2297 = vmatprep.subr.mxu0 0.0
      %2298 = vmatpush2.xpose.msra.mxu0 0.0
      %2299 = vmatprep.subr.mxu0 0.0
      %2300 = vmatpush2.xpose.msra.mxu0 0.0
      %2301 = vmatprep.subr.mxu0 0.0
      %2302 = vmatpush2.xpose.msra.mxu0 0.0
      %2303 = vmatprep.mubr.f32.mxu0 0.0
      %2304 = vmatmul.mubr.f32.gmra.mxu0 %v2235
      %v2305 = vpop.f32.mrf.mxu0
      %v2306 = vadd.f32 0.0, %v2305
      %v2307 = vpop.f32.mrf.mxu0
      %2308 = vdwg.mxu0
      %2309 = vrot.lane.b32.xlu0 %v423, 120
      %v2310 = vpop.permute.xlu0 %2309
      %2311 = vrot.lane.b32.xlu0 %v423, 88
      %v2312 = vpop.permute.xlu0 %2311
      %v2313 = vsel %vm437, %v2310, 0
      %v2315 = vsel %vm437, %v2312, 0
      %2317 = vmatprep.subr.mxu0 0.0
      %2318 = vmatpush1.xpose.msra.mxu0 0.0
      %2319 = vmatprep.subr.mxu0 0.0
      %2320 = vmatpush1.xpose.msra.mxu0 0.0
      %2321 = vmatprep.subr.mxu0 0.0
      %2322 = vmatpush1.xpose.msra.mxu0 0.0
      %2323 = vmatprep.subr.mxu0 0.0
      %2324 = vmatpush1.xpose.msra.mxu0 0.0
      %2325 = vmatprep.subr.mxu0 0.0
      %2326 = vmatpush1.xpose.msra.mxu0 0.0
      %2327 = vmatprep.subr.mxu0 0.0
      %2328 = vmatpush1.xpose.msra.mxu0 0.0
      %2329 = vmatprep.subr.mxu0 0.0
      %2330 = vmatpush1.xpose.msra.mxu0 0.0
      %2331 = vmatprep.subr.mxu0 0.0
      %2332 = vmatpush1.xpose.msra.mxu0 0.0
      %2333 = vmatprep.subr.mxu0 0.0
      %2334 = vmatpush1.xpose.msra.mxu0 0.0
      %2335 = vmatprep.subr.mxu0 0.0
      %2336 = vmatpush1.xpose.msra.mxu0 0.0
      %2337 = vmatprep.subr.mxu0 0.0
      %2338 = vmatpush1.xpose.msra.mxu0 0.0
      %2339 = vmatprep.subr.mxu0 0.0
      %2340 = vmatpush1.xpose.msra.mxu0 0.0
      %2341 = vmatprep.subr.mxu0 0.0
      %2342 = vmatpush1.xpose.msra.mxu0 0.0
      %2343 = vmatprep.subr.mxu0 0.0
      %2344 = vmatpush1.xpose.msra.mxu0 0.0
      %2345 = vmatprep.subr.mxu0 0.0
      %2346 = vmatpush1.xpose.msra.mxu0 0.0
      %2347 = vmatprep.subr.mxu0 0.0
      %2348 = vmatpush1.xpose.msra.mxu0 %v2315
      %2349 = vmatprep.subr.mxu0 0.0
      %2350 = vmatpush2.xpose.msra.mxu0 0.0
      %2351 = vmatprep.subr.mxu0 0.0
      %2352 = vmatpush2.xpose.msra.mxu0 0.0
      %2353 = vmatprep.subr.mxu0 0.0
      %2354 = vmatpush2.xpose.msra.mxu0 0.0
      %2355 = vmatprep.subr.mxu0 0.0
      %2356 = vmatpush2.xpose.msra.mxu0 0.0
      %2357 = vmatprep.subr.mxu0 0.0
      %2358 = vmatpush2.xpose.msra.mxu0 0.0
      %2359 = vmatprep.subr.mxu0 0.0
      %2360 = vmatpush2.xpose.msra.mxu0 0.0
      %2361 = vmatprep.subr.mxu0 0.0
      %2362 = vmatpush2.xpose.msra.mxu0 0.0
      %2363 = vmatprep.subr.mxu0 0.0
      %2364 = vmatpush2.xpose.msra.mxu0 0.0
      %2365 = vmatprep.subr.mxu0 0.0
      %2366 = vmatpush2.xpose.msra.mxu0 0.0
      %2367 = vmatprep.subr.mxu0 0.0
      %2368 = vmatpush2.xpose.msra.mxu0 0.0
      %2369 = vmatprep.subr.mxu0 0.0
      %2370 = vmatpush2.xpose.msra.mxu0 0.0
      %2371 = vmatprep.subr.mxu0 0.0
      %2372 = vmatpush2.xpose.msra.mxu0 0.0
      %2373 = vmatprep.subr.mxu0 0.0
      %2374 = vmatpush2.xpose.msra.mxu0 0.0
      %2375 = vmatprep.subr.mxu0 0.0
      %2376 = vmatpush2.xpose.msra.mxu0 0.0
      %2377 = vmatprep.subr.mxu0 0.0
      %2378 = vmatpush2.xpose.msra.mxu0 0.0
      %2379 = vmatprep.subr.mxu0 0.0
      %2380 = vmatpush2.xpose.msra.mxu0 0.0
      %2381 = vmatprep.mubr.f32.mxu0 0.0
      %2382 = vmatmul.mubr.f32.gmra.mxu0 %v2313
      %v2383 = vpop.f32.mrf.mxu0
      %v2384 = vadd.f32 0.0, %v2383
      %v2385 = vpop.f32.mrf.mxu0
      %2386 = vdwg.mxu0
      %v2387 = vmul.f32 %v1838, 0.35355338
      %v2388 = vmul.f32 %v1916, 0.35355338
      %v2389 = vmul.f32 %v1994, 0.35355338
      %v2390 = vmul.f32 %v2072, 0.35355338
      %v2391 = vmul.f32 %v2150, 0.35355338
      %v2392 = vmul.f32 %v2228, 0.35355338
      %v2393 = vmul.f32 %v2306, 0.35355338
      %v2394 = vmul.f32 %v2384, 0.35355338
      %v2395 = vadd.f32 %v2387, %v426
      %v2396 = vadd.f32 %v2388, %v427
      %v2397 = vadd.f32 %v2389, %v428
      %v2398 = vadd.f32 %v2390, %v429
      %v2399 = vadd.f32 %v2391, %v430
      %v2400 = vadd.f32 %v2392, %v431
      %v2401 = vadd.f32 %v2393, %v432
      %v2402 = vadd.f32 %v2394, %v433
      %v2403 = vsel %vm437, %v2395, -inf
      %2404 = vmax.xlane.f32.xlu0 %v2403
      %v2405 = vpop.xlane.xlu0 %2404
      %v2406 = vsel %vm437, %v2396, -inf
      %2407 = vmax.xlane.f32.xlu0 %v2406
      %v2408 = vpop.xlane.xlu0 %2407
      %v2409 = vsel %vm437, %v2397, -inf
      %2410 = vmax.xlane.f32.xlu0 %v2409
      %v2411 = vpop.xlane.xlu0 %2410
      %v2412 = vsel %vm437, %v2398, -inf
      %2413 = vmax.xlane.f32.xlu0 %v2412
      %v2414 = vpop.xlane.xlu0 %2413
      %v2415 = vsel %vm437, %v2399, -inf
      %2416 = vmax.xlane.f32.xlu0 %v2415
      %v2417 = vpop.xlane.xlu0 %2416
      %v2418 = vsel %vm437, %v2400, -inf
      %2419 = vmax.xlane.f32.xlu0 %v2418
      %v2420 = vpop.xlane.xlu0 %2419
      %v2421 = vsel %vm437, %v2401, -inf
      %2422 = vmax.xlane.f32.xlu0 %v2421
      %v2423 = vpop.xlane.xlu0 %2422
      %v2424 = vsel %vm437, %v2402, -inf
      %2425 = vmax.xlane.f32.xlu0 %v2424
      %v2426 = vpop.xlane.xlu0 %2425
      %v2427 = vsub.f32 %v2395, %v2405
      %v2428 = vsub.f32 %v2396, %v2408
      %v2429 = vsub.f32 %v2397, %v2411
      %v2430 = vsub.f32 %v2398, %v2414
      %v2431 = vsub.f32 %v2399, %v2417
      %v2432 = vsub.f32 %v2400, %v2420
      %v2433 = vsub.f32 %v2401, %v2423
      %v2434 = vsub.f32 %v2402, %v2426
      %v2435 = vmul.f32 %v2427, 1.442695
      %v2436 = vpow.pop %v2435
      %v2437 = vmul.f32 %v2428, 1.442695
      %v2438 = vpow.pop %v2437
      %v2439 = vmul.f32 %v2429, 1.442695
      %v2440 = vpow.pop %v2439
      %v2441 = vmul.f32 %v2430, 1.442695
      %v2442 = vpow.pop %v2441
      %v2443 = vmul.f32 %v2431, 1.442695
      %v2444 = vpow.pop %v2443
      %v2445 = vmul.f32 %v2432, 1.442695
      %v2446 = vpow.pop %v2445
      %v2447 = vmul.f32 %v2433, 1.442695
      %v2448 = vpow.pop %v2447
      %v2449 = vmul.f32 %v2434, 1.442695
      %v2450 = vpow.pop %v2449
      %v2451 = vsel %vm437, %v2436, 0.0
      %2452 = vadd.xlane.f32.xlu0 %v2451
      %v2453 = vpop.xlane.xlu0 %2452
      %v2454 = vsel %vm437, %v2438, 0.0
      %2455 = vadd.xlane.f32.xlu0 %v2454
      %v2456 = vpop.xlane.xlu0 %2455
      %v2457 = vsel %vm437, %v2440, 0.0
      %2458 = vadd.xlane.f32.xlu0 %v2457
      %v2459 = vpop.xlane.xlu0 %2458
      %v2460 = vsel %vm437, %v2442, 0.0
      %2461 = vadd.xlane.f32.xlu0 %v2460
      %v2462 = vpop.xlane.xlu0 %2461
      %v2463 = vsel %vm437, %v2444, 0.0
      %2464 = vadd.xlane.f32.xlu0 %v2463
      %v2465 = vpop.xlane.xlu0 %2464
      %v2466 = vsel %vm437, %v2446, 0.0
      %2467 = vadd.xlane.f32.xlu0 %v2466
      %v2468 = vpop.xlane.xlu0 %2467
      %v2469 = vsel %vm437, %v2448, 0.0
      %2470 = vadd.xlane.f32.xlu0 %v2469
      %v2471 = vpop.xlane.xlu0 %2470
      %v2472 = vsel %vm437, %v2450, 0.0
      %2473 = vadd.xlane.f32.xlu0 %v2472
      %v2474 = vpop.xlane.xlu0 %2473
      %v2475 = vrcp.pop %v2453
      %v2476 = vrcp.pop %v2456
      %v2477 = vrcp.pop %v2459
      %v2478 = vrcp.pop %v2462
      %v2479 = vrcp.pop %v2465
      %v2480 = vrcp.pop %v2468
      %v2481 = vrcp.pop %v2471
      %v2482 = vrcp.pop %v2474
      %v2483 = vmul.f32 %v2436, %v2475
      %v2484 = vmul.f32 %v2438, %v2476
      %v2485 = vmul.f32 %v2440, %v2477
      %v2486 = vmul.f32 %v2442, %v2478
      %v2487 = vmul.f32 %v2444, %v2479
      %v2488 = vmul.f32 %v2446, %v2480
      %v2489 = vmul.f32 %v2448, %v2481
      %v2490 = vmul.f32 %v2450, %v2482
      %2491 = vrot.lane.b32.xlu0 %v388, 56
      %v2492 = vpop.permute.xlu0 %2491
      %v2495 = vsel %vm437, %v2483, 0
      %2497 = vmatprep.subr.mxu0 0.0
      %2498 = vmatpush1.msra.mxu0 0.0
      %2499 = vmatprep.subr.mxu0 0.0
      %2500 = vmatpush1.msra.mxu0 0.0
      %2501 = vmatprep.subr.mxu0 0.0
      %2502 = vmatpush1.msra.mxu0 0.0
      %2503 = vmatprep.subr.mxu0 0.0
      %2504 = vmatpush1.msra.mxu0 0.0
      %2505 = vmatprep.subr.mxu0 0.0
      %2506 = vmatpush1.msra.mxu0 0.0
      %2507 = vmatprep.subr.mxu0 0.0
      %2508 = vmatpush1.msra.mxu0 0.0
      %2509 = vmatprep.subr.mxu0 0.0
      %2510 = vmatpush1.msra.mxu0 0.0
      %2511 = vmatprep.subr.mxu0 0.0
      %2512 = vmatpush1.msra.mxu0 0.0
      %2513 = vmatprep.subr.mxu0 0.0
      %2514 = vmatpush1.msra.mxu0 0.0
      %2515 = vmatprep.subr.mxu0 0.0
      %2516 = vmatpush1.msra.mxu0 0.0
      %2517 = vmatprep.subr.mxu0 0.0
      %2518 = vmatpush1.msra.mxu0 0.0
      %2519 = vmatprep.subr.mxu0 0.0
      %2520 = vmatpush1.msra.mxu0 0.0
      %2521 = vmatprep.subr.mxu0 0.0
      %2522 = vmatpush1.msra.mxu0 0.0
      %2523 = vmatprep.subr.mxu0 0.0
      %2524 = vmatpush1.msra.mxu0 0.0
      %2525 = vmatprep.subr.mxu0 0.0
      %2526 = vmatpush1.msra.mxu0 0.0
      %2527 = vmatprep.subr.mxu0 0.0
      %2528 = vmatpush1.msra.mxu0 %v2492
      %2529 = vmatprep.subr.mxu0 0.0
      %2530 = vmatpush2.msra.mxu0 0.0
      %2531 = vmatprep.subr.mxu0 0.0
      %2532 = vmatpush2.msra.mxu0 0.0
      %2533 = vmatprep.subr.mxu0 0.0
      %2534 = vmatpush2.msra.mxu0 0.0
      %2535 = vmatprep.subr.mxu0 0.0
      %2536 = vmatpush2.msra.mxu0 0.0
      %2537 = vmatprep.subr.mxu0 0.0
      %2538 = vmatpush2.msra.mxu0 0.0
      %2539 = vmatprep.subr.mxu0 0.0
      %2540 = vmatpush2.msra.mxu0 0.0
      %2541 = vmatprep.subr.mxu0 0.0
      %2542 = vmatpush2.msra.mxu0 0.0
      %2543 = vmatprep.subr.mxu0 0.0
      %2544 = vmatpush2.msra.mxu0 0.0
      %2545 = vmatprep.subr.mxu0 0.0
      %2546 = vmatpush2.msra.mxu0 0.0
      %2547 = vmatprep.subr.mxu0 0.0
      %2548 = vmatpush2.msra.mxu0 0.0
      %2549 = vmatprep.subr.mxu0 0.0
      %2550 = vmatpush2.msra.mxu0 0.0
      %2551 = vmatprep.subr.mxu0 0.0
      %2552 = vmatpush2.msra.mxu0 0.0
      %2553 = vmatprep.subr.mxu0 0.0
      %2554 = vmatpush2.msra.mxu0 0.0
      %2555 = vmatprep.subr.mxu0 0.0
      %2556 = vmatpush2.msra.mxu0 0.0
      %2557 = vmatprep.subr.mxu0 0.0
      %2558 = vmatpush2.msra.mxu0 0.0
      %2559 = vmatprep.subr.mxu0 0.0
      %2560 = vmatpush2.msra.mxu0 0.0
      %2561 = vmatprep.mubr.f32.mxu0 0.0
      %2562 = vmatmul.mubr.f32.gmra.mxu0 %v2495
      %v2563 = vpop.f32.mrf.mxu0
      %v2564 = vadd.f32 0.0, %v2563
      %v2565 = vpop.f32.mrf.mxu0
      %2566 = vdwg.mxu0
      %2567 = vrot.lane.b32.xlu0 %v393, 56
      %v2568 = vpop.permute.xlu0 %2567
      %v2571 = vsel %vm437, %v2484, 0
      %2573 = vmatprep.subr.mxu0 0.0
      %2574 = vmatpush1.msra.mxu0 0.0
      %2575 = vmatprep.subr.mxu0 0.0
      %2576 = vmatpush1.msra.mxu0 0.0
      %2577 = vmatprep.subr.mxu0 0.0
      %2578 = vmatpush1.msra.mxu0 0.0
      %2579 = vmatprep.subr.mxu0 0.0
      %2580 = vmatpush1.msra.mxu0 0.0
      %2581 = vmatprep.subr.mxu0 0.0
      %2582 = vmatpush1.msra.mxu0 0.0
      %2583 = vmatprep.subr.mxu0 0.0
      %2584 = vmatpush1.msra.mxu0 0.0
      %2585 = vmatprep.subr.mxu0 0.0
      %2586 = vmatpush1.msra.mxu0 0.0
      %2587 = vmatprep.subr.mxu0 0.0
      %2588 = vmatpush1.msra.mxu0 0.0
      %2589 = vmatprep.subr.mxu0 0.0
      %2590 = vmatpush1.msra.mxu0 0.0
      %2591 = vmatprep.subr.mxu0 0.0
      %2592 = vmatpush1.msra.mxu0 0.0
      %2593 = vmatprep.subr.mxu0 0.0
      %2594 = vmatpush1.msra.mxu0 0.0
      %2595 = vmatprep.subr.mxu0 0.0
      %2596 = vmatpush1.msra.mxu0 0.0
      %2597 = vmatprep.subr.mxu0 0.0
      %2598 = vmatpush1.msra.mxu0 0.0
      %2599 = vmatprep.subr.mxu0 0.0
      %2600 = vmatpush1.msra.mxu0 0.0
      %2601 = vmatprep.subr.mxu0 0.0
      %2602 = vmatpush1.msra.mxu0 0.0
      %2603 = vmatprep.subr.mxu0 0.0
      %2604 = vmatpush1.msra.mxu0 %v2568
      %2605 = vmatprep.subr.mxu0 0.0
      %2606 = vmatpush2.msra.mxu0 0.0
      %2607 = vmatprep.subr.mxu0 0.0
      %2608 = vmatpush2.msra.mxu0 0.0
      %2609 = vmatprep.subr.mxu0 0.0
      %2610 = vmatpush2.msra.mxu0 0.0
      %2611 = vmatprep.subr.mxu0 0.0
      %2612 = vmatpush2.msra.mxu0 0.0
      %2613 = vmatprep.subr.mxu0 0.0
      %2614 = vmatpush2.msra.mxu0 0.0
      %2615 = vmatprep.subr.mxu0 0.0
      %2616 = vmatpush2.msra.mxu0 0.0
      %2617 = vmatprep.subr.mxu0 0.0
      %2618 = vmatpush2.msra.mxu0 0.0
      %2619 = vmatprep.subr.mxu0 0.0
      %2620 = vmatpush2.msra.mxu0 0.0
      %2621 = vmatprep.subr.mxu0 0.0
      %2622 = vmatpush2.msra.mxu0 0.0
      %2623 = vmatprep.subr.mxu0 0.0
      %2624 = vmatpush2.msra.mxu0 0.0
      %2625 = vmatprep.subr.mxu0 0.0
      %2626 = vmatpush2.msra.mxu0 0.0
      %2627 = vmatprep.subr.mxu0 0.0
      %2628 = vmatpush2.msra.mxu0 0.0
      %2629 = vmatprep.subr.mxu0 0.0
      %2630 = vmatpush2.msra.mxu0 0.0
      %2631 = vmatprep.subr.mxu0 0.0
      %2632 = vmatpush2.msra.mxu0 0.0
      %2633 = vmatprep.subr.mxu0 0.0
      %2634 = vmatpush2.msra.mxu0 0.0
      %2635 = vmatprep.subr.mxu0 0.0
      %2636 = vmatpush2.msra.mxu0 0.0
      %2637 = vmatprep.mubr.f32.mxu0 0.0
      %2638 = vmatmul.mubr.f32.gmra.mxu0 %v2571
      %v2639 = vpop.f32.mrf.mxu0
      %v2640 = vadd.f32 0.0, %v2639
      %v2641 = vpop.f32.mrf.mxu0
      %2642 = vdwg.mxu0
      %2643 = vrot.lane.b32.xlu0 %v398, 56
      %v2644 = vpop.permute.xlu0 %2643
      %v2647 = vsel %vm437, %v2485, 0
      %2649 = vmatprep.subr.mxu0 0.0
      %2650 = vmatpush1.msra.mxu0 0.0
      %2651 = vmatprep.subr.mxu0 0.0
      %2652 = vmatpush1.msra.mxu0 0.0
      %2653 = vmatprep.subr.mxu0 0.0
      %2654 = vmatpush1.msra.mxu0 0.0
      %2655 = vmatprep.subr.mxu0 0.0
      %2656 = vmatpush1.msra.mxu0 0.0
      %2657 = vmatprep.subr.mxu0 0.0
      %2658 = vmatpush1.msra.mxu0 0.0
      %2659 = vmatprep.subr.mxu0 0.0
      %2660 = vmatpush1.msra.mxu0 0.0
      %2661 = vmatprep.subr.mxu0 0.0
      %2662 = vmatpush1.msra.mxu0 0.0
      %2663 = vmatprep.subr.mxu0 0.0
      %2664 = vmatpush1.msra.mxu0 0.0
      %2665 = vmatprep.subr.mxu0 0.0
      %2666 = vmatpush1.msra.mxu0 0.0
      %2667 = vmatprep.subr.mxu0 0.0
      %2668 = vmatpush1.msra.mxu0 0.0
      %2669 = vmatprep.subr.mxu0 0.0
      %2670 = vmatpush1.msra.mxu0 0.0
      %2671 = vmatprep.subr.mxu0 0.0
      %2672 = vmatpush1.msra.mxu0 0.0
      %2673 = vmatprep.subr.mxu0 0.0
      %2674 = vmatpush1.msra.mxu0 0.0
      %2675 = vmatprep.subr.mxu0 0.0
      %2676 = vmatpush1.msra.mxu0 0.0
      %2677 = vmatprep.subr.mxu0 0.0
      %2678 = vmatpush1.msra.mxu0 0.0
      %2679 = vmatprep.subr.mxu0 0.0
      %2680 = vmatpush1.msra.mxu0 %v2644
      %2681 = vmatprep.subr.mxu0 0.0
      %2682 = vmatpush2.msra.mxu0 0.0
      %2683 = vmatprep.subr.mxu0 0.0
      %2684 = vmatpush2.msra.mxu0 0.0
      %2685 = vmatprep.subr.mxu0 0.0
      %2686 = vmatpush2.msra.mxu0 0.0
      %2687 = vmatprep.subr.mxu0 0.0
      %2688 = vmatpush2.msra.mxu0 0.0
      %2689 = vmatprep.subr.mxu0 0.0
      %2690 = vmatpush2.msra.mxu0 0.0
      %2691 = vmatprep.subr.mxu0 0.0
      %2692 = vmatpush2.msra.mxu0 0.0
      %2693 = vmatprep.subr.mxu0 0.0
      %2694 = vmatpush2.msra.mxu0 0.0
      %2695 = vmatprep.subr.mxu0 0.0
      %2696 = vmatpush2.msra.mxu0 0.0
      %2697 = vmatprep.subr.mxu0 0.0
      %2698 = vmatpush2.msra.mxu0 0.0
      %2699 = vmatprep.subr.mxu0 0.0
      %2700 = vmatpush2.msra.mxu0 0.0
      %2701 = vmatprep.subr.mxu0 0.0
      %2702 = vmatpush2.msra.mxu0 0.0
      %2703 = vmatprep.subr.mxu0 0.0
      %2704 = vmatpush2.msra.mxu0 0.0
      %2705 = vmatprep.subr.mxu0 0.0
      %2706 = vmatpush2.msra.mxu0 0.0
      %2707 = vmatprep.subr.mxu0 0.0
      %2708 = vmatpush2.msra.mxu0 0.0
      %2709 = vmatprep.subr.mxu0 0.0
      %2710 = vmatpush2.msra.mxu0 0.0
      %2711 = vmatprep.subr.mxu0 0.0
      %2712 = vmatpush2.msra.mxu0 0.0
      %2713 = vmatprep.mubr.f32.mxu0 0.0
      %2714 = vmatmul.mubr.f32.gmra.mxu0 %v2647
      %v2715 = vpop.f32.mrf.mxu0
      %v2716 = vadd.f32 0.0, %v2715
      %v2717 = vpop.f32.mrf.mxu0
      %2718 = vdwg.mxu0
      %2719 = vrot.lane.b32.xlu0 %v403, 56
      %v2720 = vpop.permute.xlu0 %2719
      %v2723 = vsel %vm437, %v2486, 0
      %2725 = vmatprep.subr.mxu0 0.0
      %2726 = vmatpush1.msra.mxu0 0.0
      %2727 = vmatprep.subr.mxu0 0.0
      %2728 = vmatpush1.msra.mxu0 0.0
      %2729 = vmatprep.subr.mxu0 0.0
      %2730 = vmatpush1.msra.mxu0 0.0
      %2731 = vmatprep.subr.mxu0 0.0
      %2732 = vmatpush1.msra.mxu0 0.0
      %2733 = vmatprep.subr.mxu0 0.0
      %2734 = vmatpush1.msra.mxu0 0.0
      %2735 = vmatprep.subr.mxu0 0.0
      %2736 = vmatpush1.msra.mxu0 0.0
      %2737 = vmatprep.subr.mxu0 0.0
      %2738 = vmatpush1.msra.mxu0 0.0
      %2739 = vmatprep.subr.mxu0 0.0
      %2740 = vmatpush1.msra.mxu0 0.0
      %2741 = vmatprep.subr.mxu0 0.0
      %2742 = vmatpush1.msra.mxu0 0.0
      %2743 = vmatprep.subr.mxu0 0.0
      %2744 = vmatpush1.msra.mxu0 0.0
      %2745 = vmatprep.subr.mxu0 0.0
      %2746 = vmatpush1.msra.mxu0 0.0
      %2747 = vmatprep.subr.mxu0 0.0
      %2748 = vmatpush1.msra.mxu0 0.0
      %2749 = vmatprep.subr.mxu0 0.0
      %2750 = vmatpush1.msra.mxu0 0.0
      %2751 = vmatprep.subr.mxu0 0.0
      %2752 = vmatpush1.msra.mxu0 0.0
      %2753 = vmatprep.subr.mxu0 0.0
      %2754 = vmatpush1.msra.mxu0 0.0
      %2755 = vmatprep.subr.mxu0 0.0
      %2756 = vmatpush1.msra.mxu0 %v2720
      %2757 = vmatprep.subr.mxu0 0.0
      %2758 = vmatpush2.msra.mxu0 0.0
      %2759 = vmatprep.subr.mxu0 0.0
      %2760 = vmatpush2.msra.mxu0 0.0
      %2761 = vmatprep.subr.mxu0 0.0
      %2762 = vmatpush2.msra.mxu0 0.0
      %2763 = vmatprep.subr.mxu0 0.0
      %2764 = vmatpush2.msra.mxu0 0.0
      %2765 = vmatprep.subr.mxu0 0.0
      %2766 = vmatpush2.msra.mxu0 0.0
      %2767 = vmatprep.subr.mxu0 0.0
      %2768 = vmatpush2.msra.mxu0 0.0
      %2769 = vmatprep.subr.mxu0 0.0
      %2770 = vmatpush2.msra.mxu0 0.0
      %2771 = vmatprep.subr.mxu0 0.0
      %2772 = vmatpush2.msra.mxu0 0.0
      %2773 = vmatprep.subr.mxu0 0.0
      %2774 = vmatpush2.msra.mxu0 0.0
      %2775 = vmatprep.subr.mxu0 0.0
      %2776 = vmatpush2.msra.mxu0 0.0
      %2777 = vmatprep.subr.mxu0 0.0
      %2778 = vmatpush2.msra.mxu0 0.0
      %2779 = vmatprep.subr.mxu0 0.0
      %2780 = vmatpush2.msra.mxu0 0.0
      %2781 = vmatprep.subr.mxu0 0.0
      %2782 = vmatpush2.msra.mxu0 0.0
      %2783 = vmatprep.subr.mxu0 0.0
      %2784 = vmatpush2.msra.mxu0 0.0
      %2785 = vmatprep.subr.mxu0 0.0
      %2786 = vmatpush2.msra.mxu0 0.0
      %2787 = vmatprep.subr.mxu0 0.0
      %2788 = vmatpush2.msra.mxu0 0.0
      %2789 = vmatprep.mubr.f32.mxu0 0.0
      %2790 = vmatmul.mubr.f32.gmra.mxu0 %v2723
      %v2791 = vpop.f32.mrf.mxu0
      %v2792 = vadd.f32 0.0, %v2791
      %v2793 = vpop.f32.mrf.mxu0
      %2794 = vdwg.mxu0
      %2795 = vrot.lane.b32.xlu0 %v408, 56
      %v2796 = vpop.permute.xlu0 %2795
      %v2799 = vsel %vm437, %v2487, 0
      %2801 = vmatprep.subr.mxu0 0.0
      %2802 = vmatpush1.msra.mxu0 0.0
      %2803 = vmatprep.subr.mxu0 0.0
      %2804 = vmatpush1.msra.mxu0 0.0
      %2805 = vmatprep.subr.mxu0 0.0
      %2806 = vmatpush1.msra.mxu0 0.0
      %2807 = vmatprep.subr.mxu0 0.0
      %2808 = vmatpush1.msra.mxu0 0.0
      %2809 = vmatprep.subr.mxu0 0.0
      %2810 = vmatpush1.msra.mxu0 0.0
      %2811 = vmatprep.subr.mxu0 0.0
      %2812 = vmatpush1.msra.mxu0 0.0
      %2813 = vmatprep.subr.mxu0 0.0
      %2814 = vmatpush1.msra.mxu0 0.0
      %2815 = vmatprep.subr.mxu0 0.0
      %2816 = vmatpush1.msra.mxu0 0.0
      %2817 = vmatprep.subr.mxu0 0.0
      %2818 = vmatpush1.msra.mxu0 0.0
      %2819 = vmatprep.subr.mxu0 0.0
      %2820 = vmatpush1.msra.mxu0 0.0
      %2821 = vmatprep.subr.mxu0 0.0
      %2822 = vmatpush1.msra.mxu0 0.0
      %2823 = vmatprep.subr.mxu0 0.0
      %2824 = vmatpush1.msra.mxu0 0.0
      %2825 = vmatprep.subr.mxu0 0.0
      %2826 = vmatpush1.msra.mxu0 0.0
      %2827 = vmatprep.subr.mxu0 0.0
      %2828 = vmatpush1.msra.mxu0 0.0
      %2829 = vmatprep.subr.mxu0 0.0
      %2830 = vmatpush1.msra.mxu0 0.0
      %2831 = vmatprep.subr.mxu0 0.0
      %2832 = vmatpush1.msra.mxu0 %v2796
      %2833 = vmatprep.subr.mxu0 0.0
      %2834 = vmatpush2.msra.mxu0 0.0
      %2835 = vmatprep.subr.mxu0 0.0
      %2836 = vmatpush2.msra.mxu0 0.0
      %2837 = vmatprep.subr.mxu0 0.0
      %2838 = vmatpush2.msra.mxu0 0.0
      %2839 = vmatprep.subr.mxu0 0.0
      %2840 = vmatpush2.msra.mxu0 0.0
      %2841 = vmatprep.subr.mxu0 0.0
      %2842 = vmatpush2.msra.mxu0 0.0
      %2843 = vmatprep.subr.mxu0 0.0
      %2844 = vmatpush2.msra.mxu0 0.0
      %2845 = vmatprep.subr.mxu0 0.0
      %2846 = vmatpush2.msra.mxu0 0.0
      %2847 = vmatprep.subr.mxu0 0.0
      %2848 = vmatpush2.msra.mxu0 0.0
      %2849 = vmatprep.subr.mxu0 0.0
      %2850 = vmatpush2.msra.mxu0 0.0
      %2851 = vmatprep.subr.mxu0 0.0
      %2852 = vmatpush2.msra.mxu0 0.0
      %2853 = vmatprep.subr.mxu0 0.0
      %2854 = vmatpush2.msra.mxu0 0.0
      %2855 = vmatprep.subr.mxu0 0.0
      %2856 = vmatpush2.msra.mxu0 0.0
      %2857 = vmatprep.subr.mxu0 0.0
      %2858 = vmatpush2.msra.mxu0 0.0
      %2859 = vmatprep.subr.mxu0 0.0
      %2860 = vmatpush2.msra.mxu0 0.0
      %2861 = vmatprep.subr.mxu0 0.0
      %2862 = vmatpush2.msra.mxu0 0.0
      %2863 = vmatprep.subr.mxu0 0.0
      %2864 = vmatpush2.msra.mxu0 0.0
      %2865 = vmatprep.mubr.f32.mxu0 0.0
      %2866 = vmatmul.mubr.f32.gmra.mxu0 %v2799
      %v2867 = vpop.f32.mrf.mxu0
      %v2868 = vadd.f32 0.0, %v2867
      %v2869 = vpop.f32.mrf.mxu0
      %2870 = vdwg.mxu0
      %2871 = vrot.lane.b32.xlu0 %v413, 56
      %v2872 = vpop.permute.xlu0 %2871
      %v2875 = vsel %vm437, %v2488, 0
      %2877 = vmatprep.subr.mxu0 0.0
      %2878 = vmatpush1.msra.mxu0 0.0
      %2879 = vmatprep.subr.mxu0 0.0
      %2880 = vmatpush1.msra.mxu0 0.0
      %2881 = vmatprep.subr.mxu0 0.0
      %2882 = vmatpush1.msra.mxu0 0.0
      %2883 = vmatprep.subr.mxu0 0.0
      %2884 = vmatpush1.msra.mxu0 0.0
      %2885 = vmatprep.subr.mxu0 0.0
      %2886 = vmatpush1.msra.mxu0 0.0
      %2887 = vmatprep.subr.mxu0 0.0
      %2888 = vmatpush1.msra.mxu0 0.0
      %2889 = vmatprep.subr.mxu0 0.0
      %2890 = vmatpush1.msra.mxu0 0.0
      %2891 = vmatprep.subr.mxu0 0.0
      %2892 = vmatpush1.msra.mxu0 0.0
      %2893 = vmatprep.subr.mxu0 0.0
      %2894 = vmatpush1.msra.mxu0 0.0
      %2895 = vmatprep.subr.mxu0 0.0
      %2896 = vmatpush1.msra.mxu0 0.0
      %2897 = vmatprep.subr.mxu0 0.0
      %2898 = vmatpush1.msra.mxu0 0.0
      %2899 = vmatprep.subr.mxu0 0.0
      %2900 = vmatpush1.msra.mxu0 0.0
      %2901 = vmatprep.subr.mxu0 0.0
      %2902 = vmatpush1.msra.mxu0 0.0
      %2903 = vmatprep.subr.mxu0 0.0
      %2904 = vmatpush1.msra.mxu0 0.0
      %2905 = vmatprep.subr.mxu0 0.0
      %2906 = vmatpush1.msra.mxu0 0.0
      %2907 = vmatprep.subr.mxu0 0.0
      %2908 = vmatpush1.msra.mxu0 %v2872
      %2909 = vmatprep.subr.mxu0 0.0
      %2910 = vmatpush2.msra.mxu0 0.0
      %2911 = vmatprep.subr.mxu0 0.0
      %2912 = vmatpush2.msra.mxu0 0.0
      %2913 = vmatprep.subr.mxu0 0.0
      %2914 = vmatpush2.msra.mxu0 0.0
      %2915 = vmatprep.subr.mxu0 0.0
      %2916 = vmatpush2.msra.mxu0 0.0
      %2917 = vmatprep.subr.mxu0 0.0
      %2918 = vmatpush2.msra.mxu0 0.0
      %2919 = vmatprep.subr.mxu0 0.0
      %2920 = vmatpush2.msra.mxu0 0.0
      %2921 = vmatprep.subr.mxu0 0.0
      %2922 = vmatpush2.msra.mxu0 0.0
      %2923 = vmatprep.subr.mxu0 0.0
      %2924 = vmatpush2.msra.mxu0 0.0
      %2925 = vmatprep.subr.mxu0 0.0
      %2926 = vmatpush2.msra.mxu0 0.0
      %2927 = vmatprep.subr.mxu0 0.0
      %2928 = vmatpush2.msra.mxu0 0.0
      %2929 = vmatprep.subr.mxu0 0.0
      %2930 = vmatpush2.msra.mxu0 0.0
      %2931 = vmatprep.subr.mxu0 0.0
      %2932 = vmatpush2.msra.mxu0 0.0
      %2933 = vmatprep.subr.mxu0 0.0
      %2934 = vmatpush2.msra.mxu0 0.0
      %2935 = vmatprep.subr.mxu0 0.0
      %2936 = vmatpush2.msra.mxu0 0.0
      %2937 = vmatprep.subr.mxu0 0.0
      %2938 = vmatpush2.msra.mxu0 0.0
      %2939 = vmatprep.subr.mxu0 0.0
      %2940 = vmatpush2.msra.mxu0 0.0
      %2941 = vmatprep.mubr.f32.mxu0 0.0
      %2942 = vmatmul.mubr.f32.gmra.mxu0 %v2875
      %v2943 = vpop.f32.mrf.mxu0
      %v2944 = vadd.f32 0.0, %v2943
      %v2945 = vpop.f32.mrf.mxu0
      %2946 = vdwg.mxu0
      %2947 = vrot.lane.b32.xlu0 %v418, 56
      %v2948 = vpop.permute.xlu0 %2947
      %v2951 = vsel %vm437, %v2489, 0
      %2953 = vmatprep.subr.mxu0 0.0
      %2954 = vmatpush1.msra.mxu0 0.0
      %2955 = vmatprep.subr.mxu0 0.0
      %2956 = vmatpush1.msra.mxu0 0.0
      %2957 = vmatprep.subr.mxu0 0.0
      %2958 = vmatpush1.msra.mxu0 0.0
      %2959 = vmatprep.subr.mxu0 0.0
      %2960 = vmatpush1.msra.mxu0 0.0
      %2961 = vmatprep.subr.mxu0 0.0
      %2962 = vmatpush1.msra.mxu0 0.0
      %2963 = vmatprep.subr.mxu0 0.0
      %2964 = vmatpush1.msra.mxu0 0.0
      %2965 = vmatprep.subr.mxu0 0.0
      %2966 = vmatpush1.msra.mxu0 0.0
      %2967 = vmatprep.subr.mxu0 0.0
      %2968 = vmatpush1.msra.mxu0 0.0
      %2969 = vmatprep.subr.mxu0 0.0
      %2970 = vmatpush1.msra.mxu0 0.0
      %2971 = vmatprep.subr.mxu0 0.0
      %2972 = vmatpush1.msra.mxu0 0.0
      %2973 = vmatprep.subr.mxu0 0.0
      %2974 = vmatpush1.msra.mxu0 0.0
      %2975 = vmatprep.subr.mxu0 0.0
      %2976 = vmatpush1.msra.mxu0 0.0
      %2977 = vmatprep.subr.mxu0 0.0
      %2978 = vmatpush1.msra.mxu0 0.0
      %2979 = vmatprep.subr.mxu0 0.0
      %2980 = vmatpush1.msra.mxu0 0.0
      %2981 = vmatprep.subr.mxu0 0.0
      %2982 = vmatpush1.msra.mxu0 0.0
      %2983 = vmatprep.subr.mxu0 0.0
      %2984 = vmatpush1.msra.mxu0 %v2948
      %2985 = vmatprep.subr.mxu0 0.0
      %2986 = vmatpush2.msra.mxu0 0.0
      %2987 = vmatprep.subr.mxu0 0.0
      %2988 = vmatpush2.msra.mxu0 0.0
      %2989 = vmatprep.subr.mxu0 0.0
      %2990 = vmatpush2.msra.mxu0 0.0
      %2991 = vmatprep.subr.mxu0 0.0
      %2992 = vmatpush2.msra.mxu0 0.0
      %2993 = vmatprep.subr.mxu0 0.0
      %2994 = vmatpush2.msra.mxu0 0.0
      %2995 = vmatprep.subr.mxu0 0.0
      %2996 = vmatpush2.msra.mxu0 0.0
      %2997 = vmatprep.subr.mxu0 0.0
      %2998 = vmatpush2.msra.mxu0 0.0
      %2999 = vmatprep.subr.mxu0 0.0
      %3000 = vmatpush2.msra.mxu0 0.0
      %3001 = vmatprep.subr.mxu0 0.0
      %3002 = vmatpush2.msra.mxu0 0.0
      %3003 = vmatprep.subr.mxu0 0.0
      %3004 = vmatpush2.msra.mxu0 0.0
      %3005 = vmatprep.subr.mxu0 0.0
      %3006 = vmatpush2.msra.mxu0 0.0
      %3007 = vmatprep.subr.mxu0 0.0
      %3008 = vmatpush2.msra.mxu0 0.0
      %3009 = vmatprep.subr.mxu0 0.0
      %3010 = vmatpush2.msra.mxu0 0.0
      %3011 = vmatprep.subr.mxu0 0.0
      %3012 = vmatpush2.msra.mxu0 0.0
      %3013 = vmatprep.subr.mxu0 0.0
      %3014 = vmatpush2.msra.mxu0 0.0
      %3015 = vmatprep.subr.mxu0 0.0
      %3016 = vmatpush2.msra.mxu0 0.0
      %3017 = vmatprep.mubr.f32.mxu0 0.0
      %3018 = vmatmul.mubr.f32.gmra.mxu0 %v2951
      %v3019 = vpop.f32.mrf.mxu0
      %v3020 = vadd.f32 0.0, %v3019
      %v3021 = vpop.f32.mrf.mxu0
      %3022 = vdwg.mxu0
      %3023 = vrot.lane.b32.xlu0 %v423, 56
      %v3024 = vpop.permute.xlu0 %3023
      %v3027 = vsel %vm437, %v2490, 0
      %3029 = vmatprep.subr.mxu0 0.0
      %3030 = vmatpush1.msra.mxu0 0.0
      %3031 = vmatprep.subr.mxu0 0.0
      %3032 = vmatpush1.msra.mxu0 0.0
      %3033 = vmatprep.subr.mxu0 0.0
      %3034 = vmatpush1.msra.mxu0 0.0
      %3035 = vmatprep.subr.mxu0 0.0
      %3036 = vmatpush1.msra.mxu0 0.0
      %3037 = vmatprep.subr.mxu0 0.0
      %3038 = vmatpush1.msra.mxu0 0.0
      %3039 = vmatprep.subr.mxu0 0.0
      %3040 = vmatpush1.msra.mxu0 0.0
      %3041 = vmatprep.subr.mxu0 0.0
      %3042 = vmatpush1.msra.mxu0 0.0
      %3043 = vmatprep.subr.mxu0 0.0
      %3044 = vmatpush1.msra.mxu0 0.0
      %3045 = vmatprep.subr.mxu0 0.0
      %3046 = vmatpush1.msra.mxu0 0.0
      %3047 = vmatprep.subr.mxu0 0.0
      %3048 = vmatpush1.msra.mxu0 0.0
      %3049 = vmatprep.subr.mxu0 0.0
      %3050 = vmatpush1.msra.mxu0 0.0
      %3051 = vmatprep.subr.mxu0 0.0
      %3052 = vmatpush1.msra.mxu0 0.0
      %3053 = vmatprep.subr.mxu0 0.0
      %3054 = vmatpush1.msra.mxu0 0.0
      %3055 = vmatprep.subr.mxu0 0.0
      %3056 = vmatpush1.msra.mxu0 0.0
      %3057 = vmatprep.subr.mxu0 0.0
      %3058 = vmatpush1.msra.mxu0 0.0
      %3059 = vmatprep.subr.mxu0 0.0
      %3060 = vmatpush1.msra.mxu0 %v3024
      %3061 = vmatprep.subr.mxu0 0.0
      %3062 = vmatpush2.msra.mxu0 0.0
      %3063 = vmatprep.subr.mxu0 0.0
      %3064 = vmatpush2.msra.mxu0 0.0
      %3065 = vmatprep.subr.mxu0 0.0
      %3066 = vmatpush2.msra.mxu0 0.0
      %3067 = vmatprep.subr.mxu0 0.0
      %3068 = vmatpush2.msra.mxu0 0.0
      %3069 = vmatprep.subr.mxu0 0.0
      %3070 = vmatpush2.msra.mxu0 0.0
      %3071 = vmatprep.subr.mxu0 0.0
      %3072 = vmatpush2.msra.mxu0 0.0
      %3073 = vmatprep.subr.mxu0 0.0
      %3074 = vmatpush2.msra.mxu0 0.0
      %3075 = vmatprep.subr.mxu0 0.0
      %3076 = vmatpush2.msra.mxu0 0.0
      %3077 = vmatprep.subr.mxu0 0.0
      %3078 = vmatpush2.msra.mxu0 0.0
      %3079 = vmatprep.subr.mxu0 0.0
      %3080 = vmatpush2.msra.mxu0 0.0
      %3081 = vmatprep.subr.mxu0 0.0
      %3082 = vmatpush2.msra.mxu0 0.0
      %3083 = vmatprep.subr.mxu0 0.0
      %3084 = vmatpush2.msra.mxu0 0.0
      %3085 = vmatprep.subr.mxu0 0.0
      %3086 = vmatpush2.msra.mxu0 0.0
      %3087 = vmatprep.subr.mxu0 0.0
      %3088 = vmatpush2.msra.mxu0 0.0
      %3089 = vmatprep.subr.mxu0 0.0
      %3090 = vmatpush2.msra.mxu0 0.0
      %3091 = vmatprep.subr.mxu0 0.0
      %3092 = vmatpush2.msra.mxu0 0.0
      %3093 = vmatprep.mubr.f32.mxu0 0.0
      %3094 = vmatmul.mubr.f32.gmra.mxu0 %v3027
      %v3095 = vpop.f32.mrf.mxu0
      %v3096 = vadd.f32 0.0, %v3095
      %v3097 = vpop.f32.mrf.mxu0
      %3098 = vdwg.mxu0
      %3099 = vrot.lane.b32.xlu0 %v388, 112
      %v3100 = vpop.permute.xlu0 %3099
      %3101 = vrot.lane.b32.xlu0 %v388, 80
      %v3102 = vpop.permute.xlu0 %3101
      %v3103 = vsel %vm437, %v3100, 0
      %v3105 = vsel %vm437, %v3102, 0
      %3107 = vmatprep.subr.mxu0 0.0
      %3108 = vmatpush1.xpose.msra.mxu0 0.0
      %3109 = vmatprep.subr.mxu0 0.0
      %3110 = vmatpush1.xpose.msra.mxu0 0.0
      %3111 = vmatprep.subr.mxu0 0.0
      %3112 = vmatpush1.xpose.msra.mxu0 0.0
      %3113 = vmatprep.subr.mxu0 0.0
      %3114 = vmatpush1.xpose.msra.mxu0 0.0
      %3115 = vmatprep.subr.mxu0 0.0
      %3116 = vmatpush1.xpose.msra.mxu0 0.0
      %3117 = vmatprep.subr.mxu0 0.0
      %3118 = vmatpush1.xpose.msra.mxu0 0.0
      %3119 = vmatprep.subr.mxu0 0.0
      %3120 = vmatpush1.xpose.msra.mxu0 0.0
      %3121 = vmatprep.subr.mxu0 0.0
      %3122 = vmatpush1.xpose.msra.mxu0 0.0
      %3123 = vmatprep.subr.mxu0 0.0
      %3124 = vmatpush1.xpose.msra.mxu0 0.0
      %3125 = vmatprep.subr.mxu0 0.0
      %3126 = vmatpush1.xpose.msra.mxu0 0.0
      %3127 = vmatprep.subr.mxu0 0.0
      %3128 = vmatpush1.xpose.msra.mxu0 0.0
      %3129 = vmatprep.subr.mxu0 0.0
      %3130 = vmatpush1.xpose.msra.mxu0 0.0
      %3131 = vmatprep.subr.mxu0 0.0
      %3132 = vmatpush1.xpose.msra.mxu0 0.0
      %3133 = vmatprep.subr.mxu0 0.0
      %3134 = vmatpush1.xpose.msra.mxu0 0.0
      %3135 = vmatprep.subr.mxu0 0.0
      %3136 = vmatpush1.xpose.msra.mxu0 0.0
      %3137 = vmatprep.subr.mxu0 0.0
      %3138 = vmatpush1.xpose.msra.mxu0 %v3105
      %3139 = vmatprep.subr.mxu0 0.0
      %3140 = vmatpush2.xpose.msra.mxu0 0.0
      %3141 = vmatprep.subr.mxu0 0.0
      %3142 = vmatpush2.xpose.msra.mxu0 0.0
      %3143 = vmatprep.subr.mxu0 0.0
      %3144 = vmatpush2.xpose.msra.mxu0 0.0
      %3145 = vmatprep.subr.mxu0 0.0
      %3146 = vmatpush2.xpose.msra.mxu0 0.0
      %3147 = vmatprep.subr.mxu0 0.0
      %3148 = vmatpush2.xpose.msra.mxu0 0.0
      %3149 = vmatprep.subr.mxu0 0.0
      %3150 = vmatpush2.xpose.msra.mxu0 0.0
      %3151 = vmatprep.subr.mxu0 0.0
      %3152 = vmatpush2.xpose.msra.mxu0 0.0
      %3153 = vmatprep.subr.mxu0 0.0
      %3154 = vmatpush2.xpose.msra.mxu0 0.0
      %3155 = vmatprep.subr.mxu0 0.0
      %3156 = vmatpush2.xpose.msra.mxu0 0.0
      %3157 = vmatprep.subr.mxu0 0.0
      %3158 = vmatpush2.xpose.msra.mxu0 0.0
      %3159 = vmatprep.subr.mxu0 0.0
      %3160 = vmatpush2.xpose.msra.mxu0 0.0
      %3161 = vmatprep.subr.mxu0 0.0
      %3162 = vmatpush2.xpose.msra.mxu0 0.0
      %3163 = vmatprep.subr.mxu0 0.0
      %3164 = vmatpush2.xpose.msra.mxu0 0.0
      %3165 = vmatprep.subr.mxu0 0.0
      %3166 = vmatpush2.xpose.msra.mxu0 0.0
      %3167 = vmatprep.subr.mxu0 0.0
      %3168 = vmatpush2.xpose.msra.mxu0 0.0
      %3169 = vmatprep.subr.mxu0 0.0
      %3170 = vmatpush2.xpose.msra.mxu0 0.0
      %3171 = vmatprep.mubr.f32.mxu0 0.0
      %3172 = vmatmul.mubr.f32.gmra.mxu0 %v3103
      %v3173 = vpop.f32.mrf.mxu0
      %v3174 = vadd.f32 0.0, %v3173
      %v3175 = vpop.f32.mrf.mxu0
      %3176 = vdwg.mxu0
      %3177 = vrot.lane.b32.xlu0 %v393, 112
      %v3178 = vpop.permute.xlu0 %3177
      %3179 = vrot.lane.b32.xlu0 %v393, 80
      %v3180 = vpop.permute.xlu0 %3179
      %v3181 = vsel %vm437, %v3178, 0
      %v3183 = vsel %vm437, %v3180, 0
      %3185 = vmatprep.subr.mxu0 0.0
      %3186 = vmatpush1.xpose.msra.mxu0 0.0
      %3187 = vmatprep.subr.mxu0 0.0
      %3188 = vmatpush1.xpose.msra.mxu0 0.0
      %3189 = vmatprep.subr.mxu0 0.0
      %3190 = vmatpush1.xpose.msra.mxu0 0.0
      %3191 = vmatprep.subr.mxu0 0.0
      %3192 = vmatpush1.xpose.msra.mxu0 0.0
      %3193 = vmatprep.subr.mxu0 0.0
      %3194 = vmatpush1.xpose.msra.mxu0 0.0
      %3195 = vmatprep.subr.mxu0 0.0
      %3196 = vmatpush1.xpose.msra.mxu0 0.0
      %3197 = vmatprep.subr.mxu0 0.0
      %3198 = vmatpush1.xpose.msra.mxu0 0.0
      %3199 = vmatprep.subr.mxu0 0.0
      %3200 = vmatpush1.xpose.msra.mxu0 0.0
      %3201 = vmatprep.subr.mxu0 0.0
      %3202 = vmatpush1.xpose.msra.mxu0 0.0
      %3203 = vmatprep.subr.mxu0 0.0
      %3204 = vmatpush1.xpose.msra.mxu0 0.0
      %3205 = vmatprep.subr.mxu0 0.0
      %3206 = vmatpush1.xpose.msra.mxu0 0.0
      %3207 = vmatprep.subr.mxu0 0.0
      %3208 = vmatpush1.xpose.msra.mxu0 0.0
      %3209 = vmatprep.subr.mxu0 0.0
      %3210 = vmatpush1.xpose.msra.mxu0 0.0
      %3211 = vmatprep.subr.mxu0 0.0
      %3212 = vmatpush1.xpose.msra.mxu0 0.0
      %3213 = vmatprep.subr.mxu0 0.0
      %3214 = vmatpush1.xpose.msra.mxu0 0.0
      %3215 = vmatprep.subr.mxu0 0.0
      %3216 = vmatpush1.xpose.msra.mxu0 %v3183
      %3217 = vmatprep.subr.mxu0 0.0
      %3218 = vmatpush2.xpose.msra.mxu0 0.0
      %3219 = vmatprep.subr.mxu0 0.0
      %3220 = vmatpush2.xpose.msra.mxu0 0.0
      %3221 = vmatprep.subr.mxu0 0.0
      %3222 = vmatpush2.xpose.msra.mxu0 0.0
      %3223 = vmatprep.subr.mxu0 0.0
      %3224 = vmatpush2.xpose.msra.mxu0 0.0
      %3225 = vmatprep.subr.mxu0 0.0
      %3226 = vmatpush2.xpose.msra.mxu0 0.0
      %3227 = vmatprep.subr.mxu0 0.0
      %3228 = vmatpush2.xpose.msra.mxu0 0.0
      %3229 = vmatprep.subr.mxu0 0.0
      %3230 = vmatpush2.xpose.msra.mxu0 0.0
      %3231 = vmatprep.subr.mxu0 0.0
      %3232 = vmatpush2.xpose.msra.mxu0 0.0
      %3233 = vmatprep.subr.mxu0 0.0
      %3234 = vmatpush2.xpose.msra.mxu0 0.0
      %3235 = vmatprep.subr.mxu0 0.0
      %3236 = vmatpush2.xpose.msra.mxu0 0.0
      %3237 = vmatprep.subr.mxu0 0.0
      %3238 = vmatpush2.xpose.msra.mxu0 0.0
      %3239 = vmatprep.subr.mxu0 0.0
      %3240 = vmatpush2.xpose.msra.mxu0 0.0
      %3241 = vmatprep.subr.mxu0 0.0
      %3242 = vmatpush2.xpose.msra.mxu0 0.0
      %3243 = vmatprep.subr.mxu0 0.0
      %3244 = vmatpush2.xpose.msra.mxu0 0.0
      %3245 = vmatprep.subr.mxu0 0.0
      %3246 = vmatpush2.xpose.msra.mxu0 0.0
      %3247 = vmatprep.subr.mxu0 0.0
      %3248 = vmatpush2.xpose.msra.mxu0 0.0
      %3249 = vmatprep.mubr.f32.mxu0 0.0
      %3250 = vmatmul.mubr.f32.gmra.mxu0 %v3181
      %v3251 = vpop.f32.mrf.mxu0
      %v3252 = vadd.f32 0.0, %v3251
      %v3253 = vpop.f32.mrf.mxu0
      %3254 = vdwg.mxu0
      %3255 = vrot.lane.b32.xlu0 %v398, 112
      %v3256 = vpop.permute.xlu0 %3255
      %3257 = vrot.lane.b32.xlu0 %v398, 80
      %v3258 = vpop.permute.xlu0 %3257
      %v3259 = vsel %vm437, %v3256, 0
      %v3261 = vsel %vm437, %v3258, 0
      %3263 = vmatprep.subr.mxu0 0.0
      %3264 = vmatpush1.xpose.msra.mxu0 0.0
      %3265 = vmatprep.subr.mxu0 0.0
      %3266 = vmatpush1.xpose.msra.mxu0 0.0
      %3267 = vmatprep.subr.mxu0 0.0
      %3268 = vmatpush1.xpose.msra.mxu0 0.0
      %3269 = vmatprep.subr.mxu0 0.0
      %3270 = vmatpush1.xpose.msra.mxu0 0.0
      %3271 = vmatprep.subr.mxu0 0.0
      %3272 = vmatpush1.xpose.msra.mxu0 0.0
      %3273 = vmatprep.subr.mxu0 0.0
      %3274 = vmatpush1.xpose.msra.mxu0 0.0
      %3275 = vmatprep.subr.mxu0 0.0
      %3276 = vmatpush1.xpose.msra.mxu0 0.0
      %3277 = vmatprep.subr.mxu0 0.0
      %3278 = vmatpush1.xpose.msra.mxu0 0.0
      %3279 = vmatprep.subr.mxu0 0.0
      %3280 = vmatpush1.xpose.msra.mxu0 0.0
      %3281 = vmatprep.subr.mxu0 0.0
      %3282 = vmatpush1.xpose.msra.mxu0 0.0
      %3283 = vmatprep.subr.mxu0 0.0
      %3284 = vmatpush1.xpose.msra.mxu0 0.0
      %3285 = vmatprep.subr.mxu0 0.0
      %3286 = vmatpush1.xpose.msra.mxu0 0.0
      %3287 = vmatprep.subr.mxu0 0.0
      %3288 = vmatpush1.xpose.msra.mxu0 0.0
      %3289 = vmatprep.subr.mxu0 0.0
      %3290 = vmatpush1.xpose.msra.mxu0 0.0
      %3291 = vmatprep.subr.mxu0 0.0
      %3292 = vmatpush1.xpose.msra.mxu0 0.0
      %3293 = vmatprep.subr.mxu0 0.0
      %3294 = vmatpush1.xpose.msra.mxu0 %v3261
      %3295 = vmatprep.subr.mxu0 0.0
      %3296 = vmatpush2.xpose.msra.mxu0 0.0
      %3297 = vmatprep.subr.mxu0 0.0
      %3298 = vmatpush2.xpose.msra.mxu0 0.0
      %3299 = vmatprep.subr.mxu0 0.0
      %3300 = vmatpush2.xpose.msra.mxu0 0.0
      %3301 = vmatprep.subr.mxu0 0.0
      %3302 = vmatpush2.xpose.msra.mxu0 0.0
      %3303 = vmatprep.subr.mxu0 0.0
      %3304 = vmatpush2.xpose.msra.mxu0 0.0
      %3305 = vmatprep.subr.mxu0 0.0
      %3306 = vmatpush2.xpose.msra.mxu0 0.0
      %3307 = vmatprep.subr.mxu0 0.0
      %3308 = vmatpush2.xpose.msra.mxu0 0.0
      %3309 = vmatprep.subr.mxu0 0.0
      %3310 = vmatpush2.xpose.msra.mxu0 0.0
      %3311 = vmatprep.subr.mxu0 0.0
      %3312 = vmatpush2.xpose.msra.mxu0 0.0
      %3313 = vmatprep.subr.mxu0 0.0
      %3314 = vmatpush2.xpose.msra.mxu0 0.0
      %3315 = vmatprep.subr.mxu0 0.0
      %3316 = vmatpush2.xpose.msra.mxu0 0.0
      %3317 = vmatprep.subr.mxu0 0.0
      %3318 = vmatpush2.xpose.msra.mxu0 0.0
      %3319 = vmatprep.subr.mxu0 0.0
      %3320 = vmatpush2.xpose.msra.mxu0 0.0
      %3321 = vmatprep.subr.mxu0 0.0
      %3322 = vmatpush2.xpose.msra.mxu0 0.0
      %3323 = vmatprep.subr.mxu0 0.0
      %3324 = vmatpush2.xpose.msra.mxu0 0.0
      %3325 = vmatprep.subr.mxu0 0.0
      %3326 = vmatpush2.xpose.msra.mxu0 0.0
      %3327 = vmatprep.mubr.f32.mxu0 0.0
      %3328 = vmatmul.mubr.f32.gmra.mxu0 %v3259
      %v3329 = vpop.f32.mrf.mxu0
      %v3330 = vadd.f32 0.0, %v3329
      %v3331 = vpop.f32.mrf.mxu0
      %3332 = vdwg.mxu0
      %3333 = vrot.lane.b32.xlu0 %v403, 112
      %v3334 = vpop.permute.xlu0 %3333
      %3335 = vrot.lane.b32.xlu0 %v403, 80
      %v3336 = vpop.permute.xlu0 %3335
      %v3337 = vsel %vm437, %v3334, 0
      %v3339 = vsel %vm437, %v3336, 0
      %3341 = vmatprep.subr.mxu0 0.0
      %3342 = vmatpush1.xpose.msra.mxu0 0.0
      %3343 = vmatprep.subr.mxu0 0.0
      %3344 = vmatpush1.xpose.msra.mxu0 0.0
      %3345 = vmatprep.subr.mxu0 0.0
      %3346 = vmatpush1.xpose.msra.mxu0 0.0
      %3347 = vmatprep.subr.mxu0 0.0
      %3348 = vmatpush1.xpose.msra.mxu0 0.0
      %3349 = vmatprep.subr.mxu0 0.0
      %3350 = vmatpush1.xpose.msra.mxu0 0.0
      %3351 = vmatprep.subr.mxu0 0.0
      %3352 = vmatpush1.xpose.msra.mxu0 0.0
      %3353 = vmatprep.subr.mxu0 0.0
      %3354 = vmatpush1.xpose.msra.mxu0 0.0
      %3355 = vmatprep.subr.mxu0 0.0
      %3356 = vmatpush1.xpose.msra.mxu0 0.0
      %3357 = vmatprep.subr.mxu0 0.0
      %3358 = vmatpush1.xpose.msra.mxu0 0.0
      %3359 = vmatprep.subr.mxu0 0.0
      %3360 = vmatpush1.xpose.msra.mxu0 0.0
      %3361 = vmatprep.subr.mxu0 0.0
      %3362 = vmatpush1.xpose.msra.mxu0 0.0
      %3363 = vmatprep.subr.mxu0 0.0
      %3364 = vmatpush1.xpose.msra.mxu0 0.0
      %3365 = vmatprep.subr.mxu0 0.0
      %3366 = vmatpush1.xpose.msra.mxu0 0.0
      %3367 = vmatprep.subr.mxu0 0.0
      %3368 = vmatpush1.xpose.msra.mxu0 0.0
      %3369 = vmatprep.subr.mxu0 0.0
      %3370 = vmatpush1.xpose.msra.mxu0 0.0
      %3371 = vmatprep.subr.mxu0 0.0
      %3372 = vmatpush1.xpose.msra.mxu0 %v3339
      %3373 = vmatprep.subr.mxu0 0.0
      %3374 = vmatpush2.xpose.msra.mxu0 0.0
      %3375 = vmatprep.subr.mxu0 0.0
      %3376 = vmatpush2.xpose.msra.mxu0 0.0
      %3377 = vmatprep.subr.mxu0 0.0
      %3378 = vmatpush2.xpose.msra.mxu0 0.0
      %3379 = vmatprep.subr.mxu0 0.0
      %3380 = vmatpush2.xpose.msra.mxu0 0.0
      %3381 = vmatprep.subr.mxu0 0.0
      %3382 = vmatpush2.xpose.msra.mxu0 0.0
      %3383 = vmatprep.subr.mxu0 0.0
      %3384 = vmatpush2.xpose.msra.mxu0 0.0
      %3385 = vmatprep.subr.mxu0 0.0
      %3386 = vmatpush2.xpose.msra.mxu0 0.0
      %3387 = vmatprep.subr.mxu0 0.0
      %3388 = vmatpush2.xpose.msra.mxu0 0.0
      %3389 = vmatprep.subr.mxu0 0.0
      %3390 = vmatpush2.xpose.msra.mxu0 0.0
      %3391 = vmatprep.subr.mxu0 0.0
      %3392 = vmatpush2.xpose.msra.mxu0 0.0
      %3393 = vmatprep.subr.mxu0 0.0
      %3394 = vmatpush2.xpose.msra.mxu0 0.0
      %3395 = vmatprep.subr.mxu0 0.0
      %3396 = vmatpush2.xpose.msra.mxu0 0.0
      %3397 = vmatprep.subr.mxu0 0.0
      %3398 = vmatpush2.xpose.msra.mxu0 0.0
      %3399 = vmatprep.subr.mxu0 0.0
      %3400 = vmatpush2.xpose.msra.mxu0 0.0
      %3401 = vmatprep.subr.mxu0 0.0
      %3402 = vmatpush2.xpose.msra.mxu0 0.0
      %3403 = vmatprep.subr.mxu0 0.0
      %3404 = vmatpush2.xpose.msra.mxu0 0.0
      %3405 = vmatprep.mubr.f32.mxu0 0.0
      %3406 = vmatmul.mubr.f32.gmra.mxu0 %v3337
      %v3407 = vpop.f32.mrf.mxu0
      %v3408 = vadd.f32 0.0, %v3407
      %v3409 = vpop.f32.mrf.mxu0
      %3410 = vdwg.mxu0
      %3411 = vrot.lane.b32.xlu0 %v408, 112
      %v3412 = vpop.permute.xlu0 %3411
      %3413 = vrot.lane.b32.xlu0 %v408, 80
      %v3414 = vpop.permute.xlu0 %3413
      %v3415 = vsel %vm437, %v3412, 0
      %v3417 = vsel %vm437, %v3414, 0
      %3419 = vmatprep.subr.mxu0 0.0
      %3420 = vmatpush1.xpose.msra.mxu0 0.0
      %3421 = vmatprep.subr.mxu0 0.0
      %3422 = vmatpush1.xpose.msra.mxu0 0.0
      %3423 = vmatprep.subr.mxu0 0.0
      %3424 = vmatpush1.xpose.msra.mxu0 0.0
      %3425 = vmatprep.subr.mxu0 0.0
      %3426 = vmatpush1.xpose.msra.mxu0 0.0
      %3427 = vmatprep.subr.mxu0 0.0
      %3428 = vmatpush1.xpose.msra.mxu0 0.0
      %3429 = vmatprep.subr.mxu0 0.0
      %3430 = vmatpush1.xpose.msra.mxu0 0.0
      %3431 = vmatprep.subr.mxu0 0.0
      %3432 = vmatpush1.xpose.msra.mxu0 0.0
      %3433 = vmatprep.subr.mxu0 0.0
      %3434 = vmatpush1.xpose.msra.mxu0 0.0
      %3435 = vmatprep.subr.mxu0 0.0
      %3436 = vmatpush1.xpose.msra.mxu0 0.0
      %3437 = vmatprep.subr.mxu0 0.0
      %3438 = vmatpush1.xpose.msra.mxu0 0.0
      %3439 = vmatprep.subr.mxu0 0.0
      %3440 = vmatpush1.xpose.msra.mxu0 0.0
      %3441 = vmatprep.subr.mxu0 0.0
      %3442 = vmatpush1.xpose.msra.mxu0 0.0
      %3443 = vmatprep.subr.mxu0 0.0
      %3444 = vmatpush1.xpose.msra.mxu0 0.0
      %3445 = vmatprep.subr.mxu0 0.0
      %3446 = vmatpush1.xpose.msra.mxu0 0.0
      %3447 = vmatprep.subr.mxu0 0.0
      %3448 = vmatpush1.xpose.msra.mxu0 0.0
      %3449 = vmatprep.subr.mxu0 0.0
      %3450 = vmatpush1.xpose.msra.mxu0 %v3417
      %3451 = vmatprep.subr.mxu0 0.0
      %3452 = vmatpush2.xpose.msra.mxu0 0.0
      %3453 = vmatprep.subr.mxu0 0.0
      %3454 = vmatpush2.xpose.msra.mxu0 0.0
      %3455 = vmatprep.subr.mxu0 0.0
      %3456 = vmatpush2.xpose.msra.mxu0 0.0
      %3457 = vmatprep.subr.mxu0 0.0
      %3458 = vmatpush2.xpose.msra.mxu0 0.0
      %3459 = vmatprep.subr.mxu0 0.0
      %3460 = vmatpush2.xpose.msra.mxu0 0.0
      %3461 = vmatprep.subr.mxu0 0.0
      %3462 = vmatpush2.xpose.msra.mxu0 0.0
      %3463 = vmatprep.subr.mxu0 0.0
      %3464 = vmatpush2.xpose.msra.mxu0 0.0
      %3465 = vmatprep.subr.mxu0 0.0
      %3466 = vmatpush2.xpose.msra.mxu0 0.0
      %3467 = vmatprep.subr.mxu0 0.0
      %3468 = vmatpush2.xpose.msra.mxu0 0.0
      %3469 = vmatprep.subr.mxu0 0.0
      %3470 = vmatpush2.xpose.msra.mxu0 0.0
      %3471 = vmatprep.subr.mxu0 0.0
      %3472 = vmatpush2.xpose.msra.mxu0 0.0
      %3473 = vmatprep.subr.mxu0 0.0
      %3474 = vmatpush2.xpose.msra.mxu0 0.0
      %3475 = vmatprep.subr.mxu0 0.0
      %3476 = vmatpush2.xpose.msra.mxu0 0.0
      %3477 = vmatprep.subr.mxu0 0.0
      %3478 = vmatpush2.xpose.msra.mxu0 0.0
      %3479 = vmatprep.subr.mxu0 0.0
      %3480 = vmatpush2.xpose.msra.mxu0 0.0
      %3481 = vmatprep.subr.mxu0 0.0
      %3482 = vmatpush2.xpose.msra.mxu0 0.0
      %3483 = vmatprep.mubr.f32.mxu0 0.0
      %3484 = vmatmul.mubr.f32.gmra.mxu0 %v3415
      %v3485 = vpop.f32.mrf.mxu0
      %v3486 = vadd.f32 0.0, %v3485
      %v3487 = vpop.f32.mrf.mxu0
      %3488 = vdwg.mxu0
      %3489 = vrot.lane.b32.xlu0 %v413, 112
      %v3490 = vpop.permute.xlu0 %3489
      %3491 = vrot.lane.b32.xlu0 %v413, 80
      %v3492 = vpop.permute.xlu0 %3491
      %v3493 = vsel %vm437, %v3490, 0
      %v3495 = vsel %vm437, %v3492, 0
      %3497 = vmatprep.subr.mxu0 0.0
      %3498 = vmatpush1.xpose.msra.mxu0 0.0
      %3499 = vmatprep.subr.mxu0 0.0
      %3500 = vmatpush1.xpose.msra.mxu0 0.0
      %3501 = vmatprep.subr.mxu0 0.0
      %3502 = vmatpush1.xpose.msra.mxu0 0.0
      %3503 = vmatprep.subr.mxu0 0.0
      %3504 = vmatpush1.xpose.msra.mxu0 0.0
      %3505 = vmatprep.subr.mxu0 0.0
      %3506 = vmatpush1.xpose.msra.mxu0 0.0
      %3507 = vmatprep.subr.mxu0 0.0
      %3508 = vmatpush1.xpose.msra.mxu0 0.0
      %3509 = vmatprep.subr.mxu0 0.0
      %3510 = vmatpush1.xpose.msra.mxu0 0.0
      %3511 = vmatprep.subr.mxu0 0.0
      %3512 = vmatpush1.xpose.msra.mxu0 0.0
      %3513 = vmatprep.subr.mxu0 0.0
      %3514 = vmatpush1.xpose.msra.mxu0 0.0
      %3515 = vmatprep.subr.mxu0 0.0
      %3516 = vmatpush1.xpose.msra.mxu0 0.0
      %3517 = vmatprep.subr.mxu0 0.0
      %3518 = vmatpush1.xpose.msra.mxu0 0.0
      %3519 = vmatprep.subr.mxu0 0.0
      %3520 = vmatpush1.xpose.msra.mxu0 0.0
      %3521 = vmatprep.subr.mxu0 0.0
      %3522 = vmatpush1.xpose.msra.mxu0 0.0
      %3523 = vmatprep.subr.mxu0 0.0
      %3524 = vmatpush1.xpose.msra.mxu0 0.0
      %3525 = vmatprep.subr.mxu0 0.0
      %3526 = vmatpush1.xpose.msra.mxu0 0.0
      %3527 = vmatprep.subr.mxu0 0.0
      %3528 = vmatpush1.xpose.msra.mxu0 %v3495
      %3529 = vmatprep.subr.mxu0 0.0
      %3530 = vmatpush2.xpose.msra.mxu0 0.0
      %3531 = vmatprep.subr.mxu0 0.0
      %3532 = vmatpush2.xpose.msra.mxu0 0.0
      %3533 = vmatprep.subr.mxu0 0.0
      %3534 = vmatpush2.xpose.msra.mxu0 0.0
      %3535 = vmatprep.subr.mxu0 0.0
      %3536 = vmatpush2.xpose.msra.mxu0 0.0
      %3537 = vmatprep.subr.mxu0 0.0
      %3538 = vmatpush2.xpose.msra.mxu0 0.0
      %3539 = vmatprep.subr.mxu0 0.0
      %3540 = vmatpush2.xpose.msra.mxu0 0.0
      %3541 = vmatprep.subr.mxu0 0.0
      %3542 = vmatpush2.xpose.msra.mxu0 0.0
      %3543 = vmatprep.subr.mxu0 0.0
      %3544 = vmatpush2.xpose.msra.mxu0 0.0
      %3545 = vmatprep.subr.mxu0 0.0
      %3546 = vmatpush2.xpose.msra.mxu0 0.0
      %3547 = vmatprep.subr.mxu0 0.0
      %3548 = vmatpush2.xpose.msra.mxu0 0.0
      %3549 = vmatprep.subr.mxu0 0.0
      %3550 = vmatpush2.xpose.msra.mxu0 0.0
      %3551 = vmatprep.subr.mxu0 0.0
      %3552 = vmatpush2.xpose.msra.mxu0 0.0
      %3553 = vmatprep.subr.mxu0 0.0
      %3554 = vmatpush2.xpose.msra.mxu0 0.0
      %3555 = vmatprep.subr.mxu0 0.0
      %3556 = vmatpush2.xpose.msra.mxu0 0.0
      %3557 = vmatprep.subr.mxu0 0.0
      %3558 = vmatpush2.xpose.msra.mxu0 0.0
      %3559 = vmatprep.subr.mxu0 0.0
      %3560 = vmatpush2.xpose.msra.mxu0 0.0
      %3561 = vmatprep.mubr.f32.mxu0 0.0
      %3562 = vmatmul.mubr.f32.gmra.mxu0 %v3493
      %v3563 = vpop.f32.mrf.mxu0
      %v3564 = vadd.f32 0.0, %v3563
      %v3565 = vpop.f32.mrf.mxu0
      %3566 = vdwg.mxu0
      %3567 = vrot.lane.b32.xlu0 %v418, 112
      %v3568 = vpop.permute.xlu0 %3567
      %3569 = vrot.lane.b32.xlu0 %v418, 80
      %v3570 = vpop.permute.xlu0 %3569
      %v3571 = vsel %vm437, %v3568, 0
      %v3573 = vsel %vm437, %v3570, 0
      %3575 = vmatprep.subr.mxu0 0.0
      %3576 = vmatpush1.xpose.msra.mxu0 0.0
      %3577 = vmatprep.subr.mxu0 0.0
      %3578 = vmatpush1.xpose.msra.mxu0 0.0
      %3579 = vmatprep.subr.mxu0 0.0
      %3580 = vmatpush1.xpose.msra.mxu0 0.0
      %3581 = vmatprep.subr.mxu0 0.0
      %3582 = vmatpush1.xpose.msra.mxu0 0.0
      %3583 = vmatprep.subr.mxu0 0.0
      %3584 = vmatpush1.xpose.msra.mxu0 0.0
      %3585 = vmatprep.subr.mxu0 0.0
      %3586 = vmatpush1.xpose.msra.mxu0 0.0
      %3587 = vmatprep.subr.mxu0 0.0
      %3588 = vmatpush1.xpose.msra.mxu0 0.0
      %3589 = vmatprep.subr.mxu0 0.0
      %3590 = vmatpush1.xpose.msra.mxu0 0.0
      %3591 = vmatprep.subr.mxu0 0.0
      %3592 = vmatpush1.xpose.msra.mxu0 0.0
      %3593 = vmatprep.subr.mxu0 0.0
      %3594 = vmatpush1.xpose.msra.mxu0 0.0
      %3595 = vmatprep.subr.mxu0 0.0
      %3596 = vmatpush1.xpose.msra.mxu0 0.0
      %3597 = vmatprep.subr.mxu0 0.0
      %3598 = vmatpush1.xpose.msra.mxu0 0.0
      %3599 = vmatprep.subr.mxu0 0.0
      %3600 = vmatpush1.xpose.msra.mxu0 0.0
      %3601 = vmatprep.subr.mxu0 0.0
      %3602 = vmatpush1.xpose.msra.mxu0 0.0
      %3603 = vmatprep.subr.mxu0 0.0
      %3604 = vmatpush1.xpose.msra.mxu0 0.0
      %3605 = vmatprep.subr.mxu0 0.0
      %3606 = vmatpush1.xpose.msra.mxu0 %v3573
      %3607 = vmatprep.subr.mxu0 0.0
      %3608 = vmatpush2.xpose.msra.mxu0 0.0
      %3609 = vmatprep.subr.mxu0 0.0
      %3610 = vmatpush2.xpose.msra.mxu0 0.0
      %3611 = vmatprep.subr.mxu0 0.0
      %3612 = vmatpush2.xpose.msra.mxu0 0.0
      %3613 = vmatprep.subr.mxu0 0.0
      %3614 = vmatpush2.xpose.msra.mxu0 0.0
      %3615 = vmatprep.subr.mxu0 0.0
      %3616 = vmatpush2.xpose.msra.mxu0 0.0
      %3617 = vmatprep.subr.mxu0 0.0
      %3618 = vmatpush2.xpose.msra.mxu0 0.0
      %3619 = vmatprep.subr.mxu0 0.0
      %3620 = vmatpush2.xpose.msra.mxu0 0.0
      %3621 = vmatprep.subr.mxu0 0.0
      %3622 = vmatpush2.xpose.msra.mxu0 0.0
      %3623 = vmatprep.subr.mxu0 0.0
      %3624 = vmatpush2.xpose.msra.mxu0 0.0
      %3625 = vmatprep.subr.mxu0 0.0
      %3626 = vmatpush2.xpose.msra.mxu0 0.0
      %3627 = vmatprep.subr.mxu0 0.0
      %3628 = vmatpush2.xpose.msra.mxu0 0.0
      %3629 = vmatprep.subr.mxu0 0.0
      %3630 = vmatpush2.xpose.msra.mxu0 0.0
      %3631 = vmatprep.subr.mxu0 0.0
      %3632 = vmatpush2.xpose.msra.mxu0 0.0
      %3633 = vmatprep.subr.mxu0 0.0
      %3634 = vmatpush2.xpose.msra.mxu0 0.0
      %3635 = vmatprep.subr.mxu0 0.0
      %3636 = vmatpush2.xpose.msra.mxu0 0.0
      %3637 = vmatprep.subr.mxu0 0.0
      %3638 = vmatpush2.xpose.msra.mxu0 0.0
      %3639 = vmatprep.mubr.f32.mxu0 0.0
      %3640 = vmatmul.mubr.f32.gmra.mxu0 %v3571
      %v3641 = vpop.f32.mrf.mxu0
      %v3642 = vadd.f32 0.0, %v3641
      %v3643 = vpop.f32.mrf.mxu0
      %3644 = vdwg.mxu0
      %3645 = vrot.lane.b32.xlu0 %v423, 112
      %v3646 = vpop.permute.xlu0 %3645
      %3647 = vrot.lane.b32.xlu0 %v423, 80
      %v3648 = vpop.permute.xlu0 %3647
      %v3649 = vsel %vm437, %v3646, 0
      %v3651 = vsel %vm437, %v3648, 0
      %3653 = vmatprep.subr.mxu0 0.0
      %3654 = vmatpush1.xpose.msra.mxu0 0.0
      %3655 = vmatprep.subr.mxu0 0.0
      %3656 = vmatpush1.xpose.msra.mxu0 0.0
      %3657 = vmatprep.subr.mxu0 0.0
      %3658 = vmatpush1.xpose.msra.mxu0 0.0
      %3659 = vmatprep.subr.mxu0 0.0
      %3660 = vmatpush1.xpose.msra.mxu0 0.0
      %3661 = vmatprep.subr.mxu0 0.0
      %3662 = vmatpush1.xpose.msra.mxu0 0.0
      %3663 = vmatprep.subr.mxu0 0.0
      %3664 = vmatpush1.xpose.msra.mxu0 0.0
      %3665 = vmatprep.subr.mxu0 0.0
      %3666 = vmatpush1.xpose.msra.mxu0 0.0
      %3667 = vmatprep.subr.mxu0 0.0
      %3668 = vmatpush1.xpose.msra.mxu0 0.0
      %3669 = vmatprep.subr.mxu0 0.0
      %3670 = vmatpush1.xpose.msra.mxu0 0.0
      %3671 = vmatprep.subr.mxu0 0.0
      %3672 = vmatpush1.xpose.msra.mxu0 0.0
      %3673 = vmatprep.subr.mxu0 0.0
      %3674 = vmatpush1.xpose.msra.mxu0 0.0
      %3675 = vmatprep.subr.mxu0 0.0
      %3676 = vmatpush1.xpose.msra.mxu0 0.0
      %3677 = vmatprep.subr.mxu0 0.0
      %3678 = vmatpush1.xpose.msra.mxu0 0.0
      %3679 = vmatprep.subr.mxu0 0.0
      %3680 = vmatpush1.xpose.msra.mxu0 0.0
      %3681 = vmatprep.subr.mxu0 0.0
      %3682 = vmatpush1.xpose.msra.mxu0 0.0
      %3683 = vmatprep.subr.mxu0 0.0
      %3684 = vmatpush1.xpose.msra.mxu0 %v3651
      %3685 = vmatprep.subr.mxu0 0.0
      %3686 = vmatpush2.xpose.msra.mxu0 0.0
      %3687 = vmatprep.subr.mxu0 0.0
      %3688 = vmatpush2.xpose.msra.mxu0 0.0
      %3689 = vmatprep.subr.mxu0 0.0
      %3690 = vmatpush2.xpose.msra.mxu0 0.0
      %3691 = vmatprep.subr.mxu0 0.0
      %3692 = vmatpush2.xpose.msra.mxu0 0.0
      %3693 = vmatprep.subr.mxu0 0.0
      %3694 = vmatpush2.xpose.msra.mxu0 0.0
      %3695 = vmatprep.subr.mxu0 0.0
      %3696 = vmatpush2.xpose.msra.mxu0 0.0
      %3697 = vmatprep.subr.mxu0 0.0
      %3698 = vmatpush2.xpose.msra.mxu0 0.0
      %3699 = vmatprep.subr.mxu0 0.0
      %3700 = vmatpush2.xpose.msra.mxu0 0.0
      %3701 = vmatprep.subr.mxu0 0.0
      %3702 = vmatpush2.xpose.msra.mxu0 0.0
      %3703 = vmatprep.subr.mxu0 0.0
      %3704 = vmatpush2.xpose.msra.mxu0 0.0
      %3705 = vmatprep.subr.mxu0 0.0
      %3706 = vmatpush2.xpose.msra.mxu0 0.0
      %3707 = vmatprep.subr.mxu0 0.0
      %3708 = vmatpush2.xpose.msra.mxu0 0.0
      %3709 = vmatprep.subr.mxu0 0.0
      %3710 = vmatpush2.xpose.msra.mxu0 0.0
      %3711 = vmatprep.subr.mxu0 0.0
      %3712 = vmatpush2.xpose.msra.mxu0 0.0
      %3713 = vmatprep.subr.mxu0 0.0
      %3714 = vmatpush2.xpose.msra.mxu0 0.0
      %3715 = vmatprep.subr.mxu0 0.0
      %3716 = vmatpush2.xpose.msra.mxu0 0.0
      %3717 = vmatprep.mubr.f32.mxu0 0.0
      %3718 = vmatmul.mubr.f32.gmra.mxu0 %v3649
      %v3719 = vpop.f32.mrf.mxu0
      %v3720 = vadd.f32 0.0, %v3719
      %v3721 = vpop.f32.mrf.mxu0
      %3722 = vdwg.mxu0
      %v3723 = vmul.f32 %v3174, 0.35355338
      %v3724 = vmul.f32 %v3252, 0.35355338
      %v3725 = vmul.f32 %v3330, 0.35355338
      %v3726 = vmul.f32 %v3408, 0.35355338
      %v3727 = vmul.f32 %v3486, 0.35355338
      %v3728 = vmul.f32 %v3564, 0.35355338
      %v3729 = vmul.f32 %v3642, 0.35355338
      %v3730 = vmul.f32 %v3720, 0.35355338
      %v3731 = vadd.f32 %v3723, %v426
      %v3732 = vadd.f32 %v3724, %v427
      %v3733 = vadd.f32 %v3725, %v428
      %v3734 = vadd.f32 %v3726, %v429
      %v3735 = vadd.f32 %v3727, %v430
      %v3736 = vadd.f32 %v3728, %v431
      %v3737 = vadd.f32 %v3729, %v432
      %v3738 = vadd.f32 %v3730, %v433
      %v3739 = vsel %vm437, %v3731, -inf
      %3740 = vmax.xlane.f32.xlu0 %v3739
      %v3741 = vpop.xlane.xlu0 %3740
      %v3742 = vsel %vm437, %v3732, -inf
      %3743 = vmax.xlane.f32.xlu0 %v3742
      %v3744 = vpop.xlane.xlu0 %3743
      %v3745 = vsel %vm437, %v3733, -inf
      %3746 = vmax.xlane.f32.xlu0 %v3745
      %v3747 = vpop.xlane.xlu0 %3746
      %v3748 = vsel %vm437, %v3734, -inf
      %3749 = vmax.xlane.f32.xlu0 %v3748
      %v3750 = vpop.xlane.xlu0 %3749
      %v3751 = vsel %vm437, %v3735, -inf
      %3752 = vmax.xlane.f32.xlu0 %v3751
      %v3753 = vpop.xlane.xlu0 %3752
      %v3754 = vsel %vm437, %v3736, -inf
      %3755 = vmax.xlane.f32.xlu0 %v3754
      %v3756 = vpop.xlane.xlu0 %3755
      %v3757 = vsel %vm437, %v3737, -inf
      %3758 = vmax.xlane.f32.xlu0 %v3757
      %v3759 = vpop.xlane.xlu0 %3758
      %v3760 = vsel %vm437, %v3738, -inf
      %3761 = vmax.xlane.f32.xlu0 %v3760
      %v3762 = vpop.xlane.xlu0 %3761
      %v3763 = vsub.f32 %v3731, %v3741
      %v3764 = vsub.f32 %v3732, %v3744
      %v3765 = vsub.f32 %v3733, %v3747
      %v3766 = vsub.f32 %v3734, %v3750
      %v3767 = vsub.f32 %v3735, %v3753
      %v3768 = vsub.f32 %v3736, %v3756
      %v3769 = vsub.f32 %v3737, %v3759
      %v3770 = vsub.f32 %v3738, %v3762
      %v3771 = vmul.f32 %v3763, 1.442695
      %v3772 = vpow.pop %v3771
      %v3773 = vmul.f32 %v3764, 1.442695
      %v3774 = vpow.pop %v3773
      %v3775 = vmul.f32 %v3765, 1.442695
      %v3776 = vpow.pop %v3775
      %v3777 = vmul.f32 %v3766, 1.442695
      %v3778 = vpow.pop %v3777
      %v3779 = vmul.f32 %v3767, 1.442695
      %v3780 = vpow.pop %v3779
      %v3781 = vmul.f32 %v3768, 1.442695
      %v3782 = vpow.pop %v3781
      %v3783 = vmul.f32 %v3769, 1.442695
      %v3784 = vpow.pop %v3783
      %v3785 = vmul.f32 %v3770, 1.442695
      %v3786 = vpow.pop %v3785
      %v3787 = vsel %vm437, %v3772, 0.0
      %3788 = vadd.xlane.f32.xlu0 %v3787
      %v3789 = vpop.xlane.xlu0 %3788
      %v3790 = vsel %vm437, %v3774, 0.0
      %3791 = vadd.xlane.f32.xlu0 %v3790
      %v3792 = vpop.xlane.xlu0 %3791
      %v3793 = vsel %vm437, %v3776, 0.0
      %3794 = vadd.xlane.f32.xlu0 %v3793
      %v3795 = vpop.xlane.xlu0 %3794
      %v3796 = vsel %vm437, %v3778, 0.0
      %3797 = vadd.xlane.f32.xlu0 %v3796
      %v3798 = vpop.xlane.xlu0 %3797
      %v3799 = vsel %vm437, %v3780, 0.0
      %3800 = vadd.xlane.f32.xlu0 %v3799
      %v3801 = vpop.xlane.xlu0 %3800
      %v3802 = vsel %vm437, %v3782, 0.0
      %3803 = vadd.xlane.f32.xlu0 %v3802
      %v3804 = vpop.xlane.xlu0 %3803
      %v3805 = vsel %vm437, %v3784, 0.0
      %3806 = vadd.xlane.f32.xlu0 %v3805
      %v3807 = vpop.xlane.xlu0 %3806
      %v3808 = vsel %vm437, %v3786, 0.0
      %3809 = vadd.xlane.f32.xlu0 %v3808
      %v3810 = vpop.xlane.xlu0 %3809
      %v3811 = vrcp.pop %v3789
      %v3812 = vrcp.pop %v3792
      %v3813 = vrcp.pop %v3795
      %v3814 = vrcp.pop %v3798
      %v3815 = vrcp.pop %v3801
      %v3816 = vrcp.pop %v3804
      %v3817 = vrcp.pop %v3807
      %v3818 = vrcp.pop %v3810
      %v3819 = vmul.f32 %v3772, %v3811
      %v3820 = vmul.f32 %v3774, %v3812
      %v3821 = vmul.f32 %v3776, %v3813
      %v3822 = vmul.f32 %v3778, %v3814
      %v3823 = vmul.f32 %v3780, %v3815
      %v3824 = vmul.f32 %v3782, %v3816
      %v3825 = vmul.f32 %v3784, %v3817
      %v3826 = vmul.f32 %v3786, %v3818
      %3827 = vrot.lane.b32.xlu0 %v388, 48
      %v3828 = vpop.permute.xlu0 %3827
      %v3831 = vsel %vm437, %v3819, 0
      %3833 = vmatprep.subr.mxu0 0.0
      %3834 = vmatpush1.msra.mxu0 0.0
      %3835 = vmatprep.subr.mxu0 0.0
      %3836 = vmatpush1.msra.mxu0 0.0
      %3837 = vmatprep.subr.mxu0 0.0
      %3838 = vmatpush1.msra.mxu0 0.0
      %3839 = vmatprep.subr.mxu0 0.0
      %3840 = vmatpush1.msra.mxu0 0.0
      %3841 = vmatprep.subr.mxu0 0.0
      %3842 = vmatpush1.msra.mxu0 0.0
      %3843 = vmatprep.subr.mxu0 0.0
      %3844 = vmatpush1.msra.mxu0 0.0
      %3845 = vmatprep.subr.mxu0 0.0
      %3846 = vmatpush1.msra.mxu0 0.0
      %3847 = vmatprep.subr.mxu0 0.0
      %3848 = vmatpush1.msra.mxu0 0.0
      %3849 = vmatprep.subr.mxu0 0.0
      %3850 = vmatpush1.msra.mxu0 0.0
      %3851 = vmatprep.subr.mxu0 0.0
      %3852 = vmatpush1.msra.mxu0 0.0
      %3853 = vmatprep.subr.mxu0 0.0
      %3854 = vmatpush1.msra.mxu0 0.0
      %3855 = vmatprep.subr.mxu0 0.0
      %3856 = vmatpush1.msra.mxu0 0.0
      %3857 = vmatprep.subr.mxu0 0.0
      %3858 = vmatpush1.msra.mxu0 0.0
      %3859 = vmatprep.subr.mxu0 0.0
      %3860 = vmatpush1.msra.mxu0 0.0
      %3861 = vmatprep.subr.mxu0 0.0
      %3862 = vmatpush1.msra.mxu0 0.0
      %3863 = vmatprep.subr.mxu0 0.0
      %3864 = vmatpush1.msra.mxu0 %v3828
      %3865 = vmatprep.subr.mxu0 0.0
      %3866 = vmatpush2.msra.mxu0 0.0
      %3867 = vmatprep.subr.mxu0 0.0
      %3868 = vmatpush2.msra.mxu0 0.0
      %3869 = vmatprep.subr.mxu0 0.0
      %3870 = vmatpush2.msra.mxu0 0.0
      %3871 = vmatprep.subr.mxu0 0.0
      %3872 = vmatpush2.msra.mxu0 0.0
      %3873 = vmatprep.subr.mxu0 0.0
      %3874 = vmatpush2.msra.mxu0 0.0
      %3875 = vmatprep.subr.mxu0 0.0
      %3876 = vmatpush2.msra.mxu0 0.0
      %3877 = vmatprep.subr.mxu0 0.0
      %3878 = vmatpush2.msra.mxu0 0.0
      %3879 = vmatprep.subr.mxu0 0.0
      %3880 = vmatpush2.msra.mxu0 0.0
      %3881 = vmatprep.subr.mxu0 0.0
      %3882 = vmatpush2.msra.mxu0 0.0
      %3883 = vmatprep.subr.mxu0 0.0
      %3884 = vmatpush2.msra.mxu0 0.0
      %3885 = vmatprep.subr.mxu0 0.0
      %3886 = vmatpush2.msra.mxu0 0.0
      %3887 = vmatprep.subr.mxu0 0.0
      %3888 = vmatpush2.msra.mxu0 0.0
      %3889 = vmatprep.subr.mxu0 0.0
      %3890 = vmatpush2.msra.mxu0 0.0
      %3891 = vmatprep.subr.mxu0 0.0
      %3892 = vmatpush2.msra.mxu0 0.0
      %3893 = vmatprep.subr.mxu0 0.0
      %3894 = vmatpush2.msra.mxu0 0.0
      %3895 = vmatprep.subr.mxu0 0.0
      %3896 = vmatpush2.msra.mxu0 0.0
      %3897 = vmatprep.mubr.f32.mxu0 0.0
      %3898 = vmatmul.mubr.f32.gmra.mxu0 %v3831
      %v3899 = vpop.f32.mrf.mxu0
      %v3900 = vadd.f32 0.0, %v3899
      %v3901 = vpop.f32.mrf.mxu0
      %3902 = vdwg.mxu0
      %3903 = vrot.lane.b32.xlu0 %v393, 48
      %v3904 = vpop.permute.xlu0 %3903
      %v3907 = vsel %vm437, %v3820, 0
      %3909 = vmatprep.subr.mxu0 0.0
      %3910 = vmatpush1.msra.mxu0 0.0
      %3911 = vmatprep.subr.mxu0 0.0
      %3912 = vmatpush1.msra.mxu0 0.0
      %3913 = vmatprep.subr.mxu0 0.0
      %3914 = vmatpush1.msra.mxu0 0.0
      %3915 = vmatprep.subr.mxu0 0.0
      %3916 = vmatpush1.msra.mxu0 0.0
      %3917 = vmatprep.subr.mxu0 0.0
      %3918 = vmatpush1.msra.mxu0 0.0
      %3919 = vmatprep.subr.mxu0 0.0
      %3920 = vmatpush1.msra.mxu0 0.0
      %3921 = vmatprep.subr.mxu0 0.0
      %3922 = vmatpush1.msra.mxu0 0.0
      %3923 = vmatprep.subr.mxu0 0.0
      %3924 = vmatpush1.msra.mxu0 0.0
      %3925 = vmatprep.subr.mxu0 0.0
      %3926 = vmatpush1.msra.mxu0 0.0
      %3927 = vmatprep.subr.mxu0 0.0
      %3928 = vmatpush1.msra.mxu0 0.0
      %3929 = vmatprep.subr.mxu0 0.0
      %3930 = vmatpush1.msra.mxu0 0.0
      %3931 = vmatprep.subr.mxu0 0.0
      %3932 = vmatpush1.msra.mxu0 0.0
      %3933 = vmatprep.subr.mxu0 0.0
      %3934 = vmatpush1.msra.mxu0 0.0
      %3935 = vmatprep.subr.mxu0 0.0
      %3936 = vmatpush1.msra.mxu0 0.0
      %3937 = vmatprep.subr.mxu0 0.0
      %3938 = vmatpush1.msra.mxu0 0.0
      %3939 = vmatprep.subr.mxu0 0.0
      %3940 = vmatpush1.msra.mxu0 %v3904
      %3941 = vmatprep.subr.mxu0 0.0
      %3942 = vmatpush2.msra.mxu0 0.0
      %3943 = vmatprep.subr.mxu0 0.0
      %3944 = vmatpush2.msra.mxu0 0.0
      %3945 = vmatprep.subr.mxu0 0.0
      %3946 = vmatpush2.msra.mxu0 0.0
      %3947 = vmatprep.subr.mxu0 0.0
      %3948 = vmatpush2.msra.mxu0 0.0
      %3949 = vmatprep.subr.mxu0 0.0
      %3950 = vmatpush2.msra.mxu0 0.0
      %3951 = vmatprep.subr.mxu0 0.0
      %3952 = vmatpush2.msra.mxu0 0.0
      %3953 = vmatprep.subr.mxu0 0.0
      %3954 = vmatpush2.msra.mxu0 0.0
      %3955 = vmatprep.subr.mxu0 0.0
      %3956 = vmatpush2.msra.mxu0 0.0
      %3957 = vmatprep.subr.mxu0 0.0
      %3958 = vmatpush2.msra.mxu0 0.0
      %3959 = vmatprep.subr.mxu0 0.0
      %3960 = vmatpush2.msra.mxu0 0.0
      %3961 = vmatprep.subr.mxu0 0.0
      %3962 = vmatpush2.msra.mxu0 0.0
      %3963 = vmatprep.subr.mxu0 0.0
      %3964 = vmatpush2.msra.mxu0 0.0
      %3965 = vmatprep.subr.mxu0 0.0
      %3966 = vmatpush2.msra.mxu0 0.0
      %3967 = vmatprep.subr.mxu0 0.0
      %3968 = vmatpush2.msra.mxu0 0.0
      %3969 = vmatprep.subr.mxu0 0.0
      %3970 = vmatpush2.msra.mxu0 0.0
      %3971 = vmatprep.subr.mxu0 0.0
      %3972 = vmatpush2.msra.mxu0 0.0
      %3973 = vmatprep.mubr.f32.mxu0 0.0
      %3974 = vmatmul.mubr.f32.gmra.mxu0 %v3907
      %v3975 = vpop.f32.mrf.mxu0
      %v3976 = vadd.f32 0.0, %v3975
      %v3977 = vpop.f32.mrf.mxu0
      %3978 = vdwg.mxu0
      %3979 = vrot.lane.b32.xlu0 %v398, 48
      %v3980 = vpop.permute.xlu0 %3979
      %v3983 = vsel %vm437, %v3821, 0
      %3985 = vmatprep.subr.mxu0 0.0
      %3986 = vmatpush1.msra.mxu0 0.0
      %3987 = vmatprep.subr.mxu0 0.0
      %3988 = vmatpush1.msra.mxu0 0.0
      %3989 = vmatprep.subr.mxu0 0.0
      %3990 = vmatpush1.msra.mxu0 0.0
      %3991 = vmatprep.subr.mxu0 0.0
      %3992 = vmatpush1.msra.mxu0 0.0
      %3993 = vmatprep.subr.mxu0 0.0
      %3994 = vmatpush1.msra.mxu0 0.0
      %3995 = vmatprep.subr.mxu0 0.0
      %3996 = vmatpush1.msra.mxu0 0.0
      %3997 = vmatprep.subr.mxu0 0.0
      %3998 = vmatpush1.msra.mxu0 0.0
      %3999 = vmatprep.subr.mxu0 0.0
      %4000 = vmatpush1.msra.mxu0 0.0
      %4001 = vmatprep.subr.mxu0 0.0
      %4002 = vmatpush1.msra.mxu0 0.0
      %4003 = vmatprep.subr.mxu0 0.0
      %4004 = vmatpush1.msra.mxu0 0.0
      %4005 = vmatprep.subr.mxu0 0.0
      %4006 = vmatpush1.msra.mxu0 0.0
      %4007 = vmatprep.subr.mxu0 0.0
      %4008 = vmatpush1.msra.mxu0 0.0
      %4009 = vmatprep.subr.mxu0 0.0
      %4010 = vmatpush1.msra.mxu0 0.0
      %4011 = vmatprep.subr.mxu0 0.0
      %4012 = vmatpush1.msra.mxu0 0.0
      %4013 = vmatprep.subr.mxu0 0.0
      %4014 = vmatpush1.msra.mxu0 0.0
      %4015 = vmatprep.subr.mxu0 0.0
      %4016 = vmatpush1.msra.mxu0 %v3980
      %4017 = vmatprep.subr.mxu0 0.0
      %4018 = vmatpush2.msra.mxu0 0.0
      %4019 = vmatprep.subr.mxu0 0.0
      %4020 = vmatpush2.msra.mxu0 0.0
      %4021 = vmatprep.subr.mxu0 0.0
      %4022 = vmatpush2.msra.mxu0 0.0
      %4023 = vmatprep.subr.mxu0 0.0
      %4024 = vmatpush2.msra.mxu0 0.0
      %4025 = vmatprep.subr.mxu0 0.0
      %4026 = vmatpush2.msra.mxu0 0.0
      %4027 = vmatprep.subr.mxu0 0.0
      %4028 = vmatpush2.msra.mxu0 0.0
      %4029 = vmatprep.subr.mxu0 0.0
      %4030 = vmatpush2.msra.mxu0 0.0
      %4031 = vmatprep.subr.mxu0 0.0
      %4032 = vmatpush2.msra.mxu0 0.0
      %4033 = vmatprep.subr.mxu0 0.0
      %4034 = vmatpush2.msra.mxu0 0.0
      %4035 = vmatprep.subr.mxu0 0.0
      %4036 = vmatpush2.msra.mxu0 0.0
      %4037 = vmatprep.subr.mxu0 0.0
      %4038 = vmatpush2.msra.mxu0 0.0
      %4039 = vmatprep.subr.mxu0 0.0
      %4040 = vmatpush2.msra.mxu0 0.0
      %4041 = vmatprep.subr.mxu0 0.0
      %4042 = vmatpush2.msra.mxu0 0.0
      %4043 = vmatprep.subr.mxu0 0.0
      %4044 = vmatpush2.msra.mxu0 0.0
      %4045 = vmatprep.subr.mxu0 0.0
      %4046 = vmatpush2.msra.mxu0 0.0
      %4047 = vmatprep.subr.mxu0 0.0
      %4048 = vmatpush2.msra.mxu0 0.0
      %4049 = vmatprep.mubr.f32.mxu0 0.0
      %4050 = vmatmul.mubr.f32.gmra.mxu0 %v3983
      %v4051 = vpop.f32.mrf.mxu0
      %v4052 = vadd.f32 0.0, %v4051
      %v4053 = vpop.f32.mrf.mxu0
      %4054 = vdwg.mxu0
      %4055 = vrot.lane.b32.xlu0 %v403, 48
      %v4056 = vpop.permute.xlu0 %4055
      %v4059 = vsel %vm437, %v3822, 0
      %4061 = vmatprep.subr.mxu0 0.0
      %4062 = vmatpush1.msra.mxu0 0.0
      %4063 = vmatprep.subr.mxu0 0.0
      %4064 = vmatpush1.msra.mxu0 0.0
      %4065 = vmatprep.subr.mxu0 0.0
      %4066 = vmatpush1.msra.mxu0 0.0
      %4067 = vmatprep.subr.mxu0 0.0
      %4068 = vmatpush1.msra.mxu0 0.0
      %4069 = vmatprep.subr.mxu0 0.0
      %4070 = vmatpush1.msra.mxu0 0.0
      %4071 = vmatprep.subr.mxu0 0.0
      %4072 = vmatpush1.msra.mxu0 0.0
      %4073 = vmatprep.subr.mxu0 0.0
      %4074 = vmatpush1.msra.mxu0 0.0
      %4075 = vmatprep.subr.mxu0 0.0
      %4076 = vmatpush1.msra.mxu0 0.0
      %4077 = vmatprep.subr.mxu0 0.0
      %4078 = vmatpush1.msra.mxu0 0.0
      %4079 = vmatprep.subr.mxu0 0.0
      %4080 = vmatpush1.msra.mxu0 0.0
      %4081 = vmatprep.subr.mxu0 0.0
      %4082 = vmatpush1.msra.mxu0 0.0
      %4083 = vmatprep.subr.mxu0 0.0
      %4084 = vmatpush1.msra.mxu0 0.0
      %4085 = vmatprep.subr.mxu0 0.0
      %4086 = vmatpush1.msra.mxu0 0.0
      %4087 = vmatprep.subr.mxu0 0.0
      %4088 = vmatpush1.msra.mxu0 0.0
      %4089 = vmatprep.subr.mxu0 0.0
      %4090 = vmatpush1.msra.mxu0 0.0
      %4091 = vmatprep.subr.mxu0 0.0
      %4092 = vmatpush1.msra.mxu0 %v4056
      %4093 = vmatprep.subr.mxu0 0.0
      %4094 = vmatpush2.msra.mxu0 0.0
      %4095 = vmatprep.subr.mxu0 0.0
      %4096 = vmatpush2.msra.mxu0 0.0
      %4097 = vmatprep.subr.mxu0 0.0
      %4098 = vmatpush2.msra.mxu0 0.0
      %4099 = vmatprep.subr.mxu0 0.0
      %4100 = vmatpush2.msra.mxu0 0.0
      %4101 = vmatprep.subr.mxu0 0.0
      %4102 = vmatpush2.msra.mxu0 0.0
      %4103 = vmatprep.subr.mxu0 0.0
      %4104 = vmatpush2.msra.mxu0 0.0
      %4105 = vmatprep.subr.mxu0 0.0
      %4106 = vmatpush2.msra.mxu0 0.0
      %4107 = vmatprep.subr.mxu0 0.0
      %4108 = vmatpush2.msra.mxu0 0.0
      %4109 = vmatprep.subr.mxu0 0.0
      %4110 = vmatpush2.msra.mxu0 0.0
      %4111 = vmatprep.subr.mxu0 0.0
      %4112 = vmatpush2.msra.mxu0 0.0
      %4113 = vmatprep.subr.mxu0 0.0
      %4114 = vmatpush2.msra.mxu0 0.0
      %4115 = vmatprep.subr.mxu0 0.0
      %4116 = vmatpush2.msra.mxu0 0.0
      %4117 = vmatprep.subr.mxu0 0.0
      %4118 = vmatpush2.msra.mxu0 0.0
      %4119 = vmatprep.subr.mxu0 0.0
      %4120 = vmatpush2.msra.mxu0 0.0
      %4121 = vmatprep.subr.mxu0 0.0
      %4122 = vmatpush2.msra.mxu0 0.0
      %4123 = vmatprep.subr.mxu0 0.0
      %4124 = vmatpush2.msra.mxu0 0.0
      %4125 = vmatprep.mubr.f32.mxu0 0.0
      %4126 = vmatmul.mubr.f32.gmra.mxu0 %v4059
      %v4127 = vpop.f32.mrf.mxu0
      %v4128 = vadd.f32 0.0, %v4127
      %v4129 = vpop.f32.mrf.mxu0
      %4130 = vdwg.mxu0
      %4131 = vrot.lane.b32.xlu0 %v408, 48
      %v4132 = vpop.permute.xlu0 %4131
      %v4135 = vsel %vm437, %v3823, 0
      %4137 = vmatprep.subr.mxu0 0.0
      %4138 = vmatpush1.msra.mxu0 0.0
      %4139 = vmatprep.subr.mxu0 0.0
      %4140 = vmatpush1.msra.mxu0 0.0
      %4141 = vmatprep.subr.mxu0 0.0
      %4142 = vmatpush1.msra.mxu0 0.0
      %4143 = vmatprep.subr.mxu0 0.0
      %4144 = vmatpush1.msra.mxu0 0.0
      %4145 = vmatprep.subr.mxu0 0.0
      %4146 = vmatpush1.msra.mxu0 0.0
      %4147 = vmatprep.subr.mxu0 0.0
      %4148 = vmatpush1.msra.mxu0 0.0
      %4149 = vmatprep.subr.mxu0 0.0
      %4150 = vmatpush1.msra.mxu0 0.0
      %4151 = vmatprep.subr.mxu0 0.0
      %4152 = vmatpush1.msra.mxu0 0.0
      %4153 = vmatprep.subr.mxu0 0.0
      %4154 = vmatpush1.msra.mxu0 0.0
      %4155 = vmatprep.subr.mxu0 0.0
      %4156 = vmatpush1.msra.mxu0 0.0
      %4157 = vmatprep.subr.mxu0 0.0
      %4158 = vmatpush1.msra.mxu0 0.0
      %4159 = vmatprep.subr.mxu0 0.0
      %4160 = vmatpush1.msra.mxu0 0.0
      %4161 = vmatprep.subr.mxu0 0.0
      %4162 = vmatpush1.msra.mxu0 0.0
      %4163 = vmatprep.subr.mxu0 0.0
      %4164 = vmatpush1.msra.mxu0 0.0
      %4165 = vmatprep.subr.mxu0 0.0
      %4166 = vmatpush1.msra.mxu0 0.0
      %4167 = vmatprep.subr.mxu0 0.0
      %4168 = vmatpush1.msra.mxu0 %v4132
      %4169 = vmatprep.subr.mxu0 0.0
      %4170 = vmatpush2.msra.mxu0 0.0
      %4171 = vmatprep.subr.mxu0 0.0
      %4172 = vmatpush2.msra.mxu0 0.0
      %4173 = vmatprep.subr.mxu0 0.0
      %4174 = vmatpush2.msra.mxu0 0.0
      %4175 = vmatprep.subr.mxu0 0.0
      %4176 = vmatpush2.msra.mxu0 0.0
      %4177 = vmatprep.subr.mxu0 0.0
      %4178 = vmatpush2.msra.mxu0 0.0
      %4179 = vmatprep.subr.mxu0 0.0
      %4180 = vmatpush2.msra.mxu0 0.0
      %4181 = vmatprep.subr.mxu0 0.0
      %4182 = vmatpush2.msra.mxu0 0.0
      %4183 = vmatprep.subr.mxu0 0.0
      %4184 = vmatpush2.msra.mxu0 0.0
      %4185 = vmatprep.subr.mxu0 0.0
      %4186 = vmatpush2.msra.mxu0 0.0
      %4187 = vmatprep.subr.mxu0 0.0
      %4188 = vmatpush2.msra.mxu0 0.0
      %4189 = vmatprep.subr.mxu0 0.0
      %4190 = vmatpush2.msra.mxu0 0.0
      %4191 = vmatprep.subr.mxu0 0.0
      %4192 = vmatpush2.msra.mxu0 0.0
      %4193 = vmatprep.subr.mxu0 0.0
      %4194 = vmatpush2.msra.mxu0 0.0
      %4195 = vmatprep.subr.mxu0 0.0
      %4196 = vmatpush2.msra.mxu0 0.0
      %4197 = vmatprep.subr.mxu0 0.0
      %4198 = vmatpush2.msra.mxu0 0.0
      %4199 = vmatprep.subr.mxu0 0.0
      %4200 = vmatpush2.msra.mxu0 0.0
      %4201 = vmatprep.mubr.f32.mxu0 0.0
      %4202 = vmatmul.mubr.f32.gmra.mxu0 %v4135
      %v4203 = vpop.f32.mrf.mxu0
      %v4204 = vadd.f32 0.0, %v4203
      %v4205 = vpop.f32.mrf.mxu0
      %4206 = vdwg.mxu0
      %4207 = vrot.lane.b32.xlu0 %v413, 48
      %v4208 = vpop.permute.xlu0 %4207
      %v4211 = vsel %vm437, %v3824, 0
      %4213 = vmatprep.subr.mxu0 0.0
      %4214 = vmatpush1.msra.mxu0 0.0
      %4215 = vmatprep.subr.mxu0 0.0
      %4216 = vmatpush1.msra.mxu0 0.0
      %4217 = vmatprep.subr.mxu0 0.0
      %4218 = vmatpush1.msra.mxu0 0.0
      %4219 = vmatprep.subr.mxu0 0.0
      %4220 = vmatpush1.msra.mxu0 0.0
      %4221 = vmatprep.subr.mxu0 0.0
      %4222 = vmatpush1.msra.mxu0 0.0
      %4223 = vmatprep.subr.mxu0 0.0
      %4224 = vmatpush1.msra.mxu0 0.0
      %4225 = vmatprep.subr.mxu0 0.0
      %4226 = vmatpush1.msra.mxu0 0.0
      %4227 = vmatprep.subr.mxu0 0.0
      %4228 = vmatpush1.msra.mxu0 0.0
      %4229 = vmatprep.subr.mxu0 0.0
      %4230 = vmatpush1.msra.mxu0 0.0
      %4231 = vmatprep.subr.mxu0 0.0
      %4232 = vmatpush1.msra.mxu0 0.0
      %4233 = vmatprep.subr.mxu0 0.0
      %4234 = vmatpush1.msra.mxu0 0.0
      %4235 = vmatprep.subr.mxu0 0.0
      %4236 = vmatpush1.msra.mxu0 0.0
      %4237 = vmatprep.subr.mxu0 0.0
      %4238 = vmatpush1.msra.mxu0 0.0
      %4239 = vmatprep.subr.mxu0 0.0
      %4240 = vmatpush1.msra.mxu0 0.0
      %4241 = vmatprep.subr.mxu0 0.0
      %4242 = vmatpush1.msra.mxu0 0.0
      %4243 = vmatprep.subr.mxu0 0.0
      %4244 = vmatpush1.msra.mxu0 %v4208
      %4245 = vmatprep.subr.mxu0 0.0
      %4246 = vmatpush2.msra.mxu0 0.0
      %4247 = vmatprep.subr.mxu0 0.0
      %4248 = vmatpush2.msra.mxu0 0.0
      %4249 = vmatprep.subr.mxu0 0.0
      %4250 = vmatpush2.msra.mxu0 0.0
      %4251 = vmatprep.subr.mxu0 0.0
      %4252 = vmatpush2.msra.mxu0 0.0
      %4253 = vmatprep.subr.mxu0 0.0
      %4254 = vmatpush2.msra.mxu0 0.0
      %4255 = vmatprep.subr.mxu0 0.0
      %4256 = vmatpush2.msra.mxu0 0.0
      %4257 = vmatprep.subr.mxu0 0.0
      %4258 = vmatpush2.msra.mxu0 0.0
      %4259 = vmatprep.subr.mxu0 0.0
      %4260 = vmatpush2.msra.mxu0 0.0
      %4261 = vmatprep.subr.mxu0 0.0
      %4262 = vmatpush2.msra.mxu0 0.0
      %4263 = vmatprep.subr.mxu0 0.0
      %4264 = vmatpush2.msra.mxu0 0.0
      %4265 = vmatprep.subr.mxu0 0.0
      %4266 = vmatpush2.msra.mxu0 0.0
      %4267 = vmatprep.subr.mxu0 0.0
      %4268 = vmatpush2.msra.mxu0 0.0
      %4269 = vmatprep.subr.mxu0 0.0
      %4270 = vmatpush2.msra.mxu0 0.0
      %4271 = vmatprep.subr.mxu0 0.0
      %4272 = vmatpush2.msra.mxu0 0.0
      %4273 = vmatprep.subr.mxu0 0.0
      %4274 = vmatpush2.msra.mxu0 0.0
      %4275 = vmatprep.subr.mxu0 0.0
      %4276 = vmatpush2.msra.mxu0 0.0
      %4277 = vmatprep.mubr.f32.mxu0 0.0
      %4278 = vmatmul.mubr.f32.gmra.mxu0 %v4211
      %v4279 = vpop.f32.mrf.mxu0
      %v4280 = vadd.f32 0.0, %v4279
      %v4281 = vpop.f32.mrf.mxu0
      %4282 = vdwg.mxu0
      %4283 = vrot.lane.b32.xlu0 %v418, 48
      %v4284 = vpop.permute.xlu0 %4283
      %v4287 = vsel %vm437, %v3825, 0
      %4289 = vmatprep.subr.mxu0 0.0
      %4290 = vmatpush1.msra.mxu0 0.0
      %4291 = vmatprep.subr.mxu0 0.0
      %4292 = vmatpush1.msra.mxu0 0.0
      %4293 = vmatprep.subr.mxu0 0.0
      %4294 = vmatpush1.msra.mxu0 0.0
      %4295 = vmatprep.subr.mxu0 0.0
      %4296 = vmatpush1.msra.mxu0 0.0
      %4297 = vmatprep.subr.mxu0 0.0
      %4298 = vmatpush1.msra.mxu0 0.0
      %4299 = vmatprep.subr.mxu0 0.0
      %4300 = vmatpush1.msra.mxu0 0.0
      %4301 = vmatprep.subr.mxu0 0.0
      %4302 = vmatpush1.msra.mxu0 0.0
      %4303 = vmatprep.subr.mxu0 0.0
      %4304 = vmatpush1.msra.mxu0 0.0
      %4305 = vmatprep.subr.mxu0 0.0
      %4306 = vmatpush1.msra.mxu0 0.0
      %4307 = vmatprep.subr.mxu0 0.0
      %4308 = vmatpush1.msra.mxu0 0.0
      %4309 = vmatprep.subr.mxu0 0.0
      %4310 = vmatpush1.msra.mxu0 0.0
      %4311 = vmatprep.subr.mxu0 0.0
      %4312 = vmatpush1.msra.mxu0 0.0
      %4313 = vmatprep.subr.mxu0 0.0
      %4314 = vmatpush1.msra.mxu0 0.0
      %4315 = vmatprep.subr.mxu0 0.0
      %4316 = vmatpush1.msra.mxu0 0.0
      %4317 = vmatprep.subr.mxu0 0.0
      %4318 = vmatpush1.msra.mxu0 0.0
      %4319 = vmatprep.subr.mxu0 0.0
      %4320 = vmatpush1.msra.mxu0 %v4284
      %4321 = vmatprep.subr.mxu0 0.0
      %4322 = vmatpush2.msra.mxu0 0.0
      %4323 = vmatprep.subr.mxu0 0.0
      %4324 = vmatpush2.msra.mxu0 0.0
      %4325 = vmatprep.subr.mxu0 0.0
      %4326 = vmatpush2.msra.mxu0 0.0
      %4327 = vmatprep.subr.mxu0 0.0
      %4328 = vmatpush2.msra.mxu0 0.0
      %4329 = vmatprep.subr.mxu0 0.0
      %4330 = vmatpush2.msra.mxu0 0.0
      %4331 = vmatprep.subr.mxu0 0.0
      %4332 = vmatpush2.msra.mxu0 0.0
      %4333 = vmatprep.subr.mxu0 0.0
      %4334 = vmatpush2.msra.mxu0 0.0
      %4335 = vmatprep.subr.mxu0 0.0
      %4336 = vmatpush2.msra.mxu0 0.0
      %4337 = vmatprep.subr.mxu0 0.0
      %4338 = vmatpush2.msra.mxu0 0.0
      %4339 = vmatprep.subr.mxu0 0.0
      %4340 = vmatpush2.msra.mxu0 0.0
      %4341 = vmatprep.subr.mxu0 0.0
      %4342 = vmatpush2.msra.mxu0 0.0
      %4343 = vmatprep.subr.mxu0 0.0
      %4344 = vmatpush2.msra.mxu0 0.0
      %4345 = vmatprep.subr.mxu0 0.0
      %4346 = vmatpush2.msra.mxu0 0.0
      %4347 = vmatprep.subr.mxu0 0.0
      %4348 = vmatpush2.msra.mxu0 0.0
      %4349 = vmatprep.subr.mxu0 0.0
      %4350 = vmatpush2.msra.mxu0 0.0
      %4351 = vmatprep.subr.mxu0 0.0
      %4352 = vmatpush2.msra.mxu0 0.0
      %4353 = vmatprep.mubr.f32.mxu0 0.0
      %4354 = vmatmul.mubr.f32.gmra.mxu0 %v4287
      %v4355 = vpop.f32.mrf.mxu0
      %v4356 = vadd.f32 0.0, %v4355
      %v4357 = vpop.f32.mrf.mxu0
      %4358 = vdwg.mxu0
      %4359 = vrot.lane.b32.xlu0 %v423, 48
      %v4360 = vpop.permute.xlu0 %4359
      %v4363 = vsel %vm437, %v3826, 0
      %4365 = vmatprep.subr.mxu0 0.0
      %4366 = vmatpush1.msra.mxu0 0.0
      %4367 = vmatprep.subr.mxu0 0.0
      %4368 = vmatpush1.msra.mxu0 0.0
      %4369 = vmatprep.subr.mxu0 0.0
      %4370 = vmatpush1.msra.mxu0 0.0
      %4371 = vmatprep.subr.mxu0 0.0
      %4372 = vmatpush1.msra.mxu0 0.0
      %4373 = vmatprep.subr.mxu0 0.0
      %4374 = vmatpush1.msra.mxu0 0.0
      %4375 = vmatprep.subr.mxu0 0.0
      %4376 = vmatpush1.msra.mxu0 0.0
      %4377 = vmatprep.subr.mxu0 0.0
      %4378 = vmatpush1.msra.mxu0 0.0
      %4379 = vmatprep.subr.mxu0 0.0
      %4380 = vmatpush1.msra.mxu0 0.0
      %4381 = vmatprep.subr.mxu0 0.0
      %4382 = vmatpush1.msra.mxu0 0.0
      %4383 = vmatprep.subr.mxu0 0.0
      %4384 = vmatpush1.msra.mxu0 0.0
      %4385 = vmatprep.subr.mxu0 0.0
      %4386 = vmatpush1.msra.mxu0 0.0
      %4387 = vmatprep.subr.mxu0 0.0
      %4388 = vmatpush1.msra.mxu0 0.0
      %4389 = vmatprep.subr.mxu0 0.0
      %4390 = vmatpush1.msra.mxu0 0.0
      %4391 = vmatprep.subr.mxu0 0.0
      %4392 = vmatpush1.msra.mxu0 0.0
      %4393 = vmatprep.subr.mxu0 0.0
      %4394 = vmatpush1.msra.mxu0 0.0
      %4395 = vmatprep.subr.mxu0 0.0
      %4396 = vmatpush1.msra.mxu0 %v4360
      %4397 = vmatprep.subr.mxu0 0.0
      %4398 = vmatpush2.msra.mxu0 0.0
      %4399 = vmatprep.subr.mxu0 0.0
      %4400 = vmatpush2.msra.mxu0 0.0
      %4401 = vmatprep.subr.mxu0 0.0
      %4402 = vmatpush2.msra.mxu0 0.0
      %4403 = vmatprep.subr.mxu0 0.0
      %4404 = vmatpush2.msra.mxu0 0.0
      %4405 = vmatprep.subr.mxu0 0.0
      %4406 = vmatpush2.msra.mxu0 0.0
      %4407 = vmatprep.subr.mxu0 0.0
      %4408 = vmatpush2.msra.mxu0 0.0
      %4409 = vmatprep.subr.mxu0 0.0
      %4410 = vmatpush2.msra.mxu0 0.0
      %4411 = vmatprep.subr.mxu0 0.0
      %4412 = vmatpush2.msra.mxu0 0.0
      %4413 = vmatprep.subr.mxu0 0.0
      %4414 = vmatpush2.msra.mxu0 0.0
      %4415 = vmatprep.subr.mxu0 0.0
      %4416 = vmatpush2.msra.mxu0 0.0
      %4417 = vmatprep.subr.mxu0 0.0
      %4418 = vmatpush2.msra.mxu0 0.0
      %4419 = vmatprep.subr.mxu0 0.0
      %4420 = vmatpush2.msra.mxu0 0.0
      %4421 = vmatprep.subr.mxu0 0.0
      %4422 = vmatpush2.msra.mxu0 0.0
      %4423 = vmatprep.subr.mxu0 0.0
      %4424 = vmatpush2.msra.mxu0 0.0
      %4425 = vmatprep.subr.mxu0 0.0
      %4426 = vmatpush2.msra.mxu0 0.0
      %4427 = vmatprep.subr.mxu0 0.0
      %4428 = vmatpush2.msra.mxu0 0.0
      %4429 = vmatprep.mubr.f32.mxu0 0.0
      %4430 = vmatmul.mubr.f32.gmra.mxu0 %v4363
      %v4431 = vpop.f32.mrf.mxu0
      %v4432 = vadd.f32 0.0, %v4431
      %v4433 = vpop.f32.mrf.mxu0
      %4434 = vdwg.mxu0
      %4435 = vrot.lane.b32.xlu0 %v388, 104
      %v4436 = vpop.permute.xlu0 %4435
      %4437 = vrot.lane.b32.xlu0 %v388, 72
      %v4438 = vpop.permute.xlu0 %4437
      %v4439 = vsel %vm437, %v4436, 0
      %v4441 = vsel %vm437, %v4438, 0
      %4443 = vmatprep.subr.mxu0 0.0
      %4444 = vmatpush1.xpose.msra.mxu0 0.0
      %4445 = vmatprep.subr.mxu0 0.0
      %4446 = vmatpush1.xpose.msra.mxu0 0.0
      %4447 = vmatprep.subr.mxu0 0.0
      %4448 = vmatpush1.xpose.msra.mxu0 0.0
      %4449 = vmatprep.subr.mxu0 0.0
      %4450 = vmatpush1.xpose.msra.mxu0 0.0
      %4451 = vmatprep.subr.mxu0 0.0
      %4452 = vmatpush1.xpose.msra.mxu0 0.0
      %4453 = vmatprep.subr.mxu0 0.0
      %4454 = vmatpush1.xpose.msra.mxu0 0.0
      %4455 = vmatprep.subr.mxu0 0.0
      %4456 = vmatpush1.xpose.msra.mxu0 0.0
      %4457 = vmatprep.subr.mxu0 0.0
      %4458 = vmatpush1.xpose.msra.mxu0 0.0
      %4459 = vmatprep.subr.mxu0 0.0
      %4460 = vmatpush1.xpose.msra.mxu0 0.0
      %4461 = vmatprep.subr.mxu0 0.0
      %4462 = vmatpush1.xpose.msra.mxu0 0.0
      %4463 = vmatprep.subr.mxu0 0.0
      %4464 = vmatpush1.xpose.msra.mxu0 0.0
      %4465 = vmatprep.subr.mxu0 0.0
      %4466 = vmatpush1.xpose.msra.mxu0 0.0
      %4467 = vmatprep.subr.mxu0 0.0
      %4468 = vmatpush1.xpose.msra.mxu0 0.0
      %4469 = vmatprep.subr.mxu0 0.0
      %4470 = vmatpush1.xpose.msra.mxu0 0.0
      %4471 = vmatprep.subr.mxu0 0.0
      %4472 = vmatpush1.xpose.msra.mxu0 0.0
      %4473 = vmatprep.subr.mxu0 0.0
      %4474 = vmatpush1.xpose.msra.mxu0 %v4441
      %4475 = vmatprep.subr.mxu0 0.0
      %4476 = vmatpush2.xpose.msra.mxu0 0.0
      %4477 = vmatprep.subr.mxu0 0.0
      %4478 = vmatpush2.xpose.msra.mxu0 0.0
      %4479 = vmatprep.subr.mxu0 0.0
      %4480 = vmatpush2.xpose.msra.mxu0 0.0
      %4481 = vmatprep.subr.mxu0 0.0
      %4482 = vmatpush2.xpose.msra.mxu0 0.0
      %4483 = vmatprep.subr.mxu0 0.0
      %4484 = vmatpush2.xpose.msra.mxu0 0.0
      %4485 = vmatprep.subr.mxu0 0.0
      %4486 = vmatpush2.xpose.msra.mxu0 0.0
      %4487 = vmatprep.subr.mxu0 0.0
      %4488 = vmatpush2.xpose.msra.mxu0 0.0
      %4489 = vmatprep.subr.mxu0 0.0
      %4490 = vmatpush2.xpose.msra.mxu0 0.0
      %4491 = vmatprep.subr.mxu0 0.0
      %4492 = vmatpush2.xpose.msra.mxu0 0.0
      %4493 = vmatprep.subr.mxu0 0.0
      %4494 = vmatpush2.xpose.msra.mxu0 0.0
      %4495 = vmatprep.subr.mxu0 0.0
      %4496 = vmatpush2.xpose.msra.mxu0 0.0
      %4497 = vmatprep.subr.mxu0 0.0
      %4498 = vmatpush2.xpose.msra.mxu0 0.0
      %4499 = vmatprep.subr.mxu0 0.0
      %4500 = vmatpush2.xpose.msra.mxu0 0.0
      %4501 = vmatprep.subr.mxu0 0.0
      %4502 = vmatpush2.xpose.msra.mxu0 0.0
      %4503 = vmatprep.subr.mxu0 0.0
      %4504 = vmatpush2.xpose.msra.mxu0 0.0
      %4505 = vmatprep.subr.mxu0 0.0
      %4506 = vmatpush2.xpose.msra.mxu0 0.0
      %4507 = vmatprep.mubr.f32.mxu0 0.0
      %4508 = vmatmul.mubr.f32.gmra.mxu0 %v4439
      %v4509 = vpop.f32.mrf.mxu0
      %v4510 = vadd.f32 0.0, %v4509
      %v4511 = vpop.f32.mrf.mxu0
      %4512 = vdwg.mxu0
      %4513 = vrot.lane.b32.xlu0 %v393, 104
      %v4514 = vpop.permute.xlu0 %4513
      %4515 = vrot.lane.b32.xlu0 %v393, 72
      %v4516 = vpop.permute.xlu0 %4515
      %v4517 = vsel %vm437, %v4514, 0
      %v4519 = vsel %vm437, %v4516, 0
      %4521 = vmatprep.subr.mxu0 0.0
      %4522 = vmatpush1.xpose.msra.mxu0 0.0
      %4523 = vmatprep.subr.mxu0 0.0
      %4524 = vmatpush1.xpose.msra.mxu0 0.0
      %4525 = vmatprep.subr.mxu0 0.0
      %4526 = vmatpush1.xpose.msra.mxu0 0.0
      %4527 = vmatprep.subr.mxu0 0.0
      %4528 = vmatpush1.xpose.msra.mxu0 0.0
      %4529 = vmatprep.subr.mxu0 0.0
      %4530 = vmatpush1.xpose.msra.mxu0 0.0
      %4531 = vmatprep.subr.mxu0 0.0
      %4532 = vmatpush1.xpose.msra.mxu0 0.0
      %4533 = vmatprep.subr.mxu0 0.0
      %4534 = vmatpush1.xpose.msra.mxu0 0.0
      %4535 = vmatprep.subr.mxu0 0.0
      %4536 = vmatpush1.xpose.msra.mxu0 0.0
      %4537 = vmatprep.subr.mxu0 0.0
      %4538 = vmatpush1.xpose.msra.mxu0 0.0
      %4539 = vmatprep.subr.mxu0 0.0
      %4540 = vmatpush1.xpose.msra.mxu0 0.0
      %4541 = vmatprep.subr.mxu0 0.0
      %4542 = vmatpush1.xpose.msra.mxu0 0.0
      %4543 = vmatprep.subr.mxu0 0.0
      %4544 = vmatpush1.xpose.msra.mxu0 0.0
      %4545 = vmatprep.subr.mxu0 0.0
      %4546 = vmatpush1.xpose.msra.mxu0 0.0
      %4547 = vmatprep.subr.mxu0 0.0
      %4548 = vmatpush1.xpose.msra.mxu0 0.0
      %4549 = vmatprep.subr.mxu0 0.0
      %4550 = vmatpush1.xpose.msra.mxu0 0.0
      %4551 = vmatprep.subr.mxu0 0.0
      %4552 = vmatpush1.xpose.msra.mxu0 %v4519
      %4553 = vmatprep.subr.mxu0 0.0
      %4554 = vmatpush2.xpose.msra.mxu0 0.0
      %4555 = vmatprep.subr.mxu0 0.0
      %4556 = vmatpush2.xpose.msra.mxu0 0.0
      %4557 = vmatprep.subr.mxu0 0.0
      %4558 = vmatpush2.xpose.msra.mxu0 0.0
      %4559 = vmatprep.subr.mxu0 0.0
      %4560 = vmatpush2.xpose.msra.mxu0 0.0
      %4561 = vmatprep.subr.mxu0 0.0
      %4562 = vmatpush2.xpose.msra.mxu0 0.0
      %4563 = vmatprep.subr.mxu0 0.0
      %4564 = vmatpush2.xpose.msra.mxu0 0.0
      %4565 = vmatprep.subr.mxu0 0.0
      %4566 = vmatpush2.xpose.msra.mxu0 0.0
      %4567 = vmatprep.subr.mxu0 0.0
      %4568 = vmatpush2.xpose.msra.mxu0 0.0
      %4569 = vmatprep.subr.mxu0 0.0
      %4570 = vmatpush2.xpose.msra.mxu0 0.0
      %4571 = vmatprep.subr.mxu0 0.0
      %4572 = vmatpush2.xpose.msra.mxu0 0.0
      %4573 = vmatprep.subr.mxu0 0.0
      %4574 = vmatpush2.xpose.msra.mxu0 0.0
      %4575 = vmatprep.subr.mxu0 0.0
      %4576 = vmatpush2.xpose.msra.mxu0 0.0
      %4577 = vmatprep.subr.mxu0 0.0
      %4578 = vmatpush2.xpose.msra.mxu0 0.0
      %4579 = vmatprep.subr.mxu0 0.0
      %4580 = vmatpush2.xpose.msra.mxu0 0.0
      %4581 = vmatprep.subr.mxu0 0.0
      %4582 = vmatpush2.xpose.msra.mxu0 0.0
      %4583 = vmatprep.subr.mxu0 0.0
      %4584 = vmatpush2.xpose.msra.mxu0 0.0
      %4585 = vmatprep.mubr.f32.mxu0 0.0
      %4586 = vmatmul.mubr.f32.gmra.mxu0 %v4517
      %v4587 = vpop.f32.mrf.mxu0
      %v4588 = vadd.f32 0.0, %v4587
      %v4589 = vpop.f32.mrf.mxu0
      %4590 = vdwg.mxu0
      %4591 = vrot.lane.b32.xlu0 %v398, 104
      %v4592 = vpop.permute.xlu0 %4591
      %4593 = vrot.lane.b32.xlu0 %v398, 72
      %v4594 = vpop.permute.xlu0 %4593
      %v4595 = vsel %vm437, %v4592, 0
      %v4597 = vsel %vm437, %v4594, 0
      %4599 = vmatprep.subr.mxu0 0.0
      %4600 = vmatpush1.xpose.msra.mxu0 0.0
      %4601 = vmatprep.subr.mxu0 0.0
      %4602 = vmatpush1.xpose.msra.mxu0 0.0
      %4603 = vmatprep.subr.mxu0 0.0
      %4604 = vmatpush1.xpose.msra.mxu0 0.0
      %4605 = vmatprep.subr.mxu0 0.0
      %4606 = vmatpush1.xpose.msra.mxu0 0.0
      %4607 = vmatprep.subr.mxu0 0.0
      %4608 = vmatpush1.xpose.msra.mxu0 0.0
      %4609 = vmatprep.subr.mxu0 0.0
      %4610 = vmatpush1.xpose.msra.mxu0 0.0
      %4611 = vmatprep.subr.mxu0 0.0
      %4612 = vmatpush1.xpose.msra.mxu0 0.0
      %4613 = vmatprep.subr.mxu0 0.0
      %4614 = vmatpush1.xpose.msra.mxu0 0.0
      %4615 = vmatprep.subr.mxu0 0.0
      %4616 = vmatpush1.xpose.msra.mxu0 0.0
      %4617 = vmatprep.subr.mxu0 0.0
      %4618 = vmatpush1.xpose.msra.mxu0 0.0
      %4619 = vmatprep.subr.mxu0 0.0
      %4620 = vmatpush1.xpose.msra.mxu0 0.0
      %4621 = vmatprep.subr.mxu0 0.0
      %4622 = vmatpush1.xpose.msra.mxu0 0.0
      %4623 = vmatprep.subr.mxu0 0.0
      %4624 = vmatpush1.xpose.msra.mxu0 0.0
      %4625 = vmatprep.subr.mxu0 0.0
      %4626 = vmatpush1.xpose.msra.mxu0 0.0
      %4627 = vmatprep.subr.mxu0 0.0
      %4628 = vmatpush1.xpose.msra.mxu0 0.0
      %4629 = vmatprep.subr.mxu0 0.0
      %4630 = vmatpush1.xpose.msra.mxu0 %v4597
      %4631 = vmatprep.subr.mxu0 0.0
      %4632 = vmatpush2.xpose.msra.mxu0 0.0
      %4633 = vmatprep.subr.mxu0 0.0
      %4634 = vmatpush2.xpose.msra.mxu0 0.0
      %4635 = vmatprep.subr.mxu0 0.0
      %4636 = vmatpush2.xpose.msra.mxu0 0.0
      %4637 = vmatprep.subr.mxu0 0.0
      %4638 = vmatpush2.xpose.msra.mxu0 0.0
      %4639 = vmatprep.subr.mxu0 0.0
      %4640 = vmatpush2.xpose.msra.mxu0 0.0
      %4641 = vmatprep.subr.mxu0 0.0
      %4642 = vmatpush2.xpose.msra.mxu0 0.0
      %4643 = vmatprep.subr.mxu0 0.0
      %4644 = vmatpush2.xpose.msra.mxu0 0.0
      %4645 = vmatprep.subr.mxu0 0.0
      %4646 = vmatpush2.xpose.msra.mxu0 0.0
      %4647 = vmatprep.subr.mxu0 0.0
      %4648 = vmatpush2.xpose.msra.mxu0 0.0
      %4649 = vmatprep.subr.mxu0 0.0
      %4650 = vmatpush2.xpose.msra.mxu0 0.0
      %4651 = vmatprep.subr.mxu0 0.0
      %4652 = vmatpush2.xpose.msra.mxu0 0.0
      %4653 = vmatprep.subr.mxu0 0.0
      %4654 = vmatpush2.xpose.msra.mxu0 0.0
      %4655 = vmatprep.subr.mxu0 0.0
      %4656 = vmatpush2.xpose.msra.mxu0 0.0
      %4657 = vmatprep.subr.mxu0 0.0
      %4658 = vmatpush2.xpose.msra.mxu0 0.0
      %4659 = vmatprep.subr.mxu0 0.0
      %4660 = vmatpush2.xpose.msra.mxu0 0.0
      %4661 = vmatprep.subr.mxu0 0.0
      %4662 = vmatpush2.xpose.msra.mxu0 0.0
      %4663 = vmatprep.mubr.f32.mxu0 0.0
      %4664 = vmatmul.mubr.f32.gmra.mxu0 %v4595
      %v4665 = vpop.f32.mrf.mxu0
      %v4666 = vadd.f32 0.0, %v4665
      %v4667 = vpop.f32.mrf.mxu0
      %4668 = vdwg.mxu0
      %4669 = vrot.lane.b32.xlu0 %v403, 104
      %v4670 = vpop.permute.xlu0 %4669
      %4671 = vrot.lane.b32.xlu0 %v403, 72
      %v4672 = vpop.permute.xlu0 %4671
      %v4673 = vsel %vm437, %v4670, 0
      %v4675 = vsel %vm437, %v4672, 0
      %4677 = vmatprep.subr.mxu0 0.0
      %4678 = vmatpush1.xpose.msra.mxu0 0.0
      %4679 = vmatprep.subr.mxu0 0.0
      %4680 = vmatpush1.xpose.msra.mxu0 0.0
      %4681 = vmatprep.subr.mxu0 0.0
      %4682 = vmatpush1.xpose.msra.mxu0 0.0
      %4683 = vmatprep.subr.mxu0 0.0
      %4684 = vmatpush1.xpose.msra.mxu0 0.0
      %4685 = vmatprep.subr.mxu0 0.0
      %4686 = vmatpush1.xpose.msra.mxu0 0.0
      %4687 = vmatprep.subr.mxu0 0.0
      %4688 = vmatpush1.xpose.msra.mxu0 0.0
      %4689 = vmatprep.subr.mxu0 0.0
      %4690 = vmatpush1.xpose.msra.mxu0 0.0
      %4691 = vmatprep.subr.mxu0 0.0
      %4692 = vmatpush1.xpose.msra.mxu0 0.0
      %4693 = vmatprep.subr.mxu0 0.0
      %4694 = vmatpush1.xpose.msra.mxu0 0.0
      %4695 = vmatprep.subr.mxu0 0.0
      %4696 = vmatpush1.xpose.msra.mxu0 0.0
      %4697 = vmatprep.subr.mxu0 0.0
      %4698 = vmatpush1.xpose.msra.mxu0 0.0
      %4699 = vmatprep.subr.mxu0 0.0
      %4700 = vmatpush1.xpose.msra.mxu0 0.0
      %4701 = vmatprep.subr.mxu0 0.0
      %4702 = vmatpush1.xpose.msra.mxu0 0.0
      %4703 = vmatprep.subr.mxu0 0.0
      %4704 = vmatpush1.xpose.msra.mxu0 0.0
      %4705 = vmatprep.subr.mxu0 0.0
      %4706 = vmatpush1.xpose.msra.mxu0 0.0
      %4707 = vmatprep.subr.mxu0 0.0
      %4708 = vmatpush1.xpose.msra.mxu0 %v4675
      %4709 = vmatprep.subr.mxu0 0.0
      %4710 = vmatpush2.xpose.msra.mxu0 0.0
      %4711 = vmatprep.subr.mxu0 0.0
      %4712 = vmatpush2.xpose.msra.mxu0 0.0
      %4713 = vmatprep.subr.mxu0 0.0
      %4714 = vmatpush2.xpose.msra.mxu0 0.0
      %4715 = vmatprep.subr.mxu0 0.0
      %4716 = vmatpush2.xpose.msra.mxu0 0.0
      %4717 = vmatprep.subr.mxu0 0.0
      %4718 = vmatpush2.xpose.msra.mxu0 0.0
      %4719 = vmatprep.subr.mxu0 0.0
      %4720 = vmatpush2.xpose.msra.mxu0 0.0
      %4721 = vmatprep.subr.mxu0 0.0
      %4722 = vmatpush2.xpose.msra.mxu0 0.0
      %4723 = vmatprep.subr.mxu0 0.0
      %4724 = vmatpush2.xpose.msra.mxu0 0.0
      %4725 = vmatprep.subr.mxu0 0.0
      %4726 = vmatpush2.xpose.msra.mxu0 0.0
      %4727 = vmatprep.subr.mxu0 0.0
      %4728 = vmatpush2.xpose.msra.mxu0 0.0
      %4729 = vmatprep.subr.mxu0 0.0
      %4730 = vmatpush2.xpose.msra.mxu0 0.0
      %4731 = vmatprep.subr.mxu0 0.0
      %4732 = vmatpush2.xpose.msra.mxu0 0.0
      %4733 = vmatprep.subr.mxu0 0.0
      %4734 = vmatpush2.xpose.msra.mxu0 0.0
      %4735 = vmatprep.subr.mxu0 0.0
      %4736 = vmatpush2.xpose.msra.mxu0 0.0
      %4737 = vmatprep.subr.mxu0 0.0
      %4738 = vmatpush2.xpose.msra.mxu0 0.0
      %4739 = vmatprep.subr.mxu0 0.0
      %4740 = vmatpush2.xpose.msra.mxu0 0.0
      %4741 = vmatprep.mubr.f32.mxu0 0.0
      %4742 = vmatmul.mubr.f32.gmra.mxu0 %v4673
      %v4743 = vpop.f32.mrf.mxu0
      %v4744 = vadd.f32 0.0, %v4743
      %v4745 = vpop.f32.mrf.mxu0
      %4746 = vdwg.mxu0
      %4747 = vrot.lane.b32.xlu0 %v408, 104
      %v4748 = vpop.permute.xlu0 %4747
      %4749 = vrot.lane.b32.xlu0 %v408, 72
      %v4750 = vpop.permute.xlu0 %4749
      %v4751 = vsel %vm437, %v4748, 0
      %v4753 = vsel %vm437, %v4750, 0
      %4755 = vmatprep.subr.mxu0 0.0
      %4756 = vmatpush1.xpose.msra.mxu0 0.0
      %4757 = vmatprep.subr.mxu0 0.0
      %4758 = vmatpush1.xpose.msra.mxu0 0.0
      %4759 = vmatprep.subr.mxu0 0.0
      %4760 = vmatpush1.xpose.msra.mxu0 0.0
      %4761 = vmatprep.subr.mxu0 0.0
      %4762 = vmatpush1.xpose.msra.mxu0 0.0
      %4763 = vmatprep.subr.mxu0 0.0
      %4764 = vmatpush1.xpose.msra.mxu0 0.0
      %4765 = vmatprep.subr.mxu0 0.0
      %4766 = vmatpush1.xpose.msra.mxu0 0.0
      %4767 = vmatprep.subr.mxu0 0.0
      %4768 = vmatpush1.xpose.msra.mxu0 0.0
      %4769 = vmatprep.subr.mxu0 0.0
      %4770 = vmatpush1.xpose.msra.mxu0 0.0
      %4771 = vmatprep.subr.mxu0 0.0
      %4772 = vmatpush1.xpose.msra.mxu0 0.0
      %4773 = vmatprep.subr.mxu0 0.0
      %4774 = vmatpush1.xpose.msra.mxu0 0.0
      %4775 = vmatprep.subr.mxu0 0.0
      %4776 = vmatpush1.xpose.msra.mxu0 0.0
      %4777 = vmatprep.subr.mxu0 0.0
      %4778 = vmatpush1.xpose.msra.mxu0 0.0
      %4779 = vmatprep.subr.mxu0 0.0
      %4780 = vmatpush1.xpose.msra.mxu0 0.0
      %4781 = vmatprep.subr.mxu0 0.0
      %4782 = vmatpush1.xpose.msra.mxu0 0.0
      %4783 = vmatprep.subr.mxu0 0.0
      %4784 = vmatpush1.xpose.msra.mxu0 0.0
      %4785 = vmatprep.subr.mxu0 0.0
      %4786 = vmatpush1.xpose.msra.mxu0 %v4753
      %4787 = vmatprep.subr.mxu0 0.0
      %4788 = vmatpush2.xpose.msra.mxu0 0.0
      %4789 = vmatprep.subr.mxu0 0.0
      %4790 = vmatpush2.xpose.msra.mxu0 0.0
      %4791 = vmatprep.subr.mxu0 0.0
      %4792 = vmatpush2.xpose.msra.mxu0 0.0
      %4793 = vmatprep.subr.mxu0 0.0
      %4794 = vmatpush2.xpose.msra.mxu0 0.0
      %4795 = vmatprep.subr.mxu0 0.0
      %4796 = vmatpush2.xpose.msra.mxu0 0.0
      %4797 = vmatprep.subr.mxu0 0.0
      %4798 = vmatpush2.xpose.msra.mxu0 0.0
      %4799 = vmatprep.subr.mxu0 0.0
      %4800 = vmatpush2.xpose.msra.mxu0 0.0
      %4801 = vmatprep.subr.mxu0 0.0
      %4802 = vmatpush2.xpose.msra.mxu0 0.0
      %4803 = vmatprep.subr.mxu0 0.0
      %4804 = vmatpush2.xpose.msra.mxu0 0.0
      %4805 = vmatprep.subr.mxu0 0.0
      %4806 = vmatpush2.xpose.msra.mxu0 0.0
      %4807 = vmatprep.subr.mxu0 0.0
      %4808 = vmatpush2.xpose.msra.mxu0 0.0
      %4809 = vmatprep.subr.mxu0 0.0
      %4810 = vmatpush2.xpose.msra.mxu0 0.0
      %4811 = vmatprep.subr.mxu0 0.0
      %4812 = vmatpush2.xpose.msra.mxu0 0.0
      %4813 = vmatprep.subr.mxu0 0.0
      %4814 = vmatpush2.xpose.msra.mxu0 0.0
      %4815 = vmatprep.subr.mxu0 0.0
      %4816 = vmatpush2.xpose.msra.mxu0 0.0
      %4817 = vmatprep.subr.mxu0 0.0
      %4818 = vmatpush2.xpose.msra.mxu0 0.0
      %4819 = vmatprep.mubr.f32.mxu0 0.0
      %4820 = vmatmul.mubr.f32.gmra.mxu0 %v4751
      %v4821 = vpop.f32.mrf.mxu0
      %v4822 = vadd.f32 0.0, %v4821
      %v4823 = vpop.f32.mrf.mxu0
      %4824 = vdwg.mxu0
      %4825 = vrot.lane.b32.xlu0 %v413, 104
      %v4826 = vpop.permute.xlu0 %4825
      %4827 = vrot.lane.b32.xlu0 %v413, 72
      %v4828 = vpop.permute.xlu0 %4827
      %v4829 = vsel %vm437, %v4826, 0
      %v4831 = vsel %vm437, %v4828, 0
      %4833 = vmatprep.subr.mxu0 0.0
      %4834 = vmatpush1.xpose.msra.mxu0 0.0
      %4835 = vmatprep.subr.mxu0 0.0
      %4836 = vmatpush1.xpose.msra.mxu0 0.0
      %4837 = vmatprep.subr.mxu0 0.0
      %4838 = vmatpush1.xpose.msra.mxu0 0.0
      %4839 = vmatprep.subr.mxu0 0.0
      %4840 = vmatpush1.xpose.msra.mxu0 0.0
      %4841 = vmatprep.subr.mxu0 0.0
      %4842 = vmatpush1.xpose.msra.mxu0 0.0
      %4843 = vmatprep.subr.mxu0 0.0
      %4844 = vmatpush1.xpose.msra.mxu0 0.0
      %4845 = vmatprep.subr.mxu0 0.0
      %4846 = vmatpush1.xpose.msra.mxu0 0.0
      %4847 = vmatprep.subr.mxu0 0.0
      %4848 = vmatpush1.xpose.msra.mxu0 0.0
      %4849 = vmatprep.subr.mxu0 0.0
      %4850 = vmatpush1.xpose.msra.mxu0 0.0
      %4851 = vmatprep.subr.mxu0 0.0
      %4852 = vmatpush1.xpose.msra.mxu0 0.0
      %4853 = vmatprep.subr.mxu0 0.0
      %4854 = vmatpush1.xpose.msra.mxu0 0.0
      %4855 = vmatprep.subr.mxu0 0.0
      %4856 = vmatpush1.xpose.msra.mxu0 0.0
      %4857 = vmatprep.subr.mxu0 0.0
      %4858 = vmatpush1.xpose.msra.mxu0 0.0
      %4859 = vmatprep.subr.mxu0 0.0
      %4860 = vmatpush1.xpose.msra.mxu0 0.0
      %4861 = vmatprep.subr.mxu0 0.0
      %4862 = vmatpush1.xpose.msra.mxu0 0.0
      %4863 = vmatprep.subr.mxu0 0.0
      %4864 = vmatpush1.xpose.msra.mxu0 %v4831
      %4865 = vmatprep.subr.mxu0 0.0
      %4866 = vmatpush2.xpose.msra.mxu0 0.0
      %4867 = vmatprep.subr.mxu0 0.0
      %4868 = vmatpush2.xpose.msra.mxu0 0.0
      %4869 = vmatprep.subr.mxu0 0.0
      %4870 = vmatpush2.xpose.msra.mxu0 0.0
      %4871 = vmatprep.subr.mxu0 0.0
      %4872 = vmatpush2.xpose.msra.mxu0 0.0
      %4873 = vmatprep.subr.mxu0 0.0
      %4874 = vmatpush2.xpose.msra.mxu0 0.0
      %4875 = vmatprep.subr.mxu0 0.0
      %4876 = vmatpush2.xpose.msra.mxu0 0.0
      %4877 = vmatprep.subr.mxu0 0.0
      %4878 = vmatpush2.xpose.msra.mxu0 0.0
      %4879 = vmatprep.subr.mxu0 0.0
      %4880 = vmatpush2.xpose.msra.mxu0 0.0
      %4881 = vmatprep.subr.mxu0 0.0
      %4882 = vmatpush2.xpose.msra.mxu0 0.0
      %4883 = vmatprep.subr.mxu0 0.0
      %4884 = vmatpush2.xpose.msra.mxu0 0.0
      %4885 = vmatprep.subr.mxu0 0.0
      %4886 = vmatpush2.xpose.msra.mxu0 0.0
      %4887 = vmatprep.subr.mxu0 0.0
      %4888 = vmatpush2.xpose.msra.mxu0 0.0
      %4889 = vmatprep.subr.mxu0 0.0
      %4890 = vmatpush2.xpose.msra.mxu0 0.0
      %4891 = vmatprep.subr.mxu0 0.0
      %4892 = vmatpush2.xpose.msra.mxu0 0.0
      %4893 = vmatprep.subr.mxu0 0.0
      %4894 = vmatpush2.xpose.msra.mxu0 0.0
      %4895 = vmatprep.subr.mxu0 0.0
      %4896 = vmatpush2.xpose.msra.mxu0 0.0
      %4897 = vmatprep.mubr.f32.mxu0 0.0
      %4898 = vmatmul.mubr.f32.gmra.mxu0 %v4829
      %v4899 = vpop.f32.mrf.mxu0
      %v4900 = vadd.f32 0.0, %v4899
      %v4901 = vpop.f32.mrf.mxu0
      %4902 = vdwg.mxu0
      %4903 = vrot.lane.b32.xlu0 %v418, 104
      %v4904 = vpop.permute.xlu0 %4903
      %4905 = vrot.lane.b32.xlu0 %v418, 72
      %v4906 = vpop.permute.xlu0 %4905
      %v4907 = vsel %vm437, %v4904, 0
      %v4909 = vsel %vm437, %v4906, 0
      %4911 = vmatprep.subr.mxu0 0.0
      %4912 = vmatpush1.xpose.msra.mxu0 0.0
      %4913 = vmatprep.subr.mxu0 0.0
      %4914 = vmatpush1.xpose.msra.mxu0 0.0
      %4915 = vmatprep.subr.mxu0 0.0
      %4916 = vmatpush1.xpose.msra.mxu0 0.0
      %4917 = vmatprep.subr.mxu0 0.0
      %4918 = vmatpush1.xpose.msra.mxu0 0.0
      %4919 = vmatprep.subr.mxu0 0.0
      %4920 = vmatpush1.xpose.msra.mxu0 0.0
      %4921 = vmatprep.subr.mxu0 0.0
      %4922 = vmatpush1.xpose.msra.mxu0 0.0
      %4923 = vmatprep.subr.mxu0 0.0
      %4924 = vmatpush1.xpose.msra.mxu0 0.0
      %4925 = vmatprep.subr.mxu0 0.0
      %4926 = vmatpush1.xpose.msra.mxu0 0.0
      %4927 = vmatprep.subr.mxu0 0.0
      %4928 = vmatpush1.xpose.msra.mxu0 0.0
      %4929 = vmatprep.subr.mxu0 0.0
      %4930 = vmatpush1.xpose.msra.mxu0 0.0
      %4931 = vmatprep.subr.mxu0 0.0
      %4932 = vmatpush1.xpose.msra.mxu0 0.0
      %4933 = vmatprep.subr.mxu0 0.0
      %4934 = vmatpush1.xpose.msra.mxu0 0.0
      %4935 = vmatprep.subr.mxu0 0.0
      %4936 = vmatpush1.xpose.msra.mxu0 0.0
      %4937 = vmatprep.subr.mxu0 0.0
      %4938 = vmatpush1.xpose.msra.mxu0 0.0
      %4939 = vmatprep.subr.mxu0 0.0
      %4940 = vmatpush1.xpose.msra.mxu0 0.0
      %4941 = vmatprep.subr.mxu0 0.0
      %4942 = vmatpush1.xpose.msra.mxu0 %v4909
      %4943 = vmatprep.subr.mxu0 0.0
      %4944 = vmatpush2.xpose.msra.mxu0 0.0
      %4945 = vmatprep.subr.mxu0 0.0
      %4946 = vmatpush2.xpose.msra.mxu0 0.0
      %4947 = vmatprep.subr.mxu0 0.0
      %4948 = vmatpush2.xpose.msra.mxu0 0.0
      %4949 = vmatprep.subr.mxu0 0.0
      %4950 = vmatpush2.xpose.msra.mxu0 0.0
      %4951 = vmatprep.subr.mxu0 0.0
      %4952 = vmatpush2.xpose.msra.mxu0 0.0
      %4953 = vmatprep.subr.mxu0 0.0
      %4954 = vmatpush2.xpose.msra.mxu0 0.0
      %4955 = vmatprep.subr.mxu0 0.0
      %4956 = vmatpush2.xpose.msra.mxu0 0.0
      %4957 = vmatprep.subr.mxu0 0.0
      %4958 = vmatpush2.xpose.msra.mxu0 0.0
      %4959 = vmatprep.subr.mxu0 0.0
      %4960 = vmatpush2.xpose.msra.mxu0 0.0
      %4961 = vmatprep.subr.mxu0 0.0
      %4962 = vmatpush2.xpose.msra.mxu0 0.0
      %4963 = vmatprep.subr.mxu0 0.0
      %4964 = vmatpush2.xpose.msra.mxu0 0.0
      %4965 = vmatprep.subr.mxu0 0.0
      %4966 = vmatpush2.xpose.msra.mxu0 0.0
      %4967 = vmatprep.subr.mxu0 0.0
      %4968 = vmatpush2.xpose.msra.mxu0 0.0
      %4969 = vmatprep.subr.mxu0 0.0
      %4970 = vmatpush2.xpose.msra.mxu0 0.0
      %4971 = vmatprep.subr.mxu0 0.0
      %4972 = vmatpush2.xpose.msra.mxu0 0.0
      %4973 = vmatprep.subr.mxu0 0.0
      %4974 = vmatpush2.xpose.msra.mxu0 0.0
      %4975 = vmatprep.mubr.f32.mxu0 0.0
      %4976 = vmatmul.mubr.f32.gmra.mxu0 %v4907
      %v4977 = vpop.f32.mrf.mxu0
      %v4978 = vadd.f32 0.0, %v4977
      %v4979 = vpop.f32.mrf.mxu0
      %4980 = vdwg.mxu0
      %4981 = vrot.lane.b32.xlu0 %v423, 104
      %v4982 = vpop.permute.xlu0 %4981
      %4983 = vrot.lane.b32.xlu0 %v423, 72
      %v4984 = vpop.permute.xlu0 %4983
      %v4985 = vsel %vm437, %v4982, 0
      %v4987 = vsel %vm437, %v4984, 0
      %4989 = vmatprep.subr.mxu0 0.0
      %4990 = vmatpush1.xpose.msra.mxu0 0.0
      %4991 = vmatprep.subr.mxu0 0.0
      %4992 = vmatpush1.xpose.msra.mxu0 0.0
      %4993 = vmatprep.subr.mxu0 0.0
      %4994 = vmatpush1.xpose.msra.mxu0 0.0
      %4995 = vmatprep.subr.mxu0 0.0
      %4996 = vmatpush1.xpose.msra.mxu0 0.0
      %4997 = vmatprep.subr.mxu0 0.0
      %4998 = vmatpush1.xpose.msra.mxu0 0.0
      %4999 = vmatprep.subr.mxu0 0.0
      %5000 = vmatpush1.xpose.msra.mxu0 0.0
      %5001 = vmatprep.subr.mxu0 0.0
      %5002 = vmatpush1.xpose.msra.mxu0 0.0
      %5003 = vmatprep.subr.mxu0 0.0
      %5004 = vmatpush1.xpose.msra.mxu0 0.0
      %5005 = vmatprep.subr.mxu0 0.0
      %5006 = vmatpush1.xpose.msra.mxu0 0.0
      %5007 = vmatprep.subr.mxu0 0.0
      %5008 = vmatpush1.xpose.msra.mxu0 0.0
      %5009 = vmatprep.subr.mxu0 0.0
      %5010 = vmatpush1.xpose.msra.mxu0 0.0
      %5011 = vmatprep.subr.mxu0 0.0
      %5012 = vmatpush1.xpose.msra.mxu0 0.0
      %5013 = vmatprep.subr.mxu0 0.0
      %5014 = vmatpush1.xpose.msra.mxu0 0.0
      %5015 = vmatprep.subr.mxu0 0.0
      %5016 = vmatpush1.xpose.msra.mxu0 0.0
      %5017 = vmatprep.subr.mxu0 0.0
      %5018 = vmatpush1.xpose.msra.mxu0 0.0
      %5019 = vmatprep.subr.mxu0 0.0
      %5020 = vmatpush1.xpose.msra.mxu0 %v4987
      %5021 = vmatprep.subr.mxu0 0.0
      %5022 = vmatpush2.xpose.msra.mxu0 0.0
      %5023 = vmatprep.subr.mxu0 0.0
      %5024 = vmatpush2.xpose.msra.mxu0 0.0
      %5025 = vmatprep.subr.mxu0 0.0
      %5026 = vmatpush2.xpose.msra.mxu0 0.0
      %5027 = vmatprep.subr.mxu0 0.0
      %5028 = vmatpush2.xpose.msra.mxu0 0.0
      %5029 = vmatprep.subr.mxu0 0.0
      %5030 = vmatpush2.xpose.msra.mxu0 0.0
      %5031 = vmatprep.subr.mxu0 0.0
      %5032 = vmatpush2.xpose.msra.mxu0 0.0
      %5033 = vmatprep.subr.mxu0 0.0
      %5034 = vmatpush2.xpose.msra.mxu0 0.0
      %5035 = vmatprep.subr.mxu0 0.0
      %5036 = vmatpush2.xpose.msra.mxu0 0.0
      %5037 = vmatprep.subr.mxu0 0.0
      %5038 = vmatpush2.xpose.msra.mxu0 0.0
      %5039 = vmatprep.subr.mxu0 0.0
      %5040 = vmatpush2.xpose.msra.mxu0 0.0
      %5041 = vmatprep.subr.mxu0 0.0
      %5042 = vmatpush2.xpose.msra.mxu0 0.0
      %5043 = vmatprep.subr.mxu0 0.0
      %5044 = vmatpush2.xpose.msra.mxu0 0.0
      %5045 = vmatprep.subr.mxu0 0.0
      %5046 = vmatpush2.xpose.msra.mxu0 0.0
      %5047 = vmatprep.subr.mxu0 0.0
      %5048 = vmatpush2.xpose.msra.mxu0 0.0
      %5049 = vmatprep.subr.mxu0 0.0
      %5050 = vmatpush2.xpose.msra.mxu0 0.0
      %5051 = vmatprep.subr.mxu0 0.0
      %5052 = vmatpush2.xpose.msra.mxu0 0.0
      %5053 = vmatprep.mubr.f32.mxu0 0.0
      %5054 = vmatmul.mubr.f32.gmra.mxu0 %v4985
      %v5055 = vpop.f32.mrf.mxu0
      %v5056 = vadd.f32 0.0, %v5055
      %v5057 = vpop.f32.mrf.mxu0
      %5058 = vdwg.mxu0
      %v5059 = vmul.f32 %v4510, 0.35355338
      %v5060 = vmul.f32 %v4588, 0.35355338
      %v5061 = vmul.f32 %v4666, 0.35355338
      %v5062 = vmul.f32 %v4744, 0.35355338
      %v5063 = vmul.f32 %v4822, 0.35355338
      %v5064 = vmul.f32 %v4900, 0.35355338
      %v5065 = vmul.f32 %v4978, 0.35355338
      %v5066 = vmul.f32 %v5056, 0.35355338
      %v5067 = vadd.f32 %v5059, %v426
      %v5068 = vadd.f32 %v5060, %v427
      %v5069 = vadd.f32 %v5061, %v428
      %v5070 = vadd.f32 %v5062, %v429
      %v5071 = vadd.f32 %v5063, %v430
      %v5072 = vadd.f32 %v5064, %v431
      %v5073 = vadd.f32 %v5065, %v432
      %v5074 = vadd.f32 %v5066, %v433
      %v5075 = vsel %vm437, %v5067, -inf
      %5076 = vmax.xlane.f32.xlu0 %v5075
      %v5077 = vpop.xlane.xlu0 %5076
      %v5078 = vsel %vm437, %v5068, -inf
      %5079 = vmax.xlane.f32.xlu0 %v5078
      %v5080 = vpop.xlane.xlu0 %5079
      %v5081 = vsel %vm437, %v5069, -inf
      %5082 = vmax.xlane.f32.xlu0 %v5081
      %v5083 = vpop.xlane.xlu0 %5082
      %v5084 = vsel %vm437, %v5070, -inf
      %5085 = vmax.xlane.f32.xlu0 %v5084
      %v5086 = vpop.xlane.xlu0 %5085
      %v5087 = vsel %vm437, %v5071, -inf
      %5088 = vmax.xlane.f32.xlu0 %v5087
      %v5089 = vpop.xlane.xlu0 %5088
      %v5090 = vsel %vm437, %v5072, -inf
      %5091 = vmax.xlane.f32.xlu0 %v5090
      %v5092 = vpop.xlane.xlu0 %5091
      %v5093 = vsel %vm437, %v5073, -inf
      %5094 = vmax.xlane.f32.xlu0 %v5093
      %v5095 = vpop.xlane.xlu0 %5094
      %v5096 = vsel %vm437, %v5074, -inf
      %5097 = vmax.xlane.f32.xlu0 %v5096
      %v5098 = vpop.xlane.xlu0 %5097
      %v5099 = vsub.f32 %v5067, %v5077
      %v5100 = vsub.f32 %v5068, %v5080
      %v5101 = vsub.f32 %v5069, %v5083
      %v5102 = vsub.f32 %v5070, %v5086
      %v5103 = vsub.f32 %v5071, %v5089
      %v5104 = vsub.f32 %v5072, %v5092
      %v5105 = vsub.f32 %v5073, %v5095
      %v5106 = vsub.f32 %v5074, %v5098
      %v5107 = vmul.f32 %v5099, 1.442695
      %v5108 = vpow.pop %v5107
      %v5109 = vmul.f32 %v5100, 1.442695
      %v5110 = vpow.pop %v5109
      %v5111 = vmul.f32 %v5101, 1.442695
      %v5112 = vpow.pop %v5111
      %v5113 = vmul.f32 %v5102, 1.442695
      %v5114 = vpow.pop %v5113
      %v5115 = vmul.f32 %v5103, 1.442695
      %v5116 = vpow.pop %v5115
      %v5117 = vmul.f32 %v5104, 1.442695
      %v5118 = vpow.pop %v5117
      %v5119 = vmul.f32 %v5105, 1.442695
      %v5120 = vpow.pop %v5119
      %v5121 = vmul.f32 %v5106, 1.442695
      %v5122 = vpow.pop %v5121
      %v5123 = vsel %vm437, %v5108, 0.0
      %5124 = vadd.xlane.f32.xlu0 %v5123
      %v5125 = vpop.xlane.xlu0 %5124
      %v5126 = vsel %vm437, %v5110, 0.0
      %5127 = vadd.xlane.f32.xlu0 %v5126
      %v5128 = vpop.xlane.xlu0 %5127
      %v5129 = vsel %vm437, %v5112, 0.0
      %5130 = vadd.xlane.f32.xlu0 %v5129
      %v5131 = vpop.xlane.xlu0 %5130
      %v5132 = vsel %vm437, %v5114, 0.0
      %5133 = vadd.xlane.f32.xlu0 %v5132
      %v5134 = vpop.xlane.xlu0 %5133
      %v5135 = vsel %vm437, %v5116, 0.0
      %5136 = vadd.xlane.f32.xlu0 %v5135
      %v5137 = vpop.xlane.xlu0 %5136
      %v5138 = vsel %vm437, %v5118, 0.0
      %5139 = vadd.xlane.f32.xlu0 %v5138
      %v5140 = vpop.xlane.xlu0 %5139
      %v5141 = vsel %vm437, %v5120, 0.0
      %5142 = vadd.xlane.f32.xlu0 %v5141
      %v5143 = vpop.xlane.xlu0 %5142
      %v5144 = vsel %vm437, %v5122, 0.0
      %5145 = vadd.xlane.f32.xlu0 %v5144
      %v5146 = vpop.xlane.xlu0 %5145
      %v5147 = vrcp.pop %v5125
      %v5148 = vrcp.pop %v5128
      %v5149 = vrcp.pop %v5131
      %v5150 = vrcp.pop %v5134
      %v5151 = vrcp.pop %v5137
      %v5152 = vrcp.pop %v5140
      %v5153 = vrcp.pop %v5143
      %v5154 = vrcp.pop %v5146
      %v5155 = vmul.f32 %v5108, %v5147
      %v5156 = vmul.f32 %v5110, %v5148
      %v5157 = vmul.f32 %v5112, %v5149
      %v5158 = vmul.f32 %v5114, %v5150
      %v5159 = vmul.f32 %v5116, %v5151
      %v5160 = vmul.f32 %v5118, %v5152
      %v5161 = vmul.f32 %v5120, %v5153
      %v5162 = vmul.f32 %v5122, %v5154
      %5163 = vrot.lane.b32.xlu0 %v388, 40
      %v5164 = vpop.permute.xlu0 %5163
      %v5167 = vsel %vm437, %v5155, 0
      %5169 = vmatprep.subr.mxu0 0.0
      %5170 = vmatpush1.msra.mxu0 0.0
      %5171 = vmatprep.subr.mxu0 0.0
      %5172 = vmatpush1.msra.mxu0 0.0
      %5173 = vmatprep.subr.mxu0 0.0
      %5174 = vmatpush1.msra.mxu0 0.0
      %5175 = vmatprep.subr.mxu0 0.0
      %5176 = vmatpush1.msra.mxu0 0.0
      %5177 = vmatprep.subr.mxu0 0.0
      %5178 = vmatpush1.msra.mxu0 0.0
      %5179 = vmatprep.subr.mxu0 0.0
      %5180 = vmatpush1.msra.mxu0 0.0
      %5181 = vmatprep.subr.mxu0 0.0
      %5182 = vmatpush1.msra.mxu0 0.0
      %5183 = vmatprep.subr.mxu0 0.0
      %5184 = vmatpush1.msra.mxu0 0.0
      %5185 = vmatprep.subr.mxu0 0.0
      %5186 = vmatpush1.msra.mxu0 0.0
      %5187 = vmatprep.subr.mxu0 0.0
      %5188 = vmatpush1.msra.mxu0 0.0
      %5189 = vmatprep.subr.mxu0 0.0
      %5190 = vmatpush1.msra.mxu0 0.0
      %5191 = vmatprep.subr.mxu0 0.0
      %5192 = vmatpush1.msra.mxu0 0.0
      %5193 = vmatprep.subr.mxu0 0.0
      %5194 = vmatpush1.msra.mxu0 0.0
      %5195 = vmatprep.subr.mxu0 0.0
      %5196 = vmatpush1.msra.mxu0 0.0
      %5197 = vmatprep.subr.mxu0 0.0
      %5198 = vmatpush1.msra.mxu0 0.0
      %5199 = vmatprep.subr.mxu0 0.0
      %5200 = vmatpush1.msra.mxu0 %v5164
      %5201 = vmatprep.subr.mxu0 0.0
      %5202 = vmatpush2.msra.mxu0 0.0
      %5203 = vmatprep.subr.mxu0 0.0
      %5204 = vmatpush2.msra.mxu0 0.0
      %5205 = vmatprep.subr.mxu0 0.0
      %5206 = vmatpush2.msra.mxu0 0.0
      %5207 = vmatprep.subr.mxu0 0.0
      %5208 = vmatpush2.msra.mxu0 0.0
      %5209 = vmatprep.subr.mxu0 0.0
      %5210 = vmatpush2.msra.mxu0 0.0
      %5211 = vmatprep.subr.mxu0 0.0
      %5212 = vmatpush2.msra.mxu0 0.0
      %5213 = vmatprep.subr.mxu0 0.0
      %5214 = vmatpush2.msra.mxu0 0.0
      %5215 = vmatprep.subr.mxu0 0.0
      %5216 = vmatpush2.msra.mxu0 0.0
      %5217 = vmatprep.subr.mxu0 0.0
      %5218 = vmatpush2.msra.mxu0 0.0
      %5219 = vmatprep.subr.mxu0 0.0
      %5220 = vmatpush2.msra.mxu0 0.0
      %5221 = vmatprep.subr.mxu0 0.0
      %5222 = vmatpush2.msra.mxu0 0.0
      %5223 = vmatprep.subr.mxu0 0.0
      %5224 = vmatpush2.msra.mxu0 0.0
      %5225 = vmatprep.subr.mxu0 0.0
      %5226 = vmatpush2.msra.mxu0 0.0
      %5227 = vmatprep.subr.mxu0 0.0
      %5228 = vmatpush2.msra.mxu0 0.0
      %5229 = vmatprep.subr.mxu0 0.0
      %5230 = vmatpush2.msra.mxu0 0.0
      %5231 = vmatprep.subr.mxu0 0.0
      %5232 = vmatpush2.msra.mxu0 0.0
      %5233 = vmatprep.mubr.f32.mxu0 0.0
      %5234 = vmatmul.mubr.f32.gmra.mxu0 %v5167
      %v5235 = vpop.f32.mrf.mxu0
      %v5236 = vadd.f32 0.0, %v5235
      %v5237 = vpop.f32.mrf.mxu0
      %5238 = vdwg.mxu0
      %5239 = vrot.lane.b32.xlu0 %v393, 40
      %v5240 = vpop.permute.xlu0 %5239
      %v5243 = vsel %vm437, %v5156, 0
      %5245 = vmatprep.subr.mxu0 0.0
      %5246 = vmatpush1.msra.mxu0 0.0
      %5247 = vmatprep.subr.mxu0 0.0
      %5248 = vmatpush1.msra.mxu0 0.0
      %5249 = vmatprep.subr.mxu0 0.0
      %5250 = vmatpush1.msra.mxu0 0.0
      %5251 = vmatprep.subr.mxu0 0.0
      %5252 = vmatpush1.msra.mxu0 0.0
      %5253 = vmatprep.subr.mxu0 0.0
      %5254 = vmatpush1.msra.mxu0 0.0
      %5255 = vmatprep.subr.mxu0 0.0
      %5256 = vmatpush1.msra.mxu0 0.0
      %5257 = vmatprep.subr.mxu0 0.0
      %5258 = vmatpush1.msra.mxu0 0.0
      %5259 = vmatprep.subr.mxu0 0.0
      %5260 = vmatpush1.msra.mxu0 0.0
      %5261 = vmatprep.subr.mxu0 0.0
      %5262 = vmatpush1.msra.mxu0 0.0
      %5263 = vmatprep.subr.mxu0 0.0
      %5264 = vmatpush1.msra.mxu0 0.0
      %5265 = vmatprep.subr.mxu0 0.0
      %5266 = vmatpush1.msra.mxu0 0.0
      %5267 = vmatprep.subr.mxu0 0.0
      %5268 = vmatpush1.msra.mxu0 0.0
      %5269 = vmatprep.subr.mxu0 0.0
      %5270 = vmatpush1.msra.mxu0 0.0
      %5271 = vmatprep.subr.mxu0 0.0
      %5272 = vmatpush1.msra.mxu0 0.0
      %5273 = vmatprep.subr.mxu0 0.0
      %5274 = vmatpush1.msra.mxu0 0.0
      %5275 = vmatprep.subr.mxu0 0.0
      %5276 = vmatpush1.msra.mxu0 %v5240
      %5277 = vmatprep.subr.mxu0 0.0
      %5278 = vmatpush2.msra.mxu0 0.0
      %5279 = vmatprep.subr.mxu0 0.0
      %5280 = vmatpush2.msra.mxu0 0.0
      %5281 = vmatprep.subr.mxu0 0.0
      %5282 = vmatpush2.msra.mxu0 0.0
      %5283 = vmatprep.subr.mxu0 0.0
      %5284 = vmatpush2.msra.mxu0 0.0
      %5285 = vmatprep.subr.mxu0 0.0
      %5286 = vmatpush2.msra.mxu0 0.0
      %5287 = vmatprep.subr.mxu0 0.0
      %5288 = vmatpush2.msra.mxu0 0.0
      %5289 = vmatprep.subr.mxu0 0.0
      %5290 = vmatpush2.msra.mxu0 0.0
      %5291 = vmatprep.subr.mxu0 0.0
      %5292 = vmatpush2.msra.mxu0 0.0
      %5293 = vmatprep.subr.mxu0 0.0
      %5294 = vmatpush2.msra.mxu0 0.0
      %5295 = vmatprep.subr.mxu0 0.0
      %5296 = vmatpush2.msra.mxu0 0.0
      %5297 = vmatprep.subr.mxu0 0.0
      %5298 = vmatpush2.msra.mxu0 0.0
      %5299 = vmatprep.subr.mxu0 0.0
      %5300 = vmatpush2.msra.mxu0 0.0
      %5301 = vmatprep.subr.mxu0 0.0
      %5302 = vmatpush2.msra.mxu0 0.0
      %5303 = vmatprep.subr.mxu0 0.0
      %5304 = vmatpush2.msra.mxu0 0.0
      %5305 = vmatprep.subr.mxu0 0.0
      %5306 = vmatpush2.msra.mxu0 0.0
      %5307 = vmatprep.subr.mxu0 0.0
      %5308 = vmatpush2.msra.mxu0 0.0
      %5309 = vmatprep.mubr.f32.mxu0 0.0
      %5310 = vmatmul.mubr.f32.gmra.mxu0 %v5243
      %v5311 = vpop.f32.mrf.mxu0
      %v5312 = vadd.f32 0.0, %v5311
      %v5313 = vpop.f32.mrf.mxu0
      %5314 = vdwg.mxu0
      %5315 = vrot.lane.b32.xlu0 %v398, 40
      %v5316 = vpop.permute.xlu0 %5315
      %v5319 = vsel %vm437, %v5157, 0
      %5321 = vmatprep.subr.mxu0 0.0
      %5322 = vmatpush1.msra.mxu0 0.0
      %5323 = vmatprep.subr.mxu0 0.0
      %5324 = vmatpush1.msra.mxu0 0.0
      %5325 = vmatprep.subr.mxu0 0.0
      %5326 = vmatpush1.msra.mxu0 0.0
      %5327 = vmatprep.subr.mxu0 0.0
      %5328 = vmatpush1.msra.mxu0 0.0
      %5329 = vmatprep.subr.mxu0 0.0
      %5330 = vmatpush1.msra.mxu0 0.0
      %5331 = vmatprep.subr.mxu0 0.0
      %5332 = vmatpush1.msra.mxu0 0.0
      %5333 = vmatprep.subr.mxu0 0.0
      %5334 = vmatpush1.msra.mxu0 0.0
      %5335 = vmatprep.subr.mxu0 0.0
      %5336 = vmatpush1.msra.mxu0 0.0
      %5337 = vmatprep.subr.mxu0 0.0
      %5338 = vmatpush1.msra.mxu0 0.0
      %5339 = vmatprep.subr.mxu0 0.0
      %5340 = vmatpush1.msra.mxu0 0.0
      %5341 = vmatprep.subr.mxu0 0.0
      %5342 = vmatpush1.msra.mxu0 0.0
      %5343 = vmatprep.subr.mxu0 0.0
      %5344 = vmatpush1.msra.mxu0 0.0
      %5345 = vmatprep.subr.mxu0 0.0
      %5346 = vmatpush1.msra.mxu0 0.0
      %5347 = vmatprep.subr.mxu0 0.0
      %5348 = vmatpush1.msra.mxu0 0.0
      %5349 = vmatprep.subr.mxu0 0.0
      %5350 = vmatpush1.msra.mxu0 0.0
      %5351 = vmatprep.subr.mxu0 0.0
      %5352 = vmatpush1.msra.mxu0 %v5316
      %5353 = vmatprep.subr.mxu0 0.0
      %5354 = vmatpush2.msra.mxu0 0.0
      %5355 = vmatprep.subr.mxu0 0.0
      %5356 = vmatpush2.msra.mxu0 0.0
      %5357 = vmatprep.subr.mxu0 0.0
      %5358 = vmatpush2.msra.mxu0 0.0
      %5359 = vmatprep.subr.mxu0 0.0
      %5360 = vmatpush2.msra.mxu0 0.0
      %5361 = vmatprep.subr.mxu0 0.0
      %5362 = vmatpush2.msra.mxu0 0.0
      %5363 = vmatprep.subr.mxu0 0.0
      %5364 = vmatpush2.msra.mxu0 0.0
      %5365 = vmatprep.subr.mxu0 0.0
      %5366 = vmatpush2.msra.mxu0 0.0
      %5367 = vmatprep.subr.mxu0 0.0
      %5368 = vmatpush2.msra.mxu0 0.0
      %5369 = vmatprep.subr.mxu0 0.0
      %5370 = vmatpush2.msra.mxu0 0.0
      %5371 = vmatprep.subr.mxu0 0.0
      %5372 = vmatpush2.msra.mxu0 0.0
      %5373 = vmatprep.subr.mxu0 0.0
      %5374 = vmatpush2.msra.mxu0 0.0
      %5375 = vmatprep.subr.mxu0 0.0
      %5376 = vmatpush2.msra.mxu0 0.0
      %5377 = vmatprep.subr.mxu0 0.0
      %5378 = vmatpush2.msra.mxu0 0.0
      %5379 = vmatprep.subr.mxu0 0.0
      %5380 = vmatpush2.msra.mxu0 0.0
      %5381 = vmatprep.subr.mxu0 0.0
      %5382 = vmatpush2.msra.mxu0 0.0
      %5383 = vmatprep.subr.mxu0 0.0
      %5384 = vmatpush2.msra.mxu0 0.0
      %5385 = vmatprep.mubr.f32.mxu0 0.0
      %5386 = vmatmul.mubr.f32.gmra.mxu0 %v5319
      %v5387 = vpop.f32.mrf.mxu0
      %v5388 = vadd.f32 0.0, %v5387
      %v5389 = vpop.f32.mrf.mxu0
      %5390 = vdwg.mxu0
      %5391 = vrot.lane.b32.xlu0 %v403, 40
      %v5392 = vpop.permute.xlu0 %5391
      %v5395 = vsel %vm437, %v5158, 0
      %5397 = vmatprep.subr.mxu0 0.0
      %5398 = vmatpush1.msra.mxu0 0.0
      %5399 = vmatprep.subr.mxu0 0.0
      %5400 = vmatpush1.msra.mxu0 0.0
      %5401 = vmatprep.subr.mxu0 0.0
      %5402 = vmatpush1.msra.mxu0 0.0
      %5403 = vmatprep.subr.mxu0 0.0
      %5404 = vmatpush1.msra.mxu0 0.0
      %5405 = vmatprep.subr.mxu0 0.0
      %5406 = vmatpush1.msra.mxu0 0.0
      %5407 = vmatprep.subr.mxu0 0.0
      %5408 = vmatpush1.msra.mxu0 0.0
      %5409 = vmatprep.subr.mxu0 0.0
      %5410 = vmatpush1.msra.mxu0 0.0
      %5411 = vmatprep.subr.mxu0 0.0
      %5412 = vmatpush1.msra.mxu0 0.0
      %5413 = vmatprep.subr.mxu0 0.0
      %5414 = vmatpush1.msra.mxu0 0.0
      %5415 = vmatprep.subr.mxu0 0.0
      %5416 = vmatpush1.msra.mxu0 0.0
      %5417 = vmatprep.subr.mxu0 0.0
      %5418 = vmatpush1.msra.mxu0 0.0
      %5419 = vmatprep.subr.mxu0 0.0
      %5420 = vmatpush1.msra.mxu0 0.0
      %5421 = vmatprep.subr.mxu0 0.0
      %5422 = vmatpush1.msra.mxu0 0.0
      %5423 = vmatprep.subr.mxu0 0.0
      %5424 = vmatpush1.msra.mxu0 0.0
      %5425 = vmatprep.subr.mxu0 0.0
      %5426 = vmatpush1.msra.mxu0 0.0
      %5427 = vmatprep.subr.mxu0 0.0
      %5428 = vmatpush1.msra.mxu0 %v5392
      %5429 = vmatprep.subr.mxu0 0.0
      %5430 = vmatpush2.msra.mxu0 0.0
      %5431 = vmatprep.subr.mxu0 0.0
      %5432 = vmatpush2.msra.mxu0 0.0
      %5433 = vmatprep.subr.mxu0 0.0
      %5434 = vmatpush2.msra.mxu0 0.0
      %5435 = vmatprep.subr.mxu0 0.0
      %5436 = vmatpush2.msra.mxu0 0.0
      %5437 = vmatprep.subr.mxu0 0.0
      %5438 = vmatpush2.msra.mxu0 0.0
      %5439 = vmatprep.subr.mxu0 0.0
      %5440 = vmatpush2.msra.mxu0 0.0
      %5441 = vmatprep.subr.mxu0 0.0
      %5442 = vmatpush2.msra.mxu0 0.0
      %5443 = vmatprep.subr.mxu0 0.0
      %5444 = vmatpush2.msra.mxu0 0.0
      %5445 = vmatprep.subr.mxu0 0.0
      %5446 = vmatpush2.msra.mxu0 0.0
      %5447 = vmatprep.subr.mxu0 0.0
      %5448 = vmatpush2.msra.mxu0 0.0
      %5449 = vmatprep.subr.mxu0 0.0
      %5450 = vmatpush2.msra.mxu0 0.0
      %5451 = vmatprep.subr.mxu0 0.0
      %5452 = vmatpush2.msra.mxu0 0.0
      %5453 = vmatprep.subr.mxu0 0.0
      %5454 = vmatpush2.msra.mxu0 0.0
      %5455 = vmatprep.subr.mxu0 0.0
      %5456 = vmatpush2.msra.mxu0 0.0
      %5457 = vmatprep.subr.mxu0 0.0
      %5458 = vmatpush2.msra.mxu0 0.0
      %5459 = vmatprep.subr.mxu0 0.0
      %5460 = vmatpush2.msra.mxu0 0.0
      %5461 = vmatprep.mubr.f32.mxu0 0.0
      %5462 = vmatmul.mubr.f32.gmra.mxu0 %v5395
      %v5463 = vpop.f32.mrf.mxu0
      %v5464 = vadd.f32 0.0, %v5463
      %v5465 = vpop.f32.mrf.mxu0
      %5466 = vdwg.mxu0
      %5467 = vrot.lane.b32.xlu0 %v408, 40
      %v5468 = vpop.permute.xlu0 %5467
      %v5471 = vsel %vm437, %v5159, 0
      %5473 = vmatprep.subr.mxu0 0.0
      %5474 = vmatpush1.msra.mxu0 0.0
      %5475 = vmatprep.subr.mxu0 0.0
      %5476 = vmatpush1.msra.mxu0 0.0
      %5477 = vmatprep.subr.mxu0 0.0
      %5478 = vmatpush1.msra.mxu0 0.0
      %5479 = vmatprep.subr.mxu0 0.0
      %5480 = vmatpush1.msra.mxu0 0.0
      %5481 = vmatprep.subr.mxu0 0.0
      %5482 = vmatpush1.msra.mxu0 0.0
      %5483 = vmatprep.subr.mxu0 0.0
      %5484 = vmatpush1.msra.mxu0 0.0
      %5485 = vmatprep.subr.mxu0 0.0
      %5486 = vmatpush1.msra.mxu0 0.0
      %5487 = vmatprep.subr.mxu0 0.0
      %5488 = vmatpush1.msra.mxu0 0.0
      %5489 = vmatprep.subr.mxu0 0.0
      %5490 = vmatpush1.msra.mxu0 0.0
      %5491 = vmatprep.subr.mxu0 0.0
      %5492 = vmatpush1.msra.mxu0 0.0
      %5493 = vmatprep.subr.mxu0 0.0
      %5494 = vmatpush1.msra.mxu0 0.0
      %5495 = vmatprep.subr.mxu0 0.0
      %5496 = vmatpush1.msra.mxu0 0.0
      %5497 = vmatprep.subr.mxu0 0.0
      %5498 = vmatpush1.msra.mxu0 0.0
      %5499 = vmatprep.subr.mxu0 0.0
      %5500 = vmatpush1.msra.mxu0 0.0
      %5501 = vmatprep.subr.mxu0 0.0
      %5502 = vmatpush1.msra.mxu0 0.0
      %5503 = vmatprep.subr.mxu0 0.0
      %5504 = vmatpush1.msra.mxu0 %v5468
      %5505 = vmatprep.subr.mxu0 0.0
      %5506 = vmatpush2.msra.mxu0 0.0
      %5507 = vmatprep.subr.mxu0 0.0
      %5508 = vmatpush2.msra.mxu0 0.0
      %5509 = vmatprep.subr.mxu0 0.0
      %5510 = vmatpush2.msra.mxu0 0.0
      %5511 = vmatprep.subr.mxu0 0.0
      %5512 = vmatpush2.msra.mxu0 0.0
      %5513 = vmatprep.subr.mxu0 0.0
      %5514 = vmatpush2.msra.mxu0 0.0
      %5515 = vmatprep.subr.mxu0 0.0
      %5516 = vmatpush2.msra.mxu0 0.0
      %5517 = vmatprep.subr.mxu0 0.0
      %5518 = vmatpush2.msra.mxu0 0.0
      %5519 = vmatprep.subr.mxu0 0.0
      %5520 = vmatpush2.msra.mxu0 0.0
      %5521 = vmatprep.subr.mxu0 0.0
      %5522 = vmatpush2.msra.mxu0 0.0
      %5523 = vmatprep.subr.mxu0 0.0
      %5524 = vmatpush2.msra.mxu0 0.0
      %5525 = vmatprep.subr.mxu0 0.0
      %5526 = vmatpush2.msra.mxu0 0.0
      %5527 = vmatprep.subr.mxu0 0.0
      %5528 = vmatpush2.msra.mxu0 0.0
      %5529 = vmatprep.subr.mxu0 0.0
      %5530 = vmatpush2.msra.mxu0 0.0
      %5531 = vmatprep.subr.mxu0 0.0
      %5532 = vmatpush2.msra.mxu0 0.0
      %5533 = vmatprep.subr.mxu0 0.0
      %5534 = vmatpush2.msra.mxu0 0.0
      %5535 = vmatprep.subr.mxu0 0.0
      %5536 = vmatpush2.msra.mxu0 0.0
      %5537 = vmatprep.mubr.f32.mxu0 0.0
      %5538 = vmatmul.mubr.f32.gmra.mxu0 %v5471
      %v5539 = vpop.f32.mrf.mxu0
      %v5540 = vadd.f32 0.0, %v5539
      %v5541 = vpop.f32.mrf.mxu0
      %5542 = vdwg.mxu0
      %5543 = vrot.lane.b32.xlu0 %v413, 40
      %v5544 = vpop.permute.xlu0 %5543
      %v5547 = vsel %vm437, %v5160, 0
      %5549 = vmatprep.subr.mxu0 0.0
      %5550 = vmatpush1.msra.mxu0 0.0
      %5551 = vmatprep.subr.mxu0 0.0
      %5552 = vmatpush1.msra.mxu0 0.0
      %5553 = vmatprep.subr.mxu0 0.0
      %5554 = vmatpush1.msra.mxu0 0.0
      %5555 = vmatprep.subr.mxu0 0.0
      %5556 = vmatpush1.msra.mxu0 0.0
      %5557 = vmatprep.subr.mxu0 0.0
      %5558 = vmatpush1.msra.mxu0 0.0
      %5559 = vmatprep.subr.mxu0 0.0
      %5560 = vmatpush1.msra.mxu0 0.0
      %5561 = vmatprep.subr.mxu0 0.0
      %5562 = vmatpush1.msra.mxu0 0.0
      %5563 = vmatprep.subr.mxu0 0.0
      %5564 = vmatpush1.msra.mxu0 0.0
      %5565 = vmatprep.subr.mxu0 0.0
      %5566 = vmatpush1.msra.mxu0 0.0
      %5567 = vmatprep.subr.mxu0 0.0
      %5568 = vmatpush1.msra.mxu0 0.0
      %5569 = vmatprep.subr.mxu0 0.0
      %5570 = vmatpush1.msra.mxu0 0.0
      %5571 = vmatprep.subr.mxu0 0.0
      %5572 = vmatpush1.msra.mxu0 0.0
      %5573 = vmatprep.subr.mxu0 0.0
      %5574 = vmatpush1.msra.mxu0 0.0
      %5575 = vmatprep.subr.mxu0 0.0
      %5576 = vmatpush1.msra.mxu0 0.0
      %5577 = vmatprep.subr.mxu0 0.0
      %5578 = vmatpush1.msra.mxu0 0.0
      %5579 = vmatprep.subr.mxu0 0.0
      %5580 = vmatpush1.msra.mxu0 %v5544
      %5581 = vmatprep.subr.mxu0 0.0
      %5582 = vmatpush2.msra.mxu0 0.0
      %5583 = vmatprep.subr.mxu0 0.0
      %5584 = vmatpush2.msra.mxu0 0.0
      %5585 = vmatprep.subr.mxu0 0.0
      %5586 = vmatpush2.msra.mxu0 0.0
      %5587 = vmatprep.subr.mxu0 0.0
      %5588 = vmatpush2.msra.mxu0 0.0
      %5589 = vmatprep.subr.mxu0 0.0
      %5590 = vmatpush2.msra.mxu0 0.0
      %5591 = vmatprep.subr.mxu0 0.0
      %5592 = vmatpush2.msra.mxu0 0.0
      %5593 = vmatprep.subr.mxu0 0.0
      %5594 = vmatpush2.msra.mxu0 0.0
      %5595 = vmatprep.subr.mxu0 0.0
      %5596 = vmatpush2.msra.mxu0 0.0
      %5597 = vmatprep.subr.mxu0 0.0
      %5598 = vmatpush2.msra.mxu0 0.0
      %5599 = vmatprep.subr.mxu0 0.0
      %5600 = vmatpush2.msra.mxu0 0.0
      %5601 = vmatprep.subr.mxu0 0.0
      %5602 = vmatpush2.msra.mxu0 0.0
      %5603 = vmatprep.subr.mxu0 0.0
      %5604 = vmatpush2.msra.mxu0 0.0
      %5605 = vmatprep.subr.mxu0 0.0
      %5606 = vmatpush2.msra.mxu0 0.0
      %5607 = vmatprep.subr.mxu0 0.0
      %5608 = vmatpush2.msra.mxu0 0.0
      %5609 = vmatprep.subr.mxu0 0.0
      %5610 = vmatpush2.msra.mxu0 0.0
      %5611 = vmatprep.subr.mxu0 0.0
      %5612 = vmatpush2.msra.mxu0 0.0
      %5613 = vmatprep.mubr.f32.mxu0 0.0
      %5614 = vmatmul.mubr.f32.gmra.mxu0 %v5547
      %v5615 = vpop.f32.mrf.mxu0
      %v5616 = vadd.f32 0.0, %v5615
      %v5617 = vpop.f32.mrf.mxu0
      %5618 = vdwg.mxu0
      %5619 = vrot.lane.b32.xlu0 %v418, 40
      %v5620 = vpop.permute.xlu0 %5619
      %v5623 = vsel %vm437, %v5161, 0
      %5625 = vmatprep.subr.mxu0 0.0
      %5626 = vmatpush1.msra.mxu0 0.0
      %5627 = vmatprep.subr.mxu0 0.0
      %5628 = vmatpush1.msra.mxu0 0.0
      %5629 = vmatprep.subr.mxu0 0.0
      %5630 = vmatpush1.msra.mxu0 0.0
      %5631 = vmatprep.subr.mxu0 0.0
      %5632 = vmatpush1.msra.mxu0 0.0
      %5633 = vmatprep.subr.mxu0 0.0
      %5634 = vmatpush1.msra.mxu0 0.0
      %5635 = vmatprep.subr.mxu0 0.0
      %5636 = vmatpush1.msra.mxu0 0.0
      %5637 = vmatprep.subr.mxu0 0.0
      %5638 = vmatpush1.msra.mxu0 0.0
      %5639 = vmatprep.subr.mxu0 0.0
      %5640 = vmatpush1.msra.mxu0 0.0
      %5641 = vmatprep.subr.mxu0 0.0
      %5642 = vmatpush1.msra.mxu0 0.0
      %5643 = vmatprep.subr.mxu0 0.0
      %5644 = vmatpush1.msra.mxu0 0.0
      %5645 = vmatprep.subr.mxu0 0.0
      %5646 = vmatpush1.msra.mxu0 0.0
      %5647 = vmatprep.subr.mxu0 0.0
      %5648 = vmatpush1.msra.mxu0 0.0
      %5649 = vmatprep.subr.mxu0 0.0
      %5650 = vmatpush1.msra.mxu0 0.0
      %5651 = vmatprep.subr.mxu0 0.0
      %5652 = vmatpush1.msra.mxu0 0.0
      %5653 = vmatprep.subr.mxu0 0.0
      %5654 = vmatpush1.msra.mxu0 0.0
      %5655 = vmatprep.subr.mxu0 0.0
      %5656 = vmatpush1.msra.mxu0 %v5620
      %5657 = vmatprep.subr.mxu0 0.0
      %5658 = vmatpush2.msra.mxu0 0.0
      %5659 = vmatprep.subr.mxu0 0.0
      %5660 = vmatpush2.msra.mxu0 0.0
      %5661 = vmatprep.subr.mxu0 0.0
      %5662 = vmatpush2.msra.mxu0 0.0
      %5663 = vmatprep.subr.mxu0 0.0
      %5664 = vmatpush2.msra.mxu0 0.0
      %5665 = vmatprep.subr.mxu0 0.0
      %5666 = vmatpush2.msra.mxu0 0.0
      %5667 = vmatprep.subr.mxu0 0.0
      %5668 = vmatpush2.msra.mxu0 0.0
      %5669 = vmatprep.subr.mxu0 0.0
      %5670 = vmatpush2.msra.mxu0 0.0
      %5671 = vmatprep.subr.mxu0 0.0
      %5672 = vmatpush2.msra.mxu0 0.0
      %5673 = vmatprep.subr.mxu0 0.0
      %5674 = vmatpush2.msra.mxu0 0.0
      %5675 = vmatprep.subr.mxu0 0.0
      %5676 = vmatpush2.msra.mxu0 0.0
      %5677 = vmatprep.subr.mxu0 0.0
      %5678 = vmatpush2.msra.mxu0 0.0
      %5679 = vmatprep.subr.mxu0 0.0
      %5680 = vmatpush2.msra.mxu0 0.0
      %5681 = vmatprep.subr.mxu0 0.0
      %5682 = vmatpush2.msra.mxu0 0.0
      %5683 = vmatprep.subr.mxu0 0.0
      %5684 = vmatpush2.msra.mxu0 0.0
      %5685 = vmatprep.subr.mxu0 0.0
      %5686 = vmatpush2.msra.mxu0 0.0
      %5687 = vmatprep.subr.mxu0 0.0
      %5688 = vmatpush2.msra.mxu0 0.0
      %5689 = vmatprep.mubr.f32.mxu0 0.0
      %5690 = vmatmul.mubr.f32.gmra.mxu0 %v5623
      %v5691 = vpop.f32.mrf.mxu0
      %v5692 = vadd.f32 0.0, %v5691
      %v5693 = vpop.f32.mrf.mxu0
      %5694 = vdwg.mxu0
      %5695 = vrot.lane.b32.xlu0 %v423, 40
      %v5696 = vpop.permute.xlu0 %5695
      %v5699 = vsel %vm437, %v5162, 0
      %5701 = vmatprep.subr.mxu0 0.0
      %5702 = vmatpush1.msra.mxu0 0.0
      %5703 = vmatprep.subr.mxu0 0.0
      %5704 = vmatpush1.msra.mxu0 0.0
      %5705 = vmatprep.subr.mxu0 0.0
      %5706 = vmatpush1.msra.mxu0 0.0
      %5707 = vmatprep.subr.mxu0 0.0
      %5708 = vmatpush1.msra.mxu0 0.0
      %5709 = vmatprep.subr.mxu0 0.0
      %5710 = vmatpush1.msra.mxu0 0.0
      %5711 = vmatprep.subr.mxu0 0.0
      %5712 = vmatpush1.msra.mxu0 0.0
      %5713 = vmatprep.subr.mxu0 0.0
      %5714 = vmatpush1.msra.mxu0 0.0
      %5715 = vmatprep.subr.mxu0 0.0
      %5716 = vmatpush1.msra.mxu0 0.0
      %5717 = vmatprep.subr.mxu0 0.0
      %5718 = vmatpush1.msra.mxu0 0.0
      %5719 = vmatprep.subr.mxu0 0.0
      %5720 = vmatpush1.msra.mxu0 0.0
      %5721 = vmatprep.subr.mxu0 0.0
      %5722 = vmatpush1.msra.mxu0 0.0
      %5723 = vmatprep.subr.mxu0 0.0
      %5724 = vmatpush1.msra.mxu0 0.0
      %5725 = vmatprep.subr.mxu0 0.0
      %5726 = vmatpush1.msra.mxu0 0.0
      %5727 = vmatprep.subr.mxu0 0.0
      %5728 = vmatpush1.msra.mxu0 0.0
      %5729 = vmatprep.subr.mxu0 0.0
      %5730 = vmatpush1.msra.mxu0 0.0
      %5731 = vmatprep.subr.mxu0 0.0
      %5732 = vmatpush1.msra.mxu0 %v5696
      %5733 = vmatprep.subr.mxu0 0.0
      %5734 = vmatpush2.msra.mxu0 0.0
      %5735 = vmatprep.subr.mxu0 0.0
      %5736 = vmatpush2.msra.mxu0 0.0
      %5737 = vmatprep.subr.mxu0 0.0
      %5738 = vmatpush2.msra.mxu0 0.0
      %5739 = vmatprep.subr.mxu0 0.0
      %5740 = vmatpush2.msra.mxu0 0.0
      %5741 = vmatprep.subr.mxu0 0.0
      %5742 = vmatpush2.msra.mxu0 0.0
      %5743 = vmatprep.subr.mxu0 0.0
      %5744 = vmatpush2.msra.mxu0 0.0
      %5745 = vmatprep.subr.mxu0 0.0
      %5746 = vmatpush2.msra.mxu0 0.0
      %5747 = vmatprep.subr.mxu0 0.0
      %5748 = vmatpush2.msra.mxu0 0.0
      %5749 = vmatprep.subr.mxu0 0.0
      %5750 = vmatpush2.msra.mxu0 0.0
      %5751 = vmatprep.subr.mxu0 0.0
      %5752 = vmatpush2.msra.mxu0 0.0
      %5753 = vmatprep.subr.mxu0 0.0
      %5754 = vmatpush2.msra.mxu0 0.0
      %5755 = vmatprep.subr.mxu0 0.0
      %5756 = vmatpush2.msra.mxu0 0.0
      %5757 = vmatprep.subr.mxu0 0.0
      %5758 = vmatpush2.msra.mxu0 0.0
      %5759 = vmatprep.subr.mxu0 0.0
      %5760 = vmatpush2.msra.mxu0 0.0
      %5761 = vmatprep.subr.mxu0 0.0
      %5762 = vmatpush2.msra.mxu0 0.0
      %5763 = vmatprep.subr.mxu0 0.0
      %5764 = vmatpush2.msra.mxu0 0.0
      %5765 = vmatprep.mubr.f32.mxu0 0.0
      %5766 = vmatmul.mubr.f32.gmra.mxu0 %v5699
      %v5767 = vpop.f32.mrf.mxu0
      %v5768 = vadd.f32 0.0, %v5767
      %v5769 = vpop.f32.mrf.mxu0
      %5770 = vdwg.mxu0
      %5779 = vrot.lane.b32.xlu0 %v2564, 8
      %v5780 = vpop.permute.xlu0 %5779
      %5781 = vrot.lane.b32.xlu0 %v2640, 8
      %v5782 = vpop.permute.xlu0 %5781
      %5783 = vrot.lane.b32.xlu0 %v2716, 8
      %v5784 = vpop.permute.xlu0 %5783
      %5785 = vrot.lane.b32.xlu0 %v2792, 8
      %v5786 = vpop.permute.xlu0 %5785
      %5787 = vrot.lane.b32.xlu0 %v2868, 8
      %v5788 = vpop.permute.xlu0 %5787
      %5789 = vrot.lane.b32.xlu0 %v2944, 8
      %v5790 = vpop.permute.xlu0 %5789
      %5791 = vrot.lane.b32.xlu0 %v3020, 8
      %v5792 = vpop.permute.xlu0 %5791
      %5793 = vrot.lane.b32.xlu0 %v3096, 8
      %v5794 = vpop.permute.xlu0 %5793
      %5811 = vrot.lane.b32.xlu0 %v3900, 16
      %v5812 = vpop.permute.xlu0 %5811
      %5813 = vrot.lane.b32.xlu0 %v3976, 16
      %v5814 = vpop.permute.xlu0 %5813
      %5815 = vrot.lane.b32.xlu0 %v4052, 16
      %v5816 = vpop.permute.xlu0 %5815
      %5817 = vrot.lane.b32.xlu0 %v4128, 16
      %v5818 = vpop.permute.xlu0 %5817
      %5819 = vrot.lane.b32.xlu0 %v4204, 16
      %v5820 = vpop.permute.xlu0 %5819
      %5821 = vrot.lane.b32.xlu0 %v4280, 16
      %v5822 = vpop.permute.xlu0 %5821
      %5823 = vrot.lane.b32.xlu0 %v4356, 16
      %v5824 = vpop.permute.xlu0 %5823
      %5825 = vrot.lane.b32.xlu0 %v4432, 16
      %v5826 = vpop.permute.xlu0 %5825
      %5843 = vrot.lane.b32.xlu0 %v5236, 24
      %v5844 = vpop.permute.xlu0 %5843
      %5845 = vrot.lane.b32.xlu0 %v5312, 24
      %v5846 = vpop.permute.xlu0 %5845
      %5847 = vrot.lane.b32.xlu0 %v5388, 24
      %v5848 = vpop.permute.xlu0 %5847
      %5849 = vrot.lane.b32.xlu0 %v5464, 24
      %v5850 = vpop.permute.xlu0 %5849
      %5851 = vrot.lane.b32.xlu0 %v5540, 24
      %v5852 = vpop.permute.xlu0 %5851
      %5853 = vrot.lane.b32.xlu0 %v5616, 24
      %v5854 = vpop.permute.xlu0 %5853
      %5855 = vrot.lane.b32.xlu0 %v5692, 24
      %v5856 = vpop.permute.xlu0 %5855
      %5857 = vrot.lane.b32.xlu0 %v5768, 24
      %v5858 = vpop.permute.xlu0 %5857
      %v5867 = vsel %vm437, %v1228, %v5780
      %v5868 = vsel %vm437, %v1304, %v5782
      %v5869 = vsel %vm437, %v1380, %v5784
      %v5870 = vsel %vm437, %v1456, %v5786
      %v5871 = vsel %vm437, %v1532, %v5788
      %v5872 = vsel %vm437, %v1608, %v5790
      %v5873 = vsel %vm437, %v1684, %v5792
      %v5874 = vsel %vm437, %v1760, %v5794
      %vm5875 = vcmask 130048
      %v5876 = vsel %vm5875, %v5867, %v5812
      %v5877 = vsel %vm5875, %v5868, %v5814
      %v5878 = vsel %vm5875, %v5869, %v5816
      %v5879 = vsel %vm5875, %v5870, %v5818
      %v5880 = vsel %vm5875, %v5871, %v5820
      %v5881 = vsel %vm5875, %v5872, %v5822
      %v5882 = vsel %vm5875, %v5873, %v5824
      %v5883 = vsel %vm5875, %v5874, %v5826
      %vm5884 = vcmask 195584
      %v5885 = vsel %vm5884, %v5876, %v5844
      %v5886 = vsel %vm5884, %v5877, %v5846
      %v5887 = vsel %vm5884, %v5878, %v5848
      %v5888 = vsel %vm5884, %v5879, %v5850
      %v5889 = vsel %vm5884, %v5880, %v5852
      %v5890 = vsel %vm5884, %v5881, %v5854
      %v5891 = vsel %vm5884, %v5882, %v5856
      %v5892 = vsel %vm5884, %v5883, %v5858
      %v5893 = vld [vmem:[%s4] sm:$0xff]
      %v5894 = vld [vmem:[%s4 + $0x8] sm:$0xff]
      %v5895 = vld [vmem:[%s4 + $0x10] sm:$0xff]
      %v5896 = vld [vmem:[%s4 + $0x18] sm:$0xff]
      %v5897 = vld [vmem:[%s5] sm:$0x1]
      %v5899 = vlaneseq
      %v5900 = vshrl.u32 %v5899, 7
      %v5901 = vsub.s32 0, %v5900
      %v5902 = vrot.slane %v5897, %v5901
      %v5905 = vsel %vm296, %v5885, 0
      %v5908 = vsel %vm296, %v5886, 0
      %v5911 = vsel %vm296, %v5887, 0
      %v5914 = vsel %vm296, %v5888, 0
      %v5917 = vsel %vm296, %v5889, 0
      %v5920 = vsel %vm296, %v5890, 0
      %v5923 = vsel %vm296, %v5891, 0
      %v5926 = vsel %vm296, %v5892, 0
      %5928 = vmatprep.subr.mxu0 0.0
      %5929 = vmatpush1.msra.mxu0 0.0
      %5930 = vmatprep.subr.mxu0 0.0
      %5931 = vmatpush1.msra.mxu0 0.0
      %5932 = vmatprep.subr.mxu0 0.0
      %5933 = vmatpush1.msra.mxu0 0.0
      %5934 = vmatprep.subr.mxu0 0.0
      %5935 = vmatpush1.msra.mxu0 0.0
      %5936 = vmatprep.subr.mxu0 0.0
      %5937 = vmatpush1.msra.mxu0 0.0
      %5938 = vmatprep.subr.mxu0 0.0
      %5939 = vmatpush1.msra.mxu0 0.0
      %5940 = vmatprep.subr.mxu0 0.0
      %5941 = vmatpush1.msra.mxu0 0.0
      %5942 = vmatprep.subr.mxu0 0.0
      %5943 = vmatpush1.msra.mxu0 0.0
      %5944 = vmatprep.subr.mxu0 0.0
      %5945 = vmatpush1.msra.mxu0 0.0
      %5946 = vmatprep.subr.mxu0 0.0
      %5947 = vmatpush1.msra.mxu0 0.0
      %5948 = vmatprep.subr.mxu0 0.0
      %5949 = vmatpush1.msra.mxu0 0.0
      %5950 = vmatprep.subr.mxu0 0.0
      %5951 = vmatpush1.msra.mxu0 0.0
      %5952 = vmatprep.subr.mxu0 0.0
      %5953 = vmatpush1.msra.mxu0 %v5896
      %5954 = vmatprep.subr.mxu0 0.0
      %5955 = vmatpush1.msra.mxu0 %v5895
      %5956 = vmatprep.subr.mxu0 0.0
      %5957 = vmatpush1.msra.mxu0 %v5894
      %5958 = vmatprep.subr.mxu0 0.0
      %5959 = vmatpush1.msra.mxu0 %v5893
      %5960 = vmatprep.subr.mxu0 0.0
      %5961 = vmatpush2.msra.mxu0 0.0
      %5962 = vmatprep.subr.mxu0 0.0
      %5963 = vmatpush2.msra.mxu0 0.0
      %5964 = vmatprep.subr.mxu0 0.0
      %5965 = vmatpush2.msra.mxu0 0.0
      %5966 = vmatprep.subr.mxu0 0.0
      %5967 = vmatpush2.msra.mxu0 0.0
      %5968 = vmatprep.subr.mxu0 0.0
      %5969 = vmatpush2.msra.mxu0 0.0
      %5970 = vmatprep.subr.mxu0 0.0
      %5971 = vmatpush2.msra.mxu0 0.0
      %5972 = vmatprep.subr.mxu0 0.0
      %5973 = vmatpush2.msra.mxu0 0.0
      %5974 = vmatprep.subr.mxu0 0.0
      %5975 = vmatpush2.msra.mxu0 0.0
      %5976 = vmatprep.subr.mxu0 0.0
      %5977 = vmatpush2.msra.mxu0 0.0
      %5978 = vmatprep.subr.mxu0 0.0
      %5979 = vmatpush2.msra.mxu0 0.0
      %5980 = vmatprep.subr.mxu0 0.0
      %5981 = vmatpush2.msra.mxu0 0.0
      %5982 = vmatprep.subr.mxu0 0.0
      %5983 = vmatpush2.msra.mxu0 0.0
      %5984 = vmatprep.subr.mxu0 0.0
      %5985 = vmatpush2.msra.mxu0 0.0
      %5986 = vmatprep.subr.mxu0 0.0
      %5987 = vmatpush2.msra.mxu0 0.0
      %5988 = vmatprep.subr.mxu0 0.0
      %5989 = vmatpush2.msra.mxu0 0.0
      %5990 = vmatprep.subr.mxu0 0.0
      %5991 = vmatpush2.msra.mxu0 0.0
      %5992 = vmatprep.mubr.f32.mxu0 0.0
      %5993 = vmatmul.mubr.f32.gmra.mxu0 %v5905
      %v5994 = vpop.f32.mrf.mxu0
      %v5995 = vadd.f32 %v5902, %v5994
      %v5996 = vpop.f32.mrf.mxu0
      %5997 = vmatprep.mubr.f32.mxu0 0.0
      %5998 = vmatmul.mubr.f32.gmra.mxu0 %v5908
      %v5999 = vpop.f32.mrf.mxu0
      %v6000 = vadd.f32 %v5902, %v5999
      %v6001 = vpop.f32.mrf.mxu0
      %6002 = vmatprep.mubr.f32.mxu0 0.0
      %6003 = vmatmul.mubr.f32.gmra.mxu0 %v5911
      %v6004 = vpop.f32.mrf.mxu0
      %v6005 = vadd.f32 %v5902, %v6004
      %v6006 = vpop.f32.mrf.mxu0
      %6007 = vmatprep.mubr.f32.mxu0 0.0
      %6008 = vmatmul.mubr.f32.gmra.mxu0 %v5914
      %v6009 = vpop.f32.mrf.mxu0
      %v6010 = vadd.f32 %v5902, %v6009
      %v6011 = vpop.f32.mrf.mxu0
      %6012 = vmatprep.mubr.f32.mxu0 0.0
      %6013 = vmatmul.mubr.f32.gmra.mxu0 %v5917
      %v6014 = vpop.f32.mrf.mxu0
      %v6015 = vadd.f32 %v5902, %v6014
      %v6016 = vpop.f32.mrf.mxu0
      %6017 = vmatprep.mubr.f32.mxu0 0.0
      %6018 = vmatmul.mubr.f32.gmra.mxu0 %v5920
      %v6019 = vpop.f32.mrf.mxu0
      %v6020 = vadd.f32 %v5902, %v6019
      %v6021 = vpop.f32.mrf.mxu0
      %6022 = vmatprep.mubr.f32.mxu0 0.0
      %6023 = vmatmul.mubr.f32.gmra.mxu0 %v5923
      %v6024 = vpop.f32.mrf.mxu0
      %v6025 = vadd.f32 %v5902, %v6024
      %v6026 = vpop.f32.mrf.mxu0
      %6027 = vmatprep.mubr.f32.mxu0 0.0
      %6028 = vmatmul.mubr.f32.gmra.mxu0 %v5926
      %v6029 = vpop.f32.mrf.mxu0
      %v6030 = vadd.f32 %v5902, %v6029
      %v6031 = vpop.f32.mrf.mxu0
      %6032 = vdwg.mxu0
      %6033 = vst.msk [vmem:[%s275] sm:$0xff] %vm296, %v5995
      %6034 = vst.msk [vmem:[%s275 + $0x8] sm:$0xff] %vm296, %v6000
      %6035 = vst.msk [vmem:[%s275 + $0x10] sm:$0xff] %vm296, %v6005
      %6036 = vst.msk [vmem:[%s275 + $0x18] sm:$0xff] %vm296, %v6010
      %6037 = vst.msk [vmem:[%s275 + $0x20] sm:$0xff] %vm296, %v6015
      %6038 = vst.msk [vmem:[%s275 + $0x28] sm:$0xff] %vm296, %v6020
      %6039 = vst.msk [vmem:[%s275 + $0x30] sm:$0xff] %vm296, %v6025
      %6040 = vst.msk [vmem:[%s275 + $0x38] sm:$0xff] %vm296, %v6030
      %s6041 = smul.u32 8, %s17
      %p6042 = scmp.lt.s32.totalorder %s6041, 15
      %s6043 = scalar_select %p6042, %s6041, 15
      %s6044 = smul.addr %s6043, 8
      %s6045 = scalar_lea.vmem %s6, %s6044
      // Predicated region
      $region45: #{tpu_custom_call.1} parent=43 // pred_check
        %p6046 = pneg %p171
      $region46: #{tpu_custom_call.1} parent=43 // pred_check_branch
        %6048 = sbr.rel (%p6046) target = $region48
      $region47: #{tpu_custom_call.1} parent=43 // pred_region
        %s6049 = smul.u32 8, %s17
      $region48: #{tpu_custom_call.1} parent=43 // pred_fallthru
        _
    $region44: #{tpu_custom_call.1} parent=5 // pred_fallthru
      _
    %p6050 = scmp.le.s32.totalorder 2, %s12
    // Predicated region
    $region49: #{tpu_custom_call.1} parent=5 // pred_check
      %p6051 = pneg %p6050
    $region50: #{tpu_custom_call.1} parent=5 // pred_check_branch
      %6053 = sbr.rel (%p6051) target = $region52
    $region51: #{tpu_custom_call.1} parent=5 // pred_region
      %s6054 = ssub.s32 %s12, 2
      // Predicated region
      $region53: #{tpu_custom_call.1} parent=51 // pred_check
        %p6055 = pneg %p177
      $region54: #{tpu_custom_call.1} parent=51 // pred_check_branch
        %6057 = sbr.rel (%p6055) target = $region56
      $region55: #{tpu_custom_call.1} parent=51 // pred_region
        %s6058 = smul.u32 8, %s18
        %p6059 = scmp.lt.s32.totalorder %s6058, 15
        %s6060 = scalar_select %p6059, %s6058, 15
        %s6061 = smul.addr %s6060, 8
        %s6062 = scalar_lea.vmem %s6, %s6061
      $region56: #{tpu_custom_call.1} parent=51 // pred_fallthru
        _
    $region52: #{tpu_custom_call.1} parent=5 // pred_fallthru
      _
  $region6: #{tpu_custom_call.1} parent=0 // loop_footer
    %s16 = sadd.s32 1, %s12
  $region7: #{tpu_custom_call.1} parent=0 // loop_footer_branch
    %11 = sbr.rel target = $region3
  $region8: #{tpu_custom_call.1} parent=0 // loop_exit
    _

</llo_original>
